<compile_context>
chip_gen: v7x
topology: tpu7x:2x2x1
jax: 0.10.0
libtpu: 0.0.40
codegen_flags: <defaults>
</compile_context>

<pallas_src>
import functools

import numpy as np
import jax
import jax.numpy as jnp
from jax.experimental import pallas as pl
from jax.experimental.pallas import tpu as pltpu


def _round_up(v, m):
    return ((v + m - 1) // m) * m


def _pick_vmem_limit():
    """Per-generation VMEM budget: ~3/4 of physical (48 MiB on v7x, 96 MiB on v5e/v6e)."""
    try:
        cap = int(pltpu.get_tpu_info().vmem_capacity_bytes)
    except Exception:
        cap = 64 * 1024 * 1024                     # conservative fallback (v7x per-TC VMEM)
    return max(32 * 1024 * 1024, min(cap * 3 // 4, 112 * 1024 * 1024))


# ----------------------------------------------------------------------------
# Pallas kernels
# ----------------------------------------------------------------------------
def _patch_embed_kernel(x_ref, w_ref, b_ref, o_ref):
    # x is already bf16 (cast in the wrapper at the patchify transpose copy)
    o_ref[...] = (jnp.dot(x_ref[...], w_ref[...], preferred_element_type=jnp.float32)
                  + b_ref[...])


def _vit_stack_kernel(x_ref, ln1g_ref, ln1b_ref, qkvw_ref, qkvb_ref,
                      projw_ref, projb_ref, ln2g_ref, ln2b_ref,
                      fc1w_ref, fc1b_ref, fc2w_ref, fc2b_ref,
                      y_ref, fused_ref, *, num_heads, n_real):
    """One (batch, layer) grid step.  y_ref is the VMEM-resident token state (index map constant
    over the depth axis), fused_ref is this layer's head-mean attention (bf16)."""
    eps = 1e-6
    l = pl.program_id(1)

    @pl.when(l == 0)
    def _():
        y_ref[0] = x_ref[0]                       # tokens become VMEM-resident across all layers

    x = y_ref[0]                                  # [Np, D] f32
    Np, D = x.shape
    dh = D // num_heads
    scale = dh ** -0.5

    def layernorm(v, g, b):
        mu = jnp.mean(v, axis=-1, keepdims=True)
        var = jnp.mean((v - mu) ** 2, axis=-1, keepdims=True)
        return (v - mu) * jax.lax.rsqrt(var + eps) * g + b

    # additive key-padding bias, shape (1, Np): 2 vregs instead of a live [Np, Np] mask
    col = jax.lax.broadcasted_iota(jnp.int32, (1, Np), 1)
    key_bias = jnp.where(col < n_real, 0.0, -1e30).astype(jnp.float32)

    # --- attention: qkv once; per-head softmax; head-mean fused; proj folded into the head loop ---
    xn = layernorm(x, ln1g_ref[0], ln1b_ref[0]).astype(jnp.bfloat16)
    qkv = (jnp.dot(xn, qkvw_ref[0], preferred_element_type=jnp.float32)
           + qkvb_ref[0])                         # [Np, 3D] f32
    q_all = (qkv[:, :D] * scale).astype(jnp.bfloat16)
    kT = qkv[:, D:2 * D].astype(jnp.bfloat16).T   # [D, Np] -- single K transpose, hoisted
    v_all = qkv[:, 2 * D:].astype(jnp.bfloat16)
    projw = projw_ref[0]                          # [D, D] bf16

    # TODO(synk): for dh=64 (ViT-B) odd-head lane offsets still force in-register relayouts;
    # process head pairs (128-lane slabs) or pre-permute qkv_w columns to remove them.
    # TODO(synk): on v6e/v7x the exp could run in bf16 (~2x EUP rate); kept f32 for parity.
    p_sum = None
    acc = jnp.zeros((Np, D), jnp.float32)
    for h in range(num_heads):
        s = jnp.dot(q_all[:, h * dh:(h + 1) * dh], kT[h * dh:(h + 1) * dh, :],
                    preferred_element_type=jnp.float32)               # [Np, Np]
        s = s + key_bias
        s = s - jnp.max(s, axis=-1, keepdims=True)
        p = jnp.exp(s)                            # == attn_drop output at eval time
        p = p * pl.reciprocal(jnp.sum(p, axis=-1, keepdims=True), approx=True)
        p_sum = p if h == 0 else p_sum + p        # head-mean accumulated in-register
        o_h = jnp.dot(p.astype(jnp.bfloat16), v_all[:, h * dh:(h + 1) * dh],
                      preferred_element_type=jnp.float32)             # [Np, dh]
        # lane-dense accumulation of the output projection (no sub-128-lane column stores)
        acc = acc + jnp.dot(o_h.astype(jnp.bfloat16), projw[h * dh:(h + 1) * dh, :],
                            preferred_element_type=jnp.float32)
    fused_ref[0, 0] = (p_sum * (1.0 / num_heads)).astype(fused_ref.dtype)

    x = x + acc + projb_ref[0]

    # --- mlp ---
    # TODO(synk): for ViT-B/L on v7x (64 MiB VMEM) add an 'arbitrary' grid axis tiling fc1/fc2
    # over the MLP hidden dim so the bf16 weights need not be fully resident per layer.
    xn2 = layernorm(x, ln2g_ref[0], ln2b_ref[0]).astype(jnp.bfloat16)
    h1 = jax.nn.gelu(jnp.dot(xn2, fc1w_ref[0], preferred_element_type=jnp.float32)
                     + fc1b_ref[0])
    x = x + (jnp.dot(h1.astype(jnp.bfloat16), fc2w_ref[0],
                     preferred_element_type=jnp.float32) + fc2b_ref[0])
    y_ref[0] = x


def _rollout_chain_kernel(thr_ref, fused_ref, res_ref):
    # grid = (B, depth); the result block index is constant over depth, so it stays resident in
    # VMEM across all layers of one batch element.
    b = pl.program_id(0)
    l = pl.program_id(1)
    a = fused_ref[0, 0].astype(jnp.float32)       # [Np, Np] head-fused attention (stored as bf16)
    thr = thr_ref[l, b]                           # per-(layer,batch) discard threshold (SMEM scalar)
    a = jnp.where(a > thr, a, jnp.zeros_like(a))
    n = a.shape[0]
    row = jax.lax.broadcasted_iota(jnp.int32, (n, n), 0)
    col = jax.lax.broadcasted_iota(jnp.int32, (n, n), 1)
    a = (a + (row == col).astype(jnp.float32)) * 0.5
    a = a * pl.reciprocal(jnp.sum(a, axis=-1, keepdims=True), approx=True)

    @pl.when(l == 0)
    def _():
        res_ref[0] = a                            # a @ I

    @pl.when(l > 0)
    def _():
        # MXU is bf16-native on v5e/v6e/v7x; values are in [0,1] post-normalization so bf16
        # operands with f32 accumulation are sufficient for a saliency mask.
        res_ref[0] = jnp.dot(a.astype(jnp.bfloat16), res_ref[0].astype(jnp.bfloat16),
                             preferred_element_type=jnp.float32)


# ----------------------------------------------------------------------------
# Pallas wrappers
# ----------------------------------------------------------------------------
def patch_embed(xp_bf16, w_bf16, b):
    """Tiled over rows of xp (M = B*num_patches) with a parallel grid; xp already bf16."""
    M, K = xp_bf16.shape
    D = w_bf16.shape[1]
    TM = min(512, _round_up(M, 8))
    Mp = _round_up(M, TM)
    if Mp != M:
        xp_bf16 = jnp.pad(xp_bf16, ((0, Mp - M), (0, 0)))
    out = pl.pallas_call(
        _patch_embed_kernel,
        out_shape=jax.ShapeDtypeStruct((Mp, D), jnp.float32),
        grid=(Mp // TM,),
        in_specs=[pl.BlockSpec((TM, K), lambda i: (i, 0)),
                  pl.BlockSpec((K, D), lambda i: (0, 0)),
                  pl.BlockSpec((1, D), lambda i: (0, 0))],
        out_specs=pl.BlockSpec((TM, D), lambda i: (i, 0)),
        compiler_params=pltpu.CompilerParams(dimension_semantics=("parallel",)),
    )(xp_bf16, w_bf16, b.reshape(1, D))
    return out[:M]


def vit_blocks(x, stacked, *, num_heads, n_real):
    """All transformer layers in ONE pallas_call, grid=(B, depth).

    Returns updated tokens [B, Np, D] (f32) and per-layer head-mean attention [depth, B, Np, Np]
    (bf16).  Tokens are VMEM-resident across depth; layer l+1 weights are double-buffered behind
    layer l compute.
    """
    B, Np, D = x.shape
    depth = stacked['qkv_w'].shape[0]
    kernel = functools.partial(_vit_stack_kernel, num_heads=num_heads, n_real=n_real)
    names = ['ln1_g', 'ln1_b', 'qkv_w', 'qkv_b', 'proj_w', 'proj_b',
             'ln2_g', 'ln2_b', 'fc1_w', 'fc1_b', 'fc2_w', 'fc2_b']
    weights = [stacked[n] for n in names]           # each has a leading [depth, ...] axis, 3-D

    in_specs = [pl.BlockSpec((1, Np, D), lambda b, l: (b, 0, 0))]
    for w in weights:
        in_specs.append(pl.BlockSpec((1,) + w.shape[1:], lambda b, l: (l, 0, 0)))

    y, fused = pl.pallas_call(
        kernel,
        out_shape=(jax.ShapeDtypeStruct((B, Np, D), jnp.float32),
                   jax.ShapeDtypeStruct((depth, B, Np, Np), jnp.bfloat16)),
        grid=(B, depth),
        in_specs=in_specs,
        out_specs=(pl.BlockSpec((1, Np, D), lambda b, l: (b, 0, 0)),       # resident across depth
                   pl.BlockSpec((1, 1, Np, Np), lambda b, l: (l, b, 0, 0))),
        compiler_params=pltpu.CompilerParams(
            dimension_semantics=("parallel", "arbitrary"),
            vmem_limit_bytes=_pick_vmem_limit()),
    )(x, *weights)
    return y, fused


def rollout_chain(fused_all, thrs):
    """Whole attention-rollout (all layers) in one pallas_call; result resident across depth."""
    depth, B, Np, _ = fused_all.shape
    return pl.pallas_call(
        _rollout_chain_kernel,
        out_shape=jax.ShapeDtypeStruct((B, Np, Np), jnp.float32),
        grid_spec=pltpu.PrefetchScalarGridSpec(
            num_scalar_prefetch=1,                      # thrs [depth, B] -> SMEM
            grid=(B, depth),
            in_specs=[pl.BlockSpec((1, 1, Np, Np), lambda b, l, thr: (l, b, 0, 0))],
            out_specs=pl.BlockSpec((1, Np, Np), lambda b, l, thr: (b, 0, 0)),
        ),
        compiler_params=pltpu.CompilerParams(
            dimension_semantics=("parallel", "arbitrary"),
            vmem_limit_bytes=_pick_vmem_limit()),
    )(thrs, fused_all)


# ----------------------------------------------------------------------------
# Glue (parameters, patchify, thresholds, head, bilinear resize)
# ----------------------------------------------------------------------------
def bilinear_matrix(out_size, in_size):
    """Separable bilinear interp matrix matching F.interpolate(align_corners=False)."""
    L = np.zeros((out_size, in_size), dtype=np.float32)
    scale = in_size / out_size
    for o in range(out_size):
        src = (o + 0.5) * scale - 0.5
        src = max(src, 0.0)
        i0 = min(int(np.floor(src)), in_size - 1)
        i1 = min(i0 + 1, in_size - 1)
        w1 = src - i0
        L[o, i0] += 1.0 - w1
        L[o, i1] += w1
    return jnp.asarray(L)


def init_params(key, *, C, patch, D, depth, mlp, num_patches, out_size):
    keys = jax.random.split(key, 6 + depth)
    std = 0.02
    p = {
        'patch_w': jax.random.normal(keys[0], (C * patch * patch, D), jnp.float32) * std,
        'patch_b': jnp.zeros((D,), jnp.float32),
        'cls_token': jax.random.normal(keys[1], (1, 1, D), jnp.float32) * std,
        'pos_embed': jax.random.normal(keys[2], (1, num_patches + 1, D), jnp.float32) * std,
        'norm_g': jnp.ones((D,), jnp.float32),
        'norm_b': jnp.zeros((D,), jnp.float32),
        'head_w': jax.random.normal(keys[3], (D, out_size), jnp.float32) * std,
        'head_b': jnp.zeros((out_size,), jnp.float32),
    }
    blocks = []
    for i in range(depth):
        bk = jax.random.split(keys[6 + i], 4)
        blocks.append({
            'ln1_g': jnp.ones((D,), jnp.float32), 'ln1_b': jnp.zeros((D,), jnp.float32),
            'qkv_w': jax.random.normal(bk[0], (D, 3 * D), jnp.float32) * std,
            'qkv_b': jnp.zeros((3 * D,), jnp.float32),
            'proj_w': jax.random.normal(bk[1], (D, D), jnp.float32) * std,
            'proj_b': jnp.zeros((D,), jnp.float32),
            'ln2_g': jnp.ones((D,), jnp.float32), 'ln2_b': jnp.zeros((D,), jnp.float32),
            'fc1_w': jax.random.normal(bk[2], (D, mlp), jnp.float32) * std,
            'fc1_b': jnp.zeros((mlp,), jnp.float32),
            'fc2_w': jax.random.normal(bk[3], (mlp, D), jnp.float32) * std,
            'fc2_b': jnp.zeros((D,), jnp.float32),
        })
    p['blocks'] = blocks
    return p


def prepare_params(p):
    """Stack per-layer weights to a leading [depth, ...] axis (single merged pallas_call), cast
    matmul weights to bf16 (MXU throughput / VMEM residency), reshape biases to [depth, 1, n]."""
    blocks = p['blocks']
    depth = len(blocks)

    def stack(name, *, bf16=False, as_row=False):
        a = jnp.stack([blk[name] for blk in blocks], axis=0)
        if as_row:
            a = a.reshape(depth, 1, -1)
        if bf16:
            a = a.astype(jnp.bfloat16)
        return a

    stacked = {
        'ln1_g': stack('ln1_g', as_row=True), 'ln1_b': stack('ln1_b', as_row=True),
        'qkv_w': stack('qkv_w', bf16=True),   'qkv_b': stack('qkv_b', as_row=True),
        'proj_w': stack('proj_w', bf16=True), 'proj_b': stack('proj_b', as_row=True),
        'ln2_g': stack('ln2_g', as_row=True), 'ln2_b': stack('ln2_b', as_row=True),
        'fc1_w': stack('fc1_w', bf16=True),   'fc1_b': stack('fc1_b', as_row=True),
        'fc2_w': stack('fc2_w', bf16=True),   'fc2_b': stack('fc2_b', as_row=True),
    }
    return {
        'patch_w_bf16': p['patch_w'].astype(jnp.bfloat16),
        'patch_b': p['patch_b'],
        'cls_token': p['cls_token'],
        'pos_embed': p['pos_embed'],
        'norm_g': p['norm_g'], 'norm_b': p['norm_b'],
        'head_w': p['head_w'], 'head_b': p['head_b'],
        'stacked': stacked,
    }


def vit_rollout_forward(x, params, *, patch, num_heads, discard_ratio=0.2):
    """Equivalent of VitRolloutMultihead.forward with multi_head=True, head_fusion='mean'."""
    B, C, H, W = x.shape
    hp, wp = H // patch, W // patch
    num_patches = hp * wp
    D = params['pos_embed'].shape[-1]
    N = num_patches + 1
    Np = _round_up(N, 128)                        # lane-dense token count for attn/rollout

    # --- patch embedding (conv k=p,s=p as patchify + matmul); bf16 cast at the transpose copy ---
    xp = x.reshape(B, C, hp, patch, wp, patch)
    xp = xp.transpose(0, 2, 4, 1, 3, 5).reshape(B * num_patches, C * patch * patch)
    xp = xp.astype(jnp.bfloat16)
    tokens = patch_embed(xp, params['patch_w_bf16'], params['patch_b'])
    tokens = tokens.reshape(B, num_patches, D)

    cls = jnp.broadcast_to(params['cls_token'], (B, 1, D))
    x_tok = jnp.concatenate([cls, tokens], axis=1) + params['pos_embed']
    x_tok = jnp.pad(x_tok, ((0, 0), (0, Np - N), (0, 0)))    # pad tokens (masked in-kernel)

    # --- all transformer blocks in one pallas_call; fused attention emitted per layer (bf16) ---
    x_tok, fused_all = vit_blocks(x_tok, params['stacked'], num_heads=num_heads, n_real=N)
    depth = fused_all.shape[0]

    # --- classification head + sigmoid (tiny; left to XLA) ---
    cls_tok = x_tok[:, 0, :]
    mu = jnp.mean(cls_tok, axis=-1, keepdims=True)
    var = jnp.mean((cls_tok - mu) ** 2, axis=-1, keepdims=True)
    cls_n = (cls_tok - mu) * jax.lax.rsqrt(var + 1e-6) * params['norm_g'] + params['norm_b']
    output = jax.nn.sigmoid(cls_n @ params['head_w'] + params['head_b'])

    # --- per-(layer,batch) discard thresholds: k-th smallest of the real NxN block ---
    k = int(N * N * discard_ratio)
    flat = fused_all[:, :, :N, :N].astype(jnp.float32).reshape(depth, B, N * N)
    if k > 0:
        # TODO(synk): torch.topk+scatter_ zeroes exactly k entries; a value threshold also removes
        # ties of the k-th value (identical whenever values are distinct).
        thrs = jnp.sort(flat, axis=-1)[..., k - 1]            # [depth, B]
    else:
        thrs = jnp.full((depth, B), -jnp.inf, jnp.float32)

    # --- attention rollout chained over all layers in one Pallas call ---
    result = rollout_chain(fused_all, thrs)                   # [B, Np, Np]

    mask = result[:, 0, 1:N]
    mw = int((N - 1) ** 0.5)
    mask = mask.reshape(B, mw, mw)
    mx = jnp.max(mask.reshape(B, -1), axis=-1)
    mask = mask / jnp.maximum(mx, 1e-12)[:, None, None]       # eps guards all-zero rows

    # --- bilinear upsample (tiny separable matmuls; left to XLA) ---
    Lh = bilinear_matrix(H, mw)
    Lw = bilinear_matrix(W, mw)
    emap = jnp.einsum('hm,bmn,wn->bhw', Lh, mask, Lw)         # [B, H, W]
    return output, emap


# ----------------------------------------------------------------------------
if __name__ == "__main__":
    key = jax.random.PRNGKey(0)
    kx, kp = jax.random.split(key)

    B, C, IMG = 2, 3, 16
    PATCH, D, HEADS, DEPTH, MLP, OUT = 4, 32, 4, 2, 64, 1
    num_patches = (IMG // PATCH) ** 2

    x = jax.random.normal(kx, (B, C, IMG, IMG), jnp.float32)
    params = prepare_params(init_params(kp, C=C, patch=PATCH, D=D, depth=DEPTH, mlp=MLP,
                                        num_patches=num_patches, out_size=OUT))

    fwd = jax.jit(functools.partial(vit_rollout_forward, patch=PATCH,
                                    num_heads=HEADS, discard_ratio=0.2))
    output, emap = fwd(x, params)
    output, emap = jax.block_until_ready((output, emap))

    assert output.shape == (B, OUT)
    assert emap.shape == (B, IMG, IMG)
    assert bool(jnp.all((output >= 0.0) & (output <= 1.0)))
    assert bool(jnp.all(jnp.isfinite(emap)))
    print("KERNEL_OK")
</pallas_src>

<mosaic_0001>
module attributes {stable_mosaic.version = 11 : i64} {
  func.func @_patch_embed_kernel(%arg0: i32, %arg1: memref<32x48xbf16, #tpu.memory_space<vmem>>, %arg2: memref<48x32xbf16, #tpu.memory_space<vmem>>, %arg3: memref<1x32xf32, #tpu.memory_space<vmem>>, %arg4: memref<32x32xf32, #tpu.memory_space<vmem>>) attributes {dimension_semantics = [#tpu.dimension_semantics<parallel>], iteration_bounds = array<i64: 1>, scalar_prefetch = 0 : i64, scratch_operands = 0 : i64, tpu.core_type = #tpu.core_type<tc>, window_params = [{transform_indices = @transform_0, window_bounds = array<i64: 32, 48>}, {pipeline_mode = #tpu.pipeline_mode<synchronous>, transform_indices = @transform_1, window_bounds = array<i64: 48, 32>}, {pipeline_mode = #tpu.pipeline_mode<synchronous>, transform_indices = @transform_2, window_bounds = array<i64: 1, 32>}, {transform_indices = @transform_3, window_bounds = array<i64: 32, 32>}]} {
    %c0 = arith.constant 0 : index
    %c0_0 = arith.constant 0 : index
    %0 = vector.load %arg1[%c0, %c0_0] : memref<32x48xbf16, #tpu.memory_space<vmem>>, vector<32x48xbf16>
    %c0_1 = arith.constant 0 : index
    %c0_2 = arith.constant 0 : index
    %1 = vector.load %arg2[%c0_1, %c0_2] : memref<48x32xbf16, #tpu.memory_space<vmem>>, vector<48x32xbf16>
    %cst = arith.constant dense<0.000000e+00> : vector<32x32xf32>
    %2 = tpu.matmul %0, %1, %cst {dimension_numbers = #tpu.dot_dimension_numbers<[1], [0], [0], [1], [0, 0, 1, 1], [], []>} : vector<32x48xbf16>, vector<48x32xbf16>, vector<32x32xf32> -> vector<32x32xf32>
    %c0_3 = arith.constant 0 : index
    %c0_4 = arith.constant 0 : index
    %3 = vector.load %arg3[%c0_3, %c0_4] : memref<1x32xf32, #tpu.memory_space<vmem>>, vector<1x32xf32>
    %4 = vector.broadcast %3 : vector<1x32xf32> to vector<32x32xf32>
    %5 = arith.addf %2, %4 : vector<32x32xf32>
    %c0_5 = arith.constant 0 : index
    %c0_6 = arith.constant 0 : index
    %6 = vector.load %arg4[%c0_5, %c0_6] : memref<32x32xf32, #tpu.memory_space<vmem>>, vector<32x32xf32>
    tpu.vector_store %arg4[%c0_5, %c0_6], %5 {strides = array<i32>} : memref<32x32xf32, #tpu.memory_space<vmem>>, vector<32x32xf32>,
    return
  }
  func.func @transform_0(%arg0: i32) -> (i32, i32) {
    %c0_i32 = arith.constant 0 : i32
    %c0_i32_0 = arith.constant 0 : i32
    return %arg0, %c0_i32 : i32, i32
  }
  func.func @transform_1(%arg0: i32) -> (i32, i32) {
    %c0_i32 = arith.constant 0 : i32
    %c0_i32_0 = arith.constant 0 : i32
    %c0_i32_1 = arith.constant 0 : i32
    return %c0_i32, %c0_i32_0 : i32, i32
  }
  func.func @transform_2(%arg0: i32) -> (i32, i32) {
    %c0_i32 = arith.constant 0 : i32
    %c0_i32_0 = arith.constant 0 : i32
    %c0_i32_1 = arith.constant 0 : i32
    return %c0_i32, %c0_i32_0 : i32, i32
  }
  func.func @transform_3(%arg0: i32) -> (i32, i32) {
    %c0_i32 = arith.constant 0 : i32
    %c0_i32_0 = arith.constant 0 : i32
    return %arg0, %c0_i32 : i32, i32
  }
}

module attributes {stable_mosaic.version = 11 : i64} {
  func.func @_vit_stack_kernel(%arg0: i32, %arg1: i32, %arg2: memref<1x128x32xf32, #tpu.memory_space<vmem>>, %arg3: memref<1x1x32xf32, #tpu.memory_space<vmem>>, %arg4: memref<1x1x32xf32, #tpu.memory_space<vmem>>, %arg5: memref<1x32x96xbf16, #tpu.memory_space<vmem>>, %arg6: memref<1x1x96xf32, #tpu.memory_space<vmem>>, %arg7: memref<1x32x32xbf16, #tpu.memory_space<vmem>>, %arg8: memref<1x1x32xf32, #tpu.memory_space<vmem>>, %arg9: memref<1x1x32xf32, #tpu.memory_space<vmem>>, %arg10: memref<1x1x32xf32, #tpu.memory_space<vmem>>, %arg11: memref<1x32x64xbf16, #tpu.memory_space<vmem>>, %arg12: memref<1x1x64xf32, #tpu.memory_space<vmem>>, %arg13: memref<1x64x32xbf16, #tpu.memory_space<vmem>>, %arg14: memref<1x1x32xf32, #tpu.memory_space<vmem>>, %arg15: memref<1x128x32xf32, #tpu.memory_space<vmem>>, %arg16: memref<1x1x128x128xbf16, #tpu.memory_space<vmem>>) attributes {dimension_semantics = [#tpu.dimension_semantics<parallel>, #tpu.dimension_semantics<arbitrary>], iteration_bounds = array<i64: 2, 2>, scalar_prefetch = 0 : i64, scratch_operands = 0 : i64, tpu.core_type = #tpu.core_type<tc>, window_params = [{transform_indices = @transform_0, window_bounds = array<i64: 1, 128, 32>}, {transform_indices = @transform_1, window_bounds = array<i64: 1, 1, 32>}, {transform_indices = @transform_2, window_bounds = array<i64: 1, 1, 32>}, {transform_indices = @transform_3, window_bounds = array<i64: 1, 32, 96>}, {transform_indices = @transform_4, window_bounds = array<i64: 1, 1, 96>}, {transform_indices = @transform_5, window_bounds = array<i64: 1, 32, 32>}, {transform_indices = @transform_6, window_bounds = array<i64: 1, 1, 32>}, {transform_indices = @transform_7, window_bounds = array<i64: 1, 1, 32>}, {transform_indices = @transform_8, window_bounds = array<i64: 1, 1, 32>}, {transform_indices = @transform_9, window_bounds = array<i64: 1, 32, 64>}, {transform_indices = @transform_10, window_bounds = array<i64: 1, 1, 64>}, {transform_indices = @transform_11, window_bounds = array<i64: 1, 64, 32>}, {transform_indices = @transform_12, window_bounds = array<i64: 1, 1, 32>}, {transform_indices = @transform_13, window_bounds = array<i64: 1, 128, 32>}, {transform_indices = @transform_14, window_bounds = array<i64: 1, 1, 128, 128>}]} {
    %c0_i32 = arith.constant 0 : i32
    %0 = arith.cmpi eq, %arg1, %c0_i32 : i32
    %1 = arith.extui %0 : i1 to i32
    %c0_i32_0 = arith.constant 0 : i32
    %2 = arith.cmpi ne, %1, %c0_i32_0 : i32
    scf.if %2 {
      %c0_87 = arith.constant 0 : index
      %c0_88 = arith.constant 0 : index
      %c0_89 = arith.constant 0 : index
      %218 = vector.load %arg2[%c0_87, %c0_88, %c0_89] : memref<1x128x32xf32, #tpu.memory_space<vmem>>, vector<1x128x32xf32>
      %219 = vector.shape_cast %218 : vector<1x128x32xf32> to vector<128x32xf32>
      %c0_90 = arith.constant 0 : index
      %c0_91 = arith.constant 0 : index
      %c0_92 = arith.constant 0 : index
      %220 = vector.load %arg15[%c0_90, %c0_91, %c0_92] : memref<1x128x32xf32, #tpu.memory_space<vmem>>, vector<1x128x32xf32>
      %221 = vector.shape_cast %220 : vector<1x128x32xf32> to vector<128x32xf32>
      %222 = vector.shape_cast %219 : vector<128x32xf32> to vector<1x128x32xf32>
      tpu.vector_store %arg15[%c0_90, %c0_91, %c0_92], %222 {strides = array<i32>} : memref<1x128x32xf32, #tpu.memory_space<vmem>>, vector<1x128x32xf32>,
    } else {
    }
    %c0 = arith.constant 0 : index
    %c0_1 = arith.constant 0 : index
    %c0_2 = arith.constant 0 : index
    %3 = vector.load %arg15[%c0, %c0_1, %c0_2] : memref<1x128x32xf32, #tpu.memory_space<vmem>>, vector<1x128x32xf32>
    %4 = vector.shape_cast %3 : vector<1x128x32xf32> to vector<128x32xf32>
    %5 = tpu.iota {dimensions = array<i32: 1>} : vector<1x128xi32>
    %c17_i32 = arith.constant 17 : i32
    %6 = vector.broadcast %c17_i32 : i32 to vector<1x128xi32>
    %7 = arith.cmpi slt, %5, %6 : vector<1x128xi32>
    %cst = arith.constant 0.000000e+00 : f32
    %cst_3 = arith.constant -1.000000e+30 : f32
    %8 = vector.broadcast %cst : f32 to vector<1x128xf32>
    %9 = vector.broadcast %cst_3 : f32 to vector<1x128xf32>
    %10 = arith.select %7, %8, %9 : vector<1x128xi1>, vector<1x128xf32>
    %c0_4 = arith.constant 0 : index
    %c0_5 = arith.constant 0 : index
    %c0_6 = arith.constant 0 : index
    %11 = vector.load %arg3[%c0_4, %c0_5, %c0_6] : memref<1x1x32xf32, #tpu.memory_space<vmem>>, vector<1x1x32xf32>
    %12 = vector.shape_cast %11 : vector<1x1x32xf32> to vector<1x32xf32>
    %c0_7 = arith.constant 0 : index
    %c0_8 = arith.constant 0 : index
    %c0_9 = arith.constant 0 : index
    %13 = vector.load %arg4[%c0_7, %c0_8, %c0_9] : memref<1x1x32xf32, #tpu.memory_space<vmem>>, vector<1x1x32xf32>
    %14 = vector.shape_cast %13 : vector<1x1x32xf32> to vector<1x32xf32>
    %cst_10 = arith.constant dense<0.000000e+00> : vector<128xf32>
    %15 = vector.multi_reduction <add>, %4, %cst_10 [1] : vector<128x32xf32> to vector<128xf32>
    %16 = vector.shape_cast %15 : vector<128xf32> to vector<128x1xf32>
    %cst_11 = arith.constant 3.200000e+01 : f32
    %17 = vector.broadcast %cst_11 : f32 to vector<128x1xf32>
    %18 = arith.divf %16, %17 : vector<128x1xf32>
    %19 = vector.broadcast %18 : vector<128x1xf32> to vector<128x32xf32>
    %20 = arith.subf %4, %19 : vector<128x32xf32>
    %21 = arith.mulf %20, %20 : vector<128x32xf32>
    %cst_12 = arith.constant dense<0.000000e+00> : vector<128xf32>
    %22 = vector.multi_reduction <add>, %21, %cst_12 [1] : vector<128x32xf32> to vector<128xf32>
    %23 = vector.shape_cast %22 : vector<128xf32> to vector<128x1xf32>
    %cst_13 = arith.constant 3.200000e+01 : f32
    %24 = vector.broadcast %cst_13 : f32 to vector<128x1xf32>
    %25 = arith.divf %23, %24 : vector<128x1xf32>
    %26 = vector.broadcast %18 : vector<128x1xf32> to vector<128x32xf32>
    %27 = arith.subf %4, %26 : vector<128x32xf32>
    %cst_14 = arith.constant 9.99999997E-7 : f32
    %28 = vector.broadcast %cst_14 : f32 to vector<128x1xf32>
    %29 = arith.addf %25, %28 : vector<128x1xf32>
    %30 = math.rsqrt %29 : vector<128x1xf32>
    %31 = vector.broadcast %30 : vector<128x1xf32> to vector<128x32xf32>
    %32 = arith.mulf %27, %31 : vector<128x32xf32>
    %33 = vector.broadcast %12 : vector<1x32xf32> to vector<128x32xf32>
    %34 = arith.mulf %32, %33 : vector<128x32xf32>
    %35 = vector.broadcast %14 : vector<1x32xf32> to vector<128x32xf32>
    %36 = arith.addf %34, %35 : vector<128x32xf32>
    %37 = arith.truncf %36 : vector<128x32xf32> to vector<128x32xbf16>
    %c0_15 = arith.constant 0 : index
    %c0_16 = arith.constant 0 : index
    %c0_17 = arith.constant 0 : index
    %38 = vector.load %arg5[%c0_15, %c0_16, %c0_17] : memref<1x32x96xbf16, #tpu.memory_space<vmem>>, vector<1x32x96xbf16>
    %39 = vector.shape_cast %38 : vector<1x32x96xbf16> to vector<32x96xbf16>
    %cst_18 = arith.constant dense<0.000000e+00> : vector<128x96xf32>
    %40 = tpu.matmul %37, %39, %cst_18 {dimension_numbers = #tpu.dot_dimension_numbers<[1], [0], [0], [1], [0, 0, 1, 1], [], []>} : vector<128x32xbf16>, vector<32x96xbf16>, vector<128x96xf32> -> vector<128x96xf32>
    %c0_19 = arith.constant 0 : index
    %c0_20 = arith.constant 0 : index
    %c0_21 = arith.constant 0 : index
    %41 = vector.load %arg6[%c0_19, %c0_20, %c0_21] : memref<1x1x96xf32, #tpu.memory_space<vmem>>, vector<1x1x96xf32>
    %42 = vector.shape_cast %41 : vector<1x1x96xf32> to vector<1x96xf32>
    %43 = vector.broadcast %42 : vector<1x96xf32> to vector<128x96xf32>
    %44 = arith.addf %40, %43 : vector<128x96xf32>
    %45 = vector.extract_strided_slice %44 {offsets = [0, 0], sizes = [128, 32], strides = [1, 1]} : vector<128x96xf32> to vector<128x32xf32>
    %cst_22 = arith.constant 0.353553385 : f32
    %46 = vector.broadcast %cst_22 : f32 to vector<128x32xf32>
    %47 = arith.mulf %45, %46 : vector<128x32xf32>
    %48 = arith.truncf %47 : vector<128x32xf32> to vector<128x32xbf16>
    %49 = vector.extract_strided_slice %44 {offsets = [0, 32], sizes = [128, 32], strides = [1, 1]} : vector<128x96xf32> to vector<128x32xf32>
    %50 = arith.truncf %49 : vector<128x32xf32> to vector<128x32xbf16>
    %51 = tpu.transpose %50, [1, 0] : vector<128x32xbf16> -> vector<32x128xbf16>
    %52 = vector.extract_strided_slice %44 {offsets = [0, 64], sizes = [128, 32], strides = [1, 1]} : vector<128x96xf32> to vector<128x32xf32>
    %53 = arith.truncf %52 : vector<128x32xf32> to vector<128x32xbf16>
    %c0_23 = arith.constant 0 : index
    %c0_24 = arith.constant 0 : index
    %c0_25 = arith.constant 0 : index
    %54 = vector.load %arg7[%c0_23, %c0_24, %c0_25] : memref<1x32x32xbf16, #tpu.memory_space<vmem>>, vector<1x32x32xbf16>
    %55 = vector.shape_cast %54 : vector<1x32x32xbf16> to vector<32x32xbf16>
    %cst_26 = arith.constant 0.000000e+00 : f32
    %56 = vector.broadcast %cst_26 : f32 to vector<128x32xf32>
    %57 = vector.extract_strided_slice %48 {offsets = [0, 0], sizes = [128, 8], strides = [1, 1]} : vector<128x32xbf16> to vector<128x8xbf16>
    %58 = vector.extract_strided_slice %51 {offsets = [0, 0], sizes = [8, 128], strides = [1, 1]} : vector<32x128xbf16> to vector<8x128xbf16>
    %cst_27 = arith.constant dense<0.000000e+00> : vector<128x128xf32>
    %59 = tpu.matmul %57, %58, %cst_27 {dimension_numbers = #tpu.dot_dimension_numbers<[1], [0], [0], [1], [0, 0, 1, 1], [], []>} : vector<128x8xbf16>, vector<8x128xbf16>, vector<128x128xf32> -> vector<128x128xf32>
    %60 = vector.broadcast %10 : vector<1x128xf32> to vector<128x128xf32>
    %61 = arith.addf %59, %60 : vector<128x128xf32>
    %cst_28 = arith.constant dense<0xFF800000> : vector<128xf32>
    %62 = vector.multi_reduction <maximumf>, %61, %cst_28 [1] : vector<128x128xf32> to vector<128xf32>
    %63 = vector.shape_cast %62 : vector<128xf32> to vector<128x1xf32>
    %64 = vector.broadcast %63 : vector<128x1xf32> to vector<128x128xf32>
    %65 = arith.subf %61, %64 : vector<128x128xf32>
    %66 = math.exp %65 : vector<128x128xf32>
    %cst_29 = arith.constant dense<0.000000e+00> : vector<128xf32>
    %67 = vector.multi_reduction <add>, %66, %cst_29 [1] : vector<128x128xf32> to vector<128xf32>
    %68 = vector.shape_cast %67 : vector<128xf32> to vector<128x1xf32>
    %69 = tpu.reciprocal %68 {approx = true} : vector<128x1xf32> -> vector<128x1xf32>
    %70 = vector.broadcast %69 : vector<128x1xf32> to vector<128x128xf32>
    %71 = arith.mulf %66, %70 : vector<128x128xf32>
    %72 = arith.truncf %71 : vector<128x128xf32> to vector<128x128xbf16>
    %73 = vector.extract_strided_slice %53 {offsets = [0, 0], sizes = [128, 8], strides = [1, 1]} : vector<128x32xbf16> to vector<128x8xbf16>
    %cst_30 = arith.constant dense<0.000000e+00> : vector<128x8xf32>
    %74 = tpu.matmul %72, %73, %cst_30 {dimension_numbers = #tpu.dot_dimension_numbers<[1], [0], [0], [1], [0, 0, 1, 1], [], []>} : vector<128x128xbf16>, vector<128x8xbf16>, vector<128x8xf32> -> vector<128x8xf32>
    %75 = arith.truncf %74 : vector<128x8xf32> to vector<128x8xbf16>
    %76 = vector.extract_strided_slice %55 {offsets = [0, 0], sizes = [8, 32], strides = [1, 1]} : vector<32x32xbf16> to vector<8x32xbf16>
    %cst_31 = arith.constant dense<0.000000e+00> : vector<128x32xf32>
    %77 = tpu.matmul %75, %76, %cst_31 {dimension_numbers = #tpu.dot_dimension_numbers<[1], [0], [0], [1], [0, 0, 1, 1], [], []>} : vector<128x8xbf16>, vector<8x32xbf16>, vector<128x32xf32> -> vector<128x32xf32>
    %78 = arith.addf %56, %77 : vector<128x32xf32>
    %79 = vector.extract_strided_slice %48 {offsets = [0, 8], sizes = [128, 8], strides = [1, 1]} : vector<128x32xbf16> to vector<128x8xbf16>
    %80 = vector.extract_strided_slice %51 {offsets = [8, 0], sizes = [8, 128], strides = [1, 1]} : vector<32x128xbf16> to vector<8x128xbf16>
    %cst_32 = arith.constant dense<0.000000e+00> : vector<128x128xf32>
    %81 = tpu.matmul %79, %80, %cst_32 {dimension_numbers = #tpu.dot_dimension_numbers<[1], [0], [0], [1], [0, 0, 1, 1], [], []>} : vector<128x8xbf16>, vector<8x128xbf16>, vector<128x128xf32> -> vector<128x128xf32>
    %82 = vector.broadcast %10 : vector<1x128xf32> to vector<128x128xf32>
    %83 = arith.addf %81, %82 : vector<128x128xf32>
    %cst_33 = arith.constant dense<0xFF800000> : vector<128xf32>
    %84 = vector.multi_reduction <maximumf>, %83, %cst_33 [1] : vector<128x128xf32> to vector<128xf32>
    %85 = vector.shape_cast %84 : vector<128xf32> to vector<128x1xf32>
    %86 = vector.broadcast %85 : vector<128x1xf32> to vector<128x128xf32>
    %87 = arith.subf %83, %86 : vector<128x128xf32>
    %88 = math.exp %87 : vector<128x128xf32>
    %cst_34 = arith.constant dense<0.000000e+00> : vector<128xf32>
    %89 = vector.multi_reduction <add>, %88, %cst_34 [1] : vector<128x128xf32> to vector<128xf32>
    %90 = vector.shape_cast %89 : vector<128xf32> to vector<128x1xf32>
    %91 = tpu.reciprocal %90 {approx = true} : vector<128x1xf32> -> vector<128x1xf32>
    %92 = vector.broadcast %91 : vector<128x1xf32> to vector<128x128xf32>
    %93 = arith.mulf %88, %92 : vector<128x128xf32>
    %94 = arith.addf %71, %93 : vector<128x128xf32>
    %95 = arith.truncf %93 : vector<128x128xf32> to vector<128x128xbf16>
    %96 = vector.extract_strided_slice %53 {offsets = [0, 8], sizes = [128, 8], strides = [1, 1]} : vector<128x32xbf16> to vector<128x8xbf16>
    %cst_35 = arith.constant dense<0.000000e+00> : vector<128x8xf32>
    %97 = tpu.matmul %95, %96, %cst_35 {dimension_numbers = #tpu.dot_dimension_numbers<[1], [0], [0], [1], [0, 0, 1, 1], [], []>} : vector<128x128xbf16>, vector<128x8xbf16>, vector<128x8xf32> -> vector<128x8xf32>
    %98 = arith.truncf %97 : vector<128x8xf32> to vector<128x8xbf16>
    %99 = vector.extract_strided_slice %55 {offsets = [8, 0], sizes = [8, 32], strides = [1, 1]} : vector<32x32xbf16> to vector<8x32xbf16>
    %cst_36 = arith.constant dense<0.000000e+00> : vector<128x32xf32>
    %100 = tpu.matmul %98, %99, %cst_36 {dimension_numbers = #tpu.dot_dimension_numbers<[1], [0], [0], [1], [0, 0, 1, 1], [], []>} : vector<128x8xbf16>, vector<8x32xbf16>, vector<128x32xf32> -> vector<128x32xf32>
    %101 = arith.addf %78, %100 : vector<128x32xf32>
    %102 = vector.extract_strided_slice %48 {offsets = [0, 16], sizes = [128, 8], strides = [1, 1]} : vector<128x32xbf16> to vector<128x8xbf16>
    %103 = vector.extract_strided_slice %51 {offsets = [16, 0], sizes = [8, 128], strides = [1, 1]} : vector<32x128xbf16> to vector<8x128xbf16>
    %cst_37 = arith.constant dense<0.000000e+00> : vector<128x128xf32>
    %104 = tpu.matmul %102, %103, %cst_37 {dimension_numbers = #tpu.dot_dimension_numbers<[1], [0], [0], [1], [0, 0, 1, 1], [], []>} : vector<128x8xbf16>, vector<8x128xbf16>, vector<128x128xf32> -> vector<128x128xf32>
    %105 = vector.broadcast %10 : vector<1x128xf32> to vector<128x128xf32>
    %106 = arith.addf %104, %105 : vector<128x128xf32>
    %cst_38 = arith.constant dense<0xFF800000> : vector<128xf32>
    %107 = vector.multi_reduction <maximumf>, %106, %cst_38 [1] : vector<128x128xf32> to vector<128xf32>
    %108 = vector.shape_cast %107 : vector<128xf32> to vector<128x1xf32>
    %109 = vector.broadcast %108 : vector<128x1xf32> to vector<128x128xf32>
    %110 = arith.subf %106, %109 : vector<128x128xf32>
    %111 = math.exp %110 : vector<128x128xf32>
    %cst_39 = arith.constant dense<0.000000e+00> : vector<128xf32>
    %112 = vector.multi_reduction <add>, %111, %cst_39 [1] : vector<128x128xf32> to vector<128xf32>
    %113 = vector.shape_cast %112 : vector<128xf32> to vector<128x1xf32>
    %114 = tpu.reciprocal %113 {approx = true} : vector<128x1xf32> -> vector<128x1xf32>
    %115 = vector.broadcast %114 : vector<128x1xf32> to vector<128x128xf32>
    %116 = arith.mulf %111, %115 : vector<128x128xf32>
    %117 = arith.addf %94, %116 : vector<128x128xf32>
    %118 = arith.truncf %116 : vector<128x128xf32> to vector<128x128xbf16>
    %119 = vector.extract_strided_slice %53 {offsets = [0, 16], sizes = [128, 8], strides = [1, 1]} : vector<128x32xbf16> to vector<128x8xbf16>
    %cst_40 = arith.constant dense<0.000000e+00> : vector<128x8xf32>
    %120 = tpu.matmul %118, %119, %cst_40 {dimension_numbers = #tpu.dot_dimension_numbers<[1], [0], [0], [1], [0, 0, 1, 1], [], []>} : vector<128x128xbf16>, vector<128x8xbf16>, vector<128x8xf32> -> vector<128x8xf32>
    %121 = arith.truncf %120 : vector<128x8xf32> to vector<128x8xbf16>
    %122 = vector.extract_strided_slice %55 {offsets = [16, 0], sizes = [8, 32], strides = [1, 1]} : vector<32x32xbf16> to vector<8x32xbf16>
    %cst_41 = arith.constant dense<0.000000e+00> : vector<128x32xf32>
    %123 = tpu.matmul %121, %122, %cst_41 {dimension_numbers = #tpu.dot_dimension_numbers<[1], [0], [0], [1], [0, 0, 1, 1], [], []>} : vector<128x8xbf16>, vector<8x32xbf16>, vector<128x32xf32> -> vector<128x32xf32>
    %124 = arith.addf %101, %123 : vector<128x32xf32>
    %125 = vector.extract_strided_slice %48 {offsets = [0, 24], sizes = [128, 8], strides = [1, 1]} : vector<128x32xbf16> to vector<128x8xbf16>
    %126 = vector.extract_strided_slice %51 {offsets = [24, 0], sizes = [8, 128], strides = [1, 1]} : vector<32x128xbf16> to vector<8x128xbf16>
    %cst_42 = arith.constant dense<0.000000e+00> : vector<128x128xf32>
    %127 = tpu.matmul %125, %126, %cst_42 {dimension_numbers = #tpu.dot_dimension_numbers<[1], [0], [0], [1], [0, 0, 1, 1], [], []>} : vector<128x8xbf16>, vector<8x128xbf16>, vector<128x128xf32> -> vector<128x128xf32>
    %128 = vector.broadcast %10 : vector<1x128xf32> to vector<128x128xf32>
    %129 = arith.addf %127, %128 : vector<128x128xf32>
    %cst_43 = arith.constant dense<0xFF800000> : vector<128xf32>
    %130 = vector.multi_reduction <maximumf>, %129, %cst_43 [1] : vector<128x128xf32> to vector<128xf32>
    %131 = vector.shape_cast %130 : vector<128xf32> to vector<128x1xf32>
    %132 = vector.broadcast %131 : vector<128x1xf32> to vector<128x128xf32>
    %133 = arith.subf %129, %132 : vector<128x128xf32>
    %134 = math.exp %133 : vector<128x128xf32>
    %cst_44 = arith.constant dense<0.000000e+00> : vector<128xf32>
    %135 = vector.multi_reduction <add>, %134, %cst_44 [1] : vector<128x128xf32> to vector<128xf32>
    %136 = vector.shape_cast %135 : vector<128xf32> to vector<128x1xf32>
    %137 = tpu.reciprocal %136 {approx = true} : vector<128x1xf32> -> vector<128x1xf32>
    %138 = vector.broadcast %137 : vector<128x1xf32> to vector<128x128xf32>
    %139 = arith.mulf %134, %138 : vector<128x128xf32>
    %140 = arith.addf %117, %139 : vector<128x128xf32>
    %141 = arith.truncf %139 : vector<128x128xf32> to vector<128x128xbf16>
    %142 = vector.extract_strided_slice %53 {offsets = [0, 24], sizes = [128, 8], strides = [1, 1]} : vector<128x32xbf16> to vector<128x8xbf16>
    %cst_45 = arith.constant dense<0.000000e+00> : vector<128x8xf32>
    %143 = tpu.matmul %141, %142, %cst_45 {dimension_numbers = #tpu.dot_dimension_numbers<[1], [0], [0], [1], [0, 0, 1, 1], [], []>} : vector<128x128xbf16>, vector<128x8xbf16>, vector<128x8xf32> -> vector<128x8xf32>
    %144 = arith.truncf %143 : vector<128x8xf32> to vector<128x8xbf16>
    %145 = vector.extract_strided_slice %55 {offsets = [24, 0], sizes = [8, 32], strides = [1, 1]} : vector<32x32xbf16> to vector<8x32xbf16>
    %cst_46 = arith.constant dense<0.000000e+00> : vector<128x32xf32>
    %146 = tpu.matmul %144, %145, %cst_46 {dimension_numbers = #tpu.dot_dimension_numbers<[1], [0], [0], [1], [0, 0, 1, 1], [], []>} : vector<128x8xbf16>, vector<8x32xbf16>, vector<128x32xf32> -> vector<128x32xf32>
    %147 = arith.addf %124, %146 : vector<128x32xf32>
    %cst_47 = arith.constant 2.500000e-01 : f32
    %148 = vector.broadcast %cst_47 : f32 to vector<128x128xf32>
    %149 = arith.mulf %140, %148 : vector<128x128xf32>
    %150 = arith.truncf %149 : vector<128x128xf32> to vector<128x128xbf16>
    %c0_48 = arith.constant 0 : index
    %c0_49 = arith.constant 0 : index
    %c0_50 = arith.constant 0 : index
    %c0_51 = arith.constant 0 : index
    %151 = vector.load %arg16[%c0_48, %c0_49, %c0_50, %c0_51] : memref<1x1x128x128xbf16, #tpu.memory_space<vmem>>, vector<1x1x128x128xbf16>
    %152 = vector.shape_cast %151 : vector<1x1x128x128xbf16> to vector<128x128xbf16>
    %153 = vector.shape_cast %150 : vector<128x128xbf16> to vector<1x1x128x128xbf16>
    tpu.vector_store %arg16[%c0_48, %c0_49, %c0_50, %c0_51], %153 {strides = array<i32>} : memref<1x1x128x128xbf16, #tpu.memory_space<vmem>>, vector<1x1x128x128xbf16>,
    %154 = arith.addf %4, %147 : vector<128x32xf32>
    %c0_52 = arith.constant 0 : index
    %c0_53 = arith.constant 0 : index
    %c0_54 = arith.constant 0 : index
    %155 = vector.load %arg8[%c0_52, %c0_53, %c0_54] : memref<1x1x32xf32, #tpu.memory_space<vmem>>, vector<1x1x32xf32>
    %156 = vector.shape_cast %155 : vector<1x1x32xf32> to vector<1x32xf32>
    %157 = vector.broadcast %156 : vector<1x32xf32> to vector<128x32xf32>
    %158 = arith.addf %154, %157 : vector<128x32xf32>
    %c0_55 = arith.constant 0 : index
    %c0_56 = arith.constant 0 : index
    %c0_57 = arith.constant 0 : index
    %159 = vector.load %arg9[%c0_55, %c0_56, %c0_57] : memref<1x1x32xf32, #tpu.memory_space<vmem>>, vector<1x1x32xf32>
    %160 = vector.shape_cast %159 : vector<1x1x32xf32> to vector<1x32xf32>
    %c0_58 = arith.constant 0 : index
    %c0_59 = arith.constant 0 : index
    %c0_60 = arith.constant 0 : index
    %161 = vector.load %arg10[%c0_58, %c0_59, %c0_60] : memref<1x1x32xf32, #tpu.memory_space<vmem>>, vector<1x1x32xf32>
    %162 = vector.shape_cast %161 : vector<1x1x32xf32> to vector<1x32xf32>
    %cst_61 = arith.constant dense<0.000000e+00> : vector<128xf32>
    %163 = vector.multi_reduction <add>, %158, %cst_61 [1] : vector<128x32xf32> to vector<128xf32>
    %164 = vector.shape_cast %163 : vector<128xf32> to vector<128x1xf32>
    %cst_62 = arith.constant 3.200000e+01 : f32
    %165 = vector.broadcast %cst_62 : f32 to vector<128x1xf32>
    %166 = arith.divf %164, %165 : vector<128x1xf32>
    %167 = vector.broadcast %166 : vector<128x1xf32> to vector<128x32xf32>
    %168 = arith.subf %158, %167 : vector<128x32xf32>
    %169 = arith.mulf %168, %168 : vector<128x32xf32>
    %cst_63 = arith.constant dense<0.000000e+00> : vector<128xf32>
    %170 = vector.multi_reduction <add>, %169, %cst_63 [1] : vector<128x32xf32> to vector<128xf32>
    %171 = vector.shape_cast %170 : vector<128xf32> to vector<128x1xf32>
    %cst_64 = arith.constant 3.200000e+01 : f32
    %172 = vector.broadcast %cst_64 : f32 to vector<128x1xf32>
    %173 = arith.divf %171, %172 : vector<128x1xf32>
    %174 = vector.broadcast %166 : vector<128x1xf32> to vector<128x32xf32>
    %175 = arith.subf %158, %174 : vector<128x32xf32>
    %cst_65 = arith.constant 9.99999997E-7 : f32
    %176 = vector.broadcast %cst_65 : f32 to vector<128x1xf32>
    %177 = arith.addf %173, %176 : vector<128x1xf32>
    %178 = math.rsqrt %177 : vector<128x1xf32>
    %179 = vector.broadcast %178 : vector<128x1xf32> to vector<128x32xf32>
    %180 = arith.mulf %175, %179 : vector<128x32xf32>
    %181 = vector.broadcast %160 : vector<1x32xf32> to vector<128x32xf32>
    %182 = arith.mulf %180, %181 : vector<128x32xf32>
    %183 = vector.broadcast %162 : vector<1x32xf32> to vector<128x32xf32>
    %184 = arith.addf %182, %183 : vector<128x32xf32>
    %185 = arith.truncf %184 : vector<128x32xf32> to vector<128x32xbf16>
    %c0_66 = arith.constant 0 : index
    %c0_67 = arith.constant 0 : index
    %c0_68 = arith.constant 0 : index
    %186 = vector.load %arg11[%c0_66, %c0_67, %c0_68] : memref<1x32x64xbf16, #tpu.memory_space<vmem>>, vector<1x32x64xbf16>
    %187 = vector.shape_cast %186 : vector<1x32x64xbf16> to vector<32x64xbf16>
    %cst_69 = arith.constant dense<0.000000e+00> : vector<128x64xf32>
    %188 = tpu.matmul %185, %187, %cst_69 {dimension_numbers = #tpu.dot_dimension_numbers<[1], [0], [0], [1], [0, 0, 1, 1], [], []>} : vector<128x32xbf16>, vector<32x64xbf16>, vector<128x64xf32> -> vector<128x64xf32>
    %c0_70 = arith.constant 0 : index
    %c0_71 = arith.constant 0 : index
    %c0_72 = arith.constant 0 : index
    %189 = vector.load %arg12[%c0_70, %c0_71, %c0_72] : memref<1x1x64xf32, #tpu.memory_space<vmem>>, vector<1x1x64xf32>
    %190 = vector.shape_cast %189 : vector<1x1x64xf32> to vector<1x64xf32>
    %191 = vector.broadcast %190 : vector<1x64xf32> to vector<128x64xf32>
    %192 = arith.addf %188, %191 : vector<128x64xf32>
    %193 = arith.mulf %192, %192 : vector<128x64xf32>
    %194 = arith.mulf %192, %193 : vector<128x64xf32>
    %cst_73 = arith.constant 4.471500e-02 : f32
    %195 = vector.broadcast %cst_73 : f32 to vector<128x64xf32>
    %196 = arith.mulf %195, %194 : vector<128x64xf32>
    %197 = arith.addf %192, %196 : vector<128x64xf32>
    %cst_74 = arith.constant 0.797884583 : f32
    %198 = vector.broadcast %cst_74 : f32 to vector<128x64xf32>
    %199 = arith.mulf %198, %197 : vector<128x64xf32>
    %200 = math.tanh %199 : vector<128x64xf32>
    %cst_75 = arith.constant 1.000000e+00 : f32
    %201 = vector.broadcast %cst_75 : f32 to vector<128x64xf32>
    %202 = arith.addf %201, %200 : vector<128x64xf32>
    %cst_76 = arith.constant 5.000000e-01 : f32
    %203 = vector.broadcast %cst_76 : f32 to vector<128x64xf32>
    %204 = arith.mulf %203, %202 : vector<128x64xf32>
    %205 = arith.mulf %192, %204 : vector<128x64xf32>
    %206 = arith.truncf %205 : vector<128x64xf32> to vector<128x64xbf16>
    %c0_77 = arith.constant 0 : index
    %c0_78 = arith.constant 0 : index
    %c0_79 = arith.constant 0 : index
    %207 = vector.load %arg13[%c0_77, %c0_78, %c0_79] : memref<1x64x32xbf16, #tpu.memory_space<vmem>>, vector<1x64x32xbf16>
    %208 = vector.shape_cast %207 : vector<1x64x32xbf16> to vector<64x32xbf16>
    %cst_80 = arith.constant dense<0.000000e+00> : vector<128x32xf32>
    %209 = tpu.matmul %206, %208, %cst_80 {dimension_numbers = #tpu.dot_dimension_numbers<[1], [0], [0], [1], [0, 0, 1, 1], [], []>} : vector<128x64xbf16>, vector<64x32xbf16>, vector<128x32xf32> -> vector<128x32xf32>
    %c0_81 = arith.constant 0 : index
    %c0_82 = arith.constant 0 : index
    %c0_83 = arith.constant 0 : index
    %210 = vector.load %arg14[%c0_81, %c0_82, %c0_83] : memref<1x1x32xf32, #tpu.memory_space<vmem>>, vector<1x1x32xf32>
    %211 = vector.shape_cast %210 : vector<1x1x32xf32> to vector<1x32xf32>
    %212 = vector.broadcast %211 : vector<1x32xf32> to vector<128x32xf32>
    %213 = arith.addf %209, %212 : vector<128x32xf32>
    %214 = arith.addf %158, %213 : vector<128x32xf32>
    %c0_84 = arith.constant 0 : index
    %c0_85 = arith.constant 0 : index
    %c0_86 = arith.constant 0 : index
    %215 = vector.load %arg15[%c0_84, %c0_85, %c0_86] : memref<1x128x32xf32, #tpu.memory_space<vmem>>, vector<1x128x32xf32>
    %216 = vector.shape_cast %215 : vector<1x128x32xf32> to vector<128x32xf32>
    %217 = vector.shape_cast %214 : vector<128x32xf32> to vector<1x128x32xf32>
    tpu.vector_store %arg15[%c0_84, %c0_85, %c0_86], %217 {strides = array<i32>} : memref<1x128x32xf32, #tpu.memory_space<vmem>>, vector<1x128x32xf32>,
    return
  }
  func.func @transform_0(%arg0: i32, %arg1: i32) -> (i32, i32, i32) {
    %c0_i32 = arith.constant 0 : i32
    %c0_i32_0 = arith.constant 0 : i32
    %c0_i32_1 = arith.constant 0 : i32
    return %arg0, %c0_i32, %c0_i32_0 : i32, i32, i32
  }
  func.func @transform_1(%arg0: i32, %arg1: i32) -> (i32, i32, i32) {
    %c0_i32 = arith.constant 0 : i32
    %c0_i32_0 = arith.constant 0 : i32
    %c0_i32_1 = arith.constant 0 : i32
    return %arg1, %c0_i32, %c0_i32_0 : i32, i32, i32
  }
  func.func @transform_2(%arg0: i32, %arg1: i32) -> (i32, i32, i32) {
    %c0_i32 = arith.constant 0 : i32
    %c0_i32_0 = arith.constant 0 : i32
    %c0_i32_1 = arith.constant 0 : i32
    return %arg1, %c0_i32, %c0_i32_0 : i32, i32, i32
  }
  func.func @transform_3(%arg0: i32, %arg1: i32) -> (i32, i32, i32) {
    %c0_i32 = arith.constant 0 : i32
    %c0_i32_0 = arith.constant 0 : i32
    %c0_i32_1 = arith.constant 0 : i32
    return %arg1, %c0_i32, %c0_i32_0 : i32, i32, i32
  }
  func.func @transform_4(%arg0: i32, %arg1: i32) -> (i32, i32, i32) {
    %c0_i32 = arith.constant 0 : i32
    %c0_i32_0 = arith.constant 0 : i32
    %c0_i32_1 = arith.constant 0 : i32
    return %arg1, %c0_i32, %c0_i32_0 : i32, i32, i32
  }
  func.func @transform_5(%arg0: i32, %arg1: i32) -> (i32, i32, i32) {
    %c0_i32 = arith.constant 0 : i32
    %c0_i32_0 = arith.constant 0 : i32
    %c0_i32_1 = arith.constant 0 : i32
    return %arg1, %c0_i32, %c0_i32_0 : i32, i32, i32
  }
  func.func @transform_6(%arg0: i32, %arg1: i32) -> (i32, i32, i32) {
    %c0_i32 = arith.constant 0 : i32
    %c0_i32_0 = arith.constant 0 : i32
    %c0_i32_1 = arith.constant 0 : i32
    return %arg1, %c0_i32, %c0_i32_0 : i32, i32, i32
  }
  func.func @transform_7(%arg0: i32, %arg1: i32) -> (i32, i32, i32) {
    %c0_i32 = arith.constant 0 : i32
    %c0_i32_0 = arith.constant 0 : i32
    %c0_i32_1 = arith.constant 0 : i32
    return %arg1, %c0_i32, %c0_i32_0 : i32, i32, i32
  }
  func.func @transform_8(%arg0: i32, %arg1: i32) -> (i32, i32, i32) {
    %c0_i32 = arith.constant 0 : i32
    %c0_i32_0 = arith.constant 0 : i32
    %c0_i32_1 = arith.constant 0 : i32
    return %arg1, %c0_i32, %c0_i32_0 : i32, i32, i32
  }
  func.func @transform_9(%arg0: i32, %arg1: i32) -> (i32, i32, i32) {
    %c0_i32 = arith.constant 0 : i32
    %c0_i32_0 = arith.constant 0 : i32
    %c0_i32_1 = arith.constant 0 : i32
    return %arg1, %c0_i32, %c0_i32_0 : i32, i32, i32
  }
  func.func @transform_10(%arg0: i32, %arg1: i32) -> (i32, i32, i32) {
    %c0_i32 = arith.constant 0 : i32
    %c0_i32_0 = arith.constant 0 : i32
    %c0_i32_1 = arith.constant 0 : i32
    return %arg1, %c0_i32, %c0_i32_0 : i32, i32, i32
  }
  func.func @transform_11(%arg0: i32, %arg1: i32) -> (i32, i32, i32) {
    %c0_i32 = arith.constant 0 : i32
    %c0_i32_0 = arith.constant 0 : i32
    %c0_i32_1 = arith.constant 0 : i32
    return %arg1, %c0_i32, %c0_i32_0 : i32, i32, i32
  }
  func.func @transform_12(%arg0: i32, %arg1: i32) -> (i32, i32, i32) {
    %c0_i32 = arith.constant 0 : i32
    %c0_i32_0 = arith.constant 0 : i32
    %c0_i32_1 = arith.constant 0 : i32
    return %arg1, %c0_i32, %c0_i32_0 : i32, i32, i32
  }
  func.func @transform_13(%arg0: i32, %arg1: i32) -> (i32, i32, i32) {
    %c0_i32 = arith.constant 0 : i32
    %c0_i32_0 = arith.constant 0 : i32
    %c0_i32_1 = arith.constant 0 : i32
    return %arg0, %c0_i32, %c0_i32_0 : i32, i32, i32
  }
  func.func @transform_14(%arg0: i32, %arg1: i32) -> (i32, i32, i32, i32) {
    %c0_i32 = arith.constant 0 : i32
    %c0_i32_0 = arith.constant 0 : i32
    %c0_i32_1 = arith.constant 0 : i32
    return %arg1, %arg0, %c0_i32, %c0_i32_0 : i32, i32, i32, i32
  }
}

module attributes {stable_mosaic.version = 11 : i64} {
  func.func @_rollout_chain_kernel(%arg0: i32, %arg1: i32, %arg2: memref<2x2xf32, #tpu.memory_space<smem>>, %arg3: memref<1x1x128x128xbf16, #tpu.memory_space<vmem>>, %arg4: memref<1x128x128xf32, #tpu.memory_space<vmem>>) attributes {dimension_semantics = [#tpu.dimension_semantics<parallel>, #tpu.dimension_semantics<arbitrary>], iteration_bounds = array<i64: 2, 2>, scalar_prefetch = 1 : i64, scratch_operands = 0 : i64, tpu.core_type = #tpu.core_type<tc>, window_params = [{transform_indices = @transform_0, window_bounds = array<i64: 1, 1, 128, 128>}, {transform_indices = @transform_1, window_bounds = array<i64: 1, 128, 128>}]} {
    %c0 = arith.constant 0 : index
    %c0_0 = arith.constant 0 : index
    %c0_1 = arith.constant 0 : index
    %c0_2 = arith.constant 0 : index
    %0 = vector.load %arg3[%c0, %c0_0, %c0_1, %c0_2] : memref<1x1x128x128xbf16, #tpu.memory_space<vmem>>, vector<1x1x128x128xbf16>
    %1 = vector.shape_cast %0 : vector<1x1x128x128xbf16> to vector<128x128xbf16>
    %2 = arith.extf %1 : vector<128x128xbf16> to vector<128x128xf32>
    %3 = arith.index_cast %arg1 : i32 to index
    %4 = arith.index_cast %arg0 : i32 to index
    %5 = memref.load %arg2[%3, %4] : memref<2x2xf32, #tpu.memory_space<smem>>
    %6 = vector.broadcast %5 : f32 to vector<128x128xf32>
    %7 = arith.cmpf ogt, %2, %6 : vector<128x128xf32>
    %cst = arith.constant 0.000000e+00 : f32
    %8 = vector.broadcast %cst : f32 to vector<128x128xf32>
    %9 = arith.select %7, %2, %8 : vector<128x128xi1>, vector<128x128xf32>
    %10 = tpu.iota {dimensions = array<i32: 0>} : vector<128x128xi32>
    %11 = tpu.iota {dimensions = array<i32: 1>} : vector<128x128xi32>
    %12 = arith.cmpi eq, %10, %11 : vector<128x128xi32>
    %13 = arith.extui %12 : vector<128x128xi1> to vector<128x128xi32>
    %14 = arith.sitofp %13 : vector<128x128xi32> to vector<128x128xf32>
    %15 = arith.addf %9, %14 : vector<128x128xf32>
    %cst_3 = arith.constant 5.000000e-01 : f32
    %16 = vector.broadcast %cst_3 : f32 to vector<128x128xf32>
    %17 = arith.mulf %15, %16 : vector<128x128xf32>
    %cst_4 = arith.constant dense<0.000000e+00> : vector<128xf32>
    %18 = vector.multi_reduction <add>, %17, %cst_4 [1] : vector<128x128xf32> to vector<128xf32>
    %19 = vector.shape_cast %18 : vector<128xf32> to vector<128x1xf32>
    %20 = tpu.reciprocal %19 {approx = true} : vector<128x1xf32> -> vector<128x1xf32>
    %21 = vector.broadcast %20 : vector<128x1xf32> to vector<128x128xf32>
    %22 = arith.mulf %17, %21 : vector<128x128xf32>
    %c0_i32 = arith.constant 0 : i32
    %23 = arith.cmpi eq, %arg1, %c0_i32 : i32
    %24 = arith.extui %23 : i1 to i32
    %c0_i32_5 = arith.constant 0 : i32
    %25 = arith.cmpi ne, %24, %c0_i32_5 : i32
    scf.if %25 {
      %c0_8 = arith.constant 0 : index
      %c0_9 = arith.constant 0 : index
      %c0_10 = arith.constant 0 : index
      %29 = vector.load %arg4[%c0_8, %c0_9, %c0_10] : memref<1x128x128xf32, #tpu.memory_space<vmem>>, vector<1x128x128xf32>
      %30 = vector.shape_cast %29 : vector<1x128x128xf32> to vector<128x128xf32>
      %31 = vector.shape_cast %22 : vector<128x128xf32> to vector<1x128x128xf32>
      tpu.vector_store %arg4[%c0_8, %c0_9, %c0_10], %31 {strides = array<i32>} : memref<1x128x128xf32, #tpu.memory_space<vmem>>, vector<1x128x128xf32>,
    } else {
    }
    %c0_i32_6 = arith.constant 0 : i32
    %26 = arith.cmpi sgt, %arg1, %c0_i32_6 : i32
    %27 = arith.extui %26 : i1 to i32
    %c0_i32_7 = arith.constant 0 : i32
    %28 = arith.cmpi ne, %27, %c0_i32_7 : i32
    scf.if %28 {
      %29 = arith.truncf %22 : vector<128x128xf32> to vector<128x128xbf16>
      %c0_8 = arith.constant 0 : index
      %c0_9 = arith.constant 0 : index
      %c0_10 = arith.constant 0 : index
      %30 = vector.load %arg4[%c0_8, %c0_9, %c0_10] : memref<1x128x128xf32, #tpu.memory_space<vmem>>, vector<1x128x128xf32>
      %31 = vector.shape_cast %30 : vector<1x128x128xf32> to vector<128x128xf32>
      %32 = arith.truncf %31 : vector<128x128xf32> to vector<128x128xbf16>
      %cst_11 = arith.constant dense<0.000000e+00> : vector<128x128xf32>
      %33 = tpu.matmul %29, %32, %cst_11 {dimension_numbers = #tpu.dot_dimension_numbers<[1], [0], [0], [1], [0, 0, 1, 1], [], []>} : vector<128x128xbf16>, vector<128x128xbf16>, vector<128x128xf32> -> vector<128x128xf32>
      %c0_12 = arith.constant 0 : index
      %c0_13 = arith.constant 0 : index
      %c0_14 = arith.constant 0 : index
      %34 = vector.load %arg4[%c0_12, %c0_13, %c0_14] : memref<1x128x128xf32, #tpu.memory_space<vmem>>, vector<1x128x128xf32>
      %35 = vector.shape_cast %34 : vector<1x128x128xf32> to vector<128x128xf32>
      %36 = vector.shape_cast %33 : vector<128x128xf32> to vector<1x128x128xf32>
      tpu.vector_store %arg4[%c0_12, %c0_13, %c0_14], %36 {strides = array<i32>} : memref<1x128x128xf32, #tpu.memory_space<vmem>>, vector<1x128x128xf32>,
    } else {
    }
    return
  }
  func.func @transform_0(%arg0: i32, %arg1: i32, %arg2: memref<2x2xf32, #tpu.memory_space<smem>>) -> (i32, i32, i32, i32) {
    %c0_i32 = arith.constant 0 : i32
    %c0_i32_0 = arith.constant 0 : i32
    %c0_i32_1 = arith.constant 0 : i32
    return %arg1, %arg0, %c0_i32, %c0_i32_0 : i32, i32, i32, i32
  }
  func.func @transform_1(%arg0: i32, %arg1: i32, %arg2: memref<2x2xf32, #tpu.memory_space<smem>>) -> (i32, i32, i32) {
    %c0_i32 = arith.constant 0 : i32
    %c0_i32_0 = arith.constant 0 : i32
    %c0_i32_1 = arith.constant 0 : i32
    return %arg0, %c0_i32, %c0_i32_0 : i32, i32, i32
  }
}

</mosaic_0001>

<llo_original>
// kernel: vit_rollout_forward.3
$region0: #{vit_rollout_forward.3}
  #allocation0 [shape = 'u32[]', space=smem, size = 0x4, offset = 0x4, fixed_abs, tag = 'smem constant byte address 0x4 - core index']
  #allocation1 [shape = 'u32[144,128]{1,0:T(1,128)}', space=vmem, size = 0x12000, scoped, tag = 'internal scratch']
  %s0 = inlined_call_operand.vmem [shape: bf16[32,48], index: 0, kind: input, shape index: {}]
  %s1 = inlined_call_operand.vmem [shape: bf16[48,32], index: 1, kind: input, shape index: {}]
  %s2 = inlined_call_operand.vmem [shape: f32[1,32], index: 2, kind: input, shape index: {}]
  %s3 = inlined_call_operand.vmem [shape: f32[32,32], index: 3, kind: output, shape index: {}]
  %s4 = sld [smem:[#allocation0]]
  $region22: #{vit_rollout_forward.3} parent=0
    _
  %s6 = ssub.s32 1, %s4
  %s7 = scalar_select 0, %s6, %s4
  // Predicated region
  $region2: #{vit_rollout_forward.3} parent=0 // pred_check
    _
  $region3: #{vit_rollout_forward.3} parent=0 // pred_check_branch
    %9 = sbr.rel (0) target = $region5
  $region4: #{vit_rollout_forward.3} parent=0 // pred_region
    _
  $region5: #{vit_rollout_forward.3} parent=0 // pred_fallthru
    _
  // Predicated region
  $region6: #{vit_rollout_forward.3} parent=0 // pred_check
    _
  $region7: #{vit_rollout_forward.3} parent=0 // pred_check_branch
    %11 = sbr.rel (0) target = $region9
  $region8: #{vit_rollout_forward.3} parent=0 // pred_region
    _
  $region9: #{vit_rollout_forward.3} parent=0 // pred_fallthru
    _
  // Predicated region
  $region10: #{vit_rollout_forward.3} parent=0 // pred_check
    _
  $region11: #{vit_rollout_forward.3} parent=0 // pred_check_branch
    %13 = sbr.rel (0) target = $region13
  $region12: #{vit_rollout_forward.3} parent=0 // pred_region
    _
  $region13: #{vit_rollout_forward.3} parent=0 // pred_fallthru
    _
  %v15 = vld [vmem:[%s0] sm:$0xf]
  %v16 = vld [vmem:[%s0 + $0x4] sm:$0xf]
  %v17 = vld [vmem:[%s0 + $0x8] sm:$0xf]
  %v18 = vld [vmem:[%s0 + $0xc] sm:$0xf]
  %v19 = vld [vmem:[%s1] sm:$0xf]
  %v20 = vld [vmem:[%s1 + $0x4] sm:$0xf]
  %v21 = vld [vmem:[%s1 + $0x8] sm:$0xf]
  %v22 = vld [vmem:[%s1 + $0xc] sm:$0xf]
  %v23 = vld [vmem:[%s1 + $0x10] sm:$0xf]
  %v24 = vld [vmem:[%s1 + $0x14] sm:$0xf]
  %v25 = vld [vmem:[%s2] sm:$0x1]
  %v27 = vlaneseq
  %v28 = vshrl.u32 %v27, 7
  %v29 = vsub.s32 0, %v28
  %v30 = vrot.slane %v25, %v29
  %v36 = vunpack.c.l.b16 %v15
  %v37 = vunpack.c.l.b16 %v16
  %v38 = vunpack.c.l.b16 %v17
  %v39 = vunpack.c.l.b16 %v18
  %v40 = vpack.c.b16 %v37, %v36
  %v41 = vpack.c.b16 %v39, %v38
  %v48 = vunpack.c.l.b16 %v19
  %v49 = vunpack.c.l.b16 %v20
  %v50 = vunpack.c.l.b16 %v21
  %v51 = vunpack.c.l.b16 %v22
  %v52 = vunpack.c.l.b16 %v23
  %v53 = vunpack.c.l.b16 %v24
  %v54 = vpack.c.b16 %v49, %v48
  %v55 = vpack.c.b16 %v51, %v50
  %v56 = vpack.c.b16 %v53, %v52
  %vm60 = vcmask 392192
  %v62 = vsel %vm60, %v40, 0
  %v65 = vsel %vm60, %v41, 0
  %67 = vmatprep.subr.bf16.mxu0 0
  %68 = vmatpush1.bf16.msra.mxu0 %v54
  %69 = vmatprep.subr.bf16.mxu0 0
  %70 = vmatpush1.bf16.msra.mxu0 %v55
  %71 = vmatprep.subr.bf16.mxu0 0
  %72 = vmatpush1.bf16.msra.mxu0 %v56
  %73 = vmatprep.subr.bf16.mxu0 0
  %74 = vmatpush1.bf16.msra.mxu0 0
  %75 = vmatprep.subr.bf16.mxu0 0
  %76 = vmatpush1.bf16.msra.mxu0 0
  %77 = vmatprep.subr.bf16.mxu0 0
  %78 = vmatpush1.bf16.msra.mxu0 0
  %79 = vmatprep.subr.bf16.mxu0 0
  %80 = vmatpush1.bf16.msra.mxu0 0
  %81 = vmatprep.subr.bf16.mxu0 0
  %82 = vmatpush1.bf16.msra.mxu0 0
  %83 = vmatprep.subr.bf16.mxu0 0
  %84 = vmatpush1.bf16.msra.mxu0 0
  %85 = vmatprep.subr.bf16.mxu0 0
  %86 = vmatpush1.bf16.msra.mxu0 0
  %87 = vmatprep.subr.bf16.mxu0 0
  %88 = vmatpush1.bf16.msra.mxu0 0
  %89 = vmatprep.subr.bf16.mxu0 0
  %90 = vmatpush1.bf16.msra.mxu0 0
  %91 = vmatprep.subr.bf16.mxu0 0
  %92 = vmatpush1.bf16.msra.mxu0 0
  %93 = vmatprep.subr.bf16.mxu0 0
  %94 = vmatpush1.bf16.msra.mxu0 0
  %95 = vmatprep.subr.bf16.mxu0 0
  %96 = vmatpush1.bf16.msra.mxu0 0
  %97 = vmatprep.subr.bf16.mxu0 0
  %98 = vmatpush1.bf16.msra.mxu0 0
  %99 = vmatprep.mubr.bf16.mxu0 0
  %100 = vmatmul.mubr.bf16.gmra.mrb[0].mxu0 %v62
  %v101 = vpop.f32.mrb[0].mxu0
  %v102 = vadd.f32 %v30, %v101
  %v103 = vpop.f32.mrb[0].mxu0
  %v104 = vpop.f32.mrb[0].mxu0
  %v105 = vadd.f32 %v30, %v104
  %v106 = vpop.f32.mrb[0].mxu0
  %107 = vmatprep.mubr.bf16.mxu0 0
  %108 = vmatmul.mubr.bf16.gmra.mrb[0].mxu0 %v65
  %v109 = vpop.f32.mrb[0].mxu0
  %v110 = vadd.f32 %v30, %v109
  %v111 = vpop.f32.mrb[0].mxu0
  %v112 = vpop.f32.mrb[0].mxu0
  %v113 = vadd.f32 %v30, %v112
  %v114 = vpop.f32.mrb[0].mxu0
  %115 = vdwg.mxu0
  %vm116 = vcmask 261120
  %117 = vst.msk [vmem:[%s3] sm:$0xff] %vm116, %v102
  %118 = vst.msk [vmem:[%s3 + $0x8] sm:$0xff] %vm116, %v105
  %119 = vst.msk [vmem:[%s3 + $0x10] sm:$0xff] %vm116, %v110
  %120 = vst.msk [vmem:[%s3 + $0x18] sm:$0xff] %vm116, %v113
  // Predicated region
  $region14: #{vit_rollout_forward.3} parent=0 // pred_check
    _
  $region15: #{vit_rollout_forward.3} parent=0 // pred_check_branch
    %122 = sbr.rel (0) target = $region17
  $region16: #{vit_rollout_forward.3} parent=0 // pred_region
    _
  $region17: #{vit_rollout_forward.3} parent=0 // pred_fallthru
    _
  // Predicated region
  $region18: #{vit_rollout_forward.3} parent=0 // pred_check
    _
  $region19: #{vit_rollout_forward.3} parent=0 // pred_check_branch
    %124 = sbr.rel (0) target = $region21
  $region20: #{vit_rollout_forward.3} parent=0 // pred_region
    _
  $region21: #{vit_rollout_forward.3} parent=0 // pred_fallthru
    _

// kernel: squeeze.6
$region0: #{squeeze.6}
  %s0 = inlined_call_operand.vmem [shape: f32[2,16], index: 0, kind: input, shape index: {}]
  %s1 = inlined_call_operand.vmem [shape: f32[2,4,4], index: 1, kind: output, shape index: {}]
  $region1: #{squeeze.6} parent=0
    #allocation0 [shape = 'u8[8192]{0}', space=vmem, size = 0x2000, scoped, tag = 'scoped mem for output reshape']
    #allocation1 [shape = 'u8[4096]{0}', space=vmem, size = 0x1000, scoped, tag = 'scoped mem for input reshape']
    %s3 = sshllo.u32 0, 2
    %v4 = vld [vmem:[%s0] sm:%s3]
    %5 = vst [vmem:[#allocation1] sm:%s3] %v4
    %v6 = vld [vmem:[#allocation1] sm:$0x3]
    %vm7 = vcmask 31744
    %8 = vst.msk [vmem:[#allocation0] ss:$8 sm:$0x3] %vm7, %v6
    %v9 = vld [vmem:[#allocation1] sm:$0x3]
    %10 = vrot.lane.b32.xlu0 %v9, 124
    %v11 = vpop.permute.xlu0 %10
    %vm12 = vcmask 31744
    %s13 = scalar_lea.vmem [#allocation0], 1
    %14 = vst.msk [vmem:[%s13] ss:$8 sm:$0x3] %vm12, %v11
    %v15 = vld [vmem:[#allocation1] sm:$0x3]
    %16 = vrot.lane.b32.xlu0 %v15, 120
    %v17 = vpop.permute.xlu0 %16
    %vm18 = vcmask 31744
    %s19 = scalar_lea.vmem [#allocation0], 2
    %20 = vst.msk [vmem:[%s19] ss:$8 sm:$0x3] %vm18, %v17
    %v21 = vld [vmem:[#allocation1] sm:$0x3]
    %22 = vrot.lane.b32.xlu0 %v21, 116
    %v23 = vpop.permute.xlu0 %22
    %vm24 = vcmask 31744
    %s25 = scalar_lea.vmem [#allocation0], 3
    %26 = vst.msk [vmem:[%s25] ss:$8 sm:$0x3] %vm24, %v23
    %s28 = sshllo.u32 0, 4
    %v30 = vld [vmem:[#allocation0] sm:%s28]
    %s31 = sshllo.u32 0, 4
    %32 = vst [vmem:[%s1] sm:%s31] %v30
    %s33 = scalar_lea.vmem [#allocation0], 8
    %v34 = vld [vmem:[%s33] sm:%s28]
    %s35 = sshllo.u32 0, 4
    %s36 = scalar_lea.vmem %s1, 4
    %37 = vst [vmem:[%s36] sm:%s35] %v34

// kernel: vit_rollout_forward.5
$region0: #{vit_rollout_forward.5}
  #allocation0 [shape = 'u32[]', space=smem, size = 0x4, offset = 0x4, fixed_abs, tag = 'smem constant byte address 0x4 - core index']
  #allocation1 [shape = 'u32[144,128]{1,0:T(1,128)}', space=vmem, size = 0x12000, scoped, tag = 'internal scratch']
  #allocation2 [shape = 's32[1]{0}', space=sflag, size = 0x4, scoped, tag = 'scoped memory for vit_rollout_forward.5']
  #allocation3 [shape = 'u8[1024]{0}', space=smem, size = 0x400, scoped, tag = 'prefetched SMEM operand 0']
  %s0 = inlined_call_operand.vmem [shape: f32[2,2], index: 0, kind: input, shape index: {}]
  %s1 = inlined_call_operand.vmem [shape: bf16[2,2,128,128], index: 1, kind: input, shape index: {}]
  %s2 = inlined_call_operand.vmem [shape: f32[2,128,128], index: 2, kind: output, shape index: {}]
  %s3 = sld [smem:[#allocation0]]
  $region45: #{vit_rollout_forward.5} parent=0
    _
  %s5 = ssub.s32 1, %s3
  %s6 = scalar_select 0, %s5, %s3
  %s7 = sshll.u32 %s0, 4
  %s8 = int_to_ptr.vmem [resolvable:$true] %s7
  %10 = dma.vmem_to_smem %s8, 32, [#allocation3], [#allocation2]
  %11 = dma.done [#allocation2], 32
  %12 = sfence
  loop: start=0, step=1, limit=6
  $region2: #{vit_rollout_forward.5} parent=0 // loop_pre_header
    _
  $region3: #{vit_rollout_forward.5} parent=0 // loop_header
    %s14 = sphi 0, %s18
    %p15 = scmp.ge.s32.totalorder %s14, 6
    %s21 = sphi 0, %s33
    %s22 = sphi 0, %s29
    %s23 = sphi 0, %s21
    %s24 = sphi 0, %s22
    %s25 = sphi 0, %s23
    %s26 = sphi 0, %s24
    %s38 = sphi 0, %s40
    %s41 = sphi 0, %s38
    %s42 = sphi 0, %s41
    %s58 = sphi 0, %s42
    %s64 = sphi 0, %s66
    %s67 = sphi 0, %s64
    %s68 = sphi 0, %s67
    %s84 = sphi 0, %s68
  $region4: #{vit_rollout_forward.5} parent=0 // loop_header_branch
    %17 = sbr.rel (%p15) target = $region8
  $region5: #{vit_rollout_forward.5} parent=0 // loop_body
    %s19 = ssub.s32 %s14, 1
    %s20 = ssub.s32 %s14, 2
    %s27 = sadd.s32 1, %s22
    %p28 = scmp.ge.s32.totalorder %s27, 2
    %s29 = scalar_select %p28, 0, %s27
    %s30 = sadd.s32 1, %s21
    %s31 = scalar_select %p28, %s30, %s21
    %p32 = scmp.ge.s32.totalorder %s31, 2
    %s33 = scalar_select %p32, 0, %s31
    %s34 = ssub.s32 %s22, %s29
    %s35 = ssub.s32 %s21, %s33
    %s36 = sor.u32 %s34, %s35
    %p37 = scmp.eq.s32.totalorder %s36, 0
    %s39 = sadd.s32 %s38, 1
    %s40 = scalar_select %p37, %s38, %s39
    %p43 = pneg %p37
    %p44 = scmp.eq.s32.totalorder %s14, 3
    %p45 = por %p43, %p44
    %p46 = scmp.ne.s32.totalorder %s38, %s41
    %p47 = scmp.eq.s32.totalorder %s14, 0
    %p48 = por %p46, %p47
    %p49 = scmp.ne.s32.totalorder %s38, %s41
    %p50 = scmp.eq.s32.totalorder %s19, 3
    %p51 = por %p49, %p50
    %p52 = scmp.ne.s32.totalorder %s41, %s42
    %p53 = scmp.eq.s32.totalorder %s19, 0
    %p54 = por %p52, %p53
    %p55 = scmp.ne.s32.totalorder %s41, %s42
    %p56 = scmp.eq.s32.totalorder %s20, 3
    %p57 = por %p55, %p56
    %p59 = scmp.ne.s32.totalorder %s42, %s58
    %p60 = scmp.eq.s32.totalorder %s20, 0
    %p61 = por %p59, %p60
    %s62 = ssub.s32 %s21, %s33
    %p63 = scmp.eq.s32.totalorder %s62, 0
    %s65 = sadd.s32 %s64, 1
    %s66 = scalar_select %p63, %s64, %s65
    %p69 = pneg %p63
    %p70 = scmp.eq.s32.totalorder %s14, 3
    %p71 = por %p69, %p70
    %p72 = scmp.ne.s32.totalorder %s64, %s67
    %p73 = scmp.eq.s32.totalorder %s14, 0
    %p74 = por %p72, %p73
    %p75 = scmp.ne.s32.totalorder %s64, %s67
    %p76 = scmp.eq.s32.totalorder %s19, 3
    %p77 = por %p75, %p76
    %p78 = scmp.ne.s32.totalorder %s67, %s68
    %p79 = scmp.eq.s32.totalorder %s19, 0
    %p80 = por %p78, %p79
    %p81 = scmp.ne.s32.totalorder %s67, %s68
    %p82 = scmp.eq.s32.totalorder %s20, 3
    %p83 = por %p81, %p82
    %p85 = scmp.ne.s32.totalorder %s68, %s84
    %p86 = scmp.eq.s32.totalorder %s20, 0
    %p87 = por %p85, %p86
    %p88 = scmp.le.s32.totalorder 1, %s14
    %p89 = scmp.lt.s32.totalorder %s14, 5
    %p90 = pnand %p88, %p89
    %p91 = pneg %p90
    // Predicated region
    $region9: #{vit_rollout_forward.5} parent=5 // pred_check
      _
    $region10: #{vit_rollout_forward.5} parent=5 // pred_check_branch
      %93 = sbr.rel (%p90) target = $region12
    $region11: #{vit_rollout_forward.5} parent=5 // pred_region
      %s94 = ssub.s32 %s14, 1
    $region12: #{vit_rollout_forward.5} parent=5 // pred_fallthru
      _
    %p95 = scmp.lt.s32.totalorder %s14, 4
    // Predicated region
    $region13: #{vit_rollout_forward.5} parent=5 // pred_check
      %p96 = pneg %p95
    $region14: #{vit_rollout_forward.5} parent=5 // pred_check_branch
      %98 = sbr.rel (%p96) target = $region16
    $region15: #{vit_rollout_forward.5} parent=5 // pred_region
      // Predicated region
      $region17: #{vit_rollout_forward.5} parent=15 // pred_check
        %p99 = pneg %p48
      $region18: #{vit_rollout_forward.5} parent=15 // pred_check_branch
        %101 = sbr.rel (%p99) target = $region20
      $region19: #{vit_rollout_forward.5} parent=15 // pred_region
        %p102 = scmp.lt.s32.totalorder %s22, 1
        %s103 = scalar_select %p102, %s22, 1
        %p104 = scmp.lt.s32.totalorder %s21, 1
        %s105 = scalar_select %p104, %s21, 1
        %s106 = smul.addr %s105, 16
        %s107 = smul.addr %s103, 32
        %s108 = sadd.s32 %s106, %s107
        %s109 = smul.addr %s108, 4
        %s110 = scalar_lea.vmem %s1, %s109
      $region20: #{vit_rollout_forward.5} parent=15 // pred_fallthru
        _
    $region16: #{vit_rollout_forward.5} parent=5 // pred_fallthru
      _
    %p111 = scmp.le.s32.totalorder 1, %s14
    %p112 = scmp.lt.s32.totalorder %s14, 5
    %p113 = pnand %p111, %p112
    %p114 = pneg %p113
    // Predicated region
    $region21: #{vit_rollout_forward.5} parent=5 // pred_check
      _
    $region22: #{vit_rollout_forward.5} parent=5 // pred_check_branch
      %116 = sbr.rel (%p113) target = $region24
    $region23: #{vit_rollout_forward.5} parent=5 // pred_region
      %s117 = ssub.s32 %s14, 1
      %p118 = scmp.lt.s32.totalorder %s24, 1
      %s119 = scalar_select %p118, %s24, 1
      %p120 = scmp.lt.s32.totalorder %s23, 1
      %s121 = scalar_select %p120, %s23, 1
      %s122 = smul.addr %s121, 16
      %s123 = smul.addr %s119, 32
      %s124 = sadd.s32 %s122, %s123
      %s125 = smul.addr %s124, 4
      %s126 = scalar_lea.vmem %s1, %s125
      %p127 = pneg %p54
      %p128 = pneg %p51
      %p129 = pneg %p80
      %p130 = pneg %p77
      %p131 = scmp.lt.s32.totalorder %s23, 1
      %s132 = scalar_select %p131, %s23, 1
      %s133 = smul.addr %s132, 16
      %s134 = smul.addr %s133, 8
      %s135 = scalar_lea.vmem %s2, %s134
      %p136 = scmp.lt.s32.totalorder %s24, 1
      %s137 = scalar_select %p136, %s24, 1
      %p138 = scmp.lt.s32.totalorder %s23, 1
      %s139 = scalar_select %p138, %s23, 1
      %s140 = smul.addr %s139, 16
      %s141 = smul.addr %s137, 32
      %s142 = sadd.s32 %s140, %s141
      %s143 = smul.addr %s142, 4
      %s144 = scalar_lea.vmem %s1, %s143
      %p145 = scmp.lt.s32.totalorder %s23, 1
      %s146 = scalar_select %p145, %s23, 1
      %s147 = smul.addr %s146, 16
      %s148 = smul.addr %s147, 8
      %s149 = scalar_lea.vmem %s2, %s148
      %v151 = vld [vmem:[%s144] sm:$0xf]
      %v152 = vld [vmem:[%s144 + $0x4] sm:$0xf]
      %v153 = vld [vmem:[%s144 + $0x8] sm:$0xf]
      %v154 = vld [vmem:[%s144 + $0xc] sm:$0xf]
      %v155 = vld [vmem:[%s144 + $0x10] sm:$0xf]
      %v156 = vld [vmem:[%s144 + $0x14] sm:$0xf]
      %v157 = vld [vmem:[%s144 + $0x18] sm:$0xf]
      %v158 = vld [vmem:[%s144 + $0x1c] sm:$0xf]
      %v159 = vld [vmem:[%s144 + $0x20] sm:$0xf]
      %v160 = vld [vmem:[%s144 + $0x24] sm:$0xf]
      %v161 = vld [vmem:[%s144 + $0x28] sm:$0xf]
      %v162 = vld [vmem:[%s144 + $0x2c] sm:$0xf]
      %v163 = vld [vmem:[%s144 + $0x30] sm:$0xf]
      %v164 = vld [vmem:[%s144 + $0x34] sm:$0xf]
      %v165 = vld [vmem:[%s144 + $0x38] sm:$0xf]
      %v166 = vld [vmem:[%s144 + $0x3c] sm:$0xf]
      %v167 = vunpack.c.l.bf16 %v151
      %v168 = vunpack.c.l.bf16 %v152
      %v169 = vunpack.c.l.bf16 %v153
      %v170 = vunpack.c.l.bf16 %v154
      %v171 = vunpack.c.l.bf16 %v155
      %v172 = vunpack.c.l.bf16 %v156
      %v173 = vunpack.c.l.bf16 %v157
      %v174 = vunpack.c.l.bf16 %v158
      %v175 = vunpack.c.l.bf16 %v159
      %v176 = vunpack.c.l.bf16 %v160
      %v177 = vunpack.c.l.bf16 %v161
      %v178 = vunpack.c.l.bf16 %v162
      %v179 = vunpack.c.l.bf16 %v163
      %v180 = vunpack.c.l.bf16 %v164
      %v181 = vunpack.c.l.bf16 %v165
      %v182 = vunpack.c.l.bf16 %v166
      %s183 = sshra.s32 %s23, 7
      %s184 = sand.u32 %s23, 127
      %s185 = sadd.s32 %s183, %s24
      %s186 = smul.u32 %s185, 128
      %s187 = sshra.s32 %s23, 7
      %s188 = sand.u32 %s23, 127
      %s189 = sadd.s32 %s186, %s188
      %s190 = sld [smem:[#allocation3 + %s189]]
      %v191 = vstv %s190
      %vm192 = vcmp.gt.f32.partialorder %v167, %v191
      %vm193 = vcmp.gt.f32.partialorder %v168, %v191
      %vm194 = vcmp.gt.f32.partialorder %v169, %v191
      %vm195 = vcmp.gt.f32.partialorder %v170, %v191
      %vm196 = vcmp.gt.f32.partialorder %v171, %v191
      %vm197 = vcmp.gt.f32.partialorder %v172, %v191
      %vm198 = vcmp.gt.f32.partialorder %v173, %v191
      %vm199 = vcmp.gt.f32.partialorder %v174, %v191
      %vm200 = vcmp.gt.f32.partialorder %v175, %v191
      %vm201 = vcmp.gt.f32.partialorder %v176, %v191
      %vm202 = vcmp.gt.f32.partialorder %v177, %v191
      %vm203 = vcmp.gt.f32.partialorder %v178, %v191
      %vm204 = vcmp.gt.f32.partialorder %v179, %v191
      %vm205 = vcmp.gt.f32.partialorder %v180, %v191
      %vm206 = vcmp.gt.f32.partialorder %v181, %v191
      %vm207 = vcmp.gt.f32.partialorder %v182, %v191
      %v208 = vsel %vm192, %v167, 0.0
      %v209 = vsel %vm193, %v168, 0.0
      %v210 = vsel %vm194, %v169, 0.0
      %v211 = vsel %vm195, %v170, 0.0
      %v212 = vsel %vm196, %v171, 0.0
      %v213 = vsel %vm197, %v172, 0.0
      %v214 = vsel %vm198, %v173, 0.0
      %v215 = vsel %vm199, %v174, 0.0
      %v216 = vsel %vm200, %v175, 0.0
      %v217 = vsel %vm201, %v176, 0.0
      %v218 = vsel %vm202, %v177, 0.0
      %v219 = vsel %vm203, %v178, 0.0
      %v220 = vsel %vm204, %v179, 0.0
      %v221 = vsel %vm205, %v180, 0.0
      %v222 = vsel %vm206, %v181, 0.0
      %v223 = vsel %vm207, %v182, 0.0
      %v224 = vlaneseq
      %v225 = vshrl.u32 %v224, 7
      %v226 = vadd.s32 %v225, 8
      %v227 = vadd.s32 %v225, 16
      %v228 = vadd.s32 %v225, 24
      %v229 = vadd.s32 %v225, 32
      %v230 = vadd.s32 %v225, 40
      %v231 = vadd.s32 %v225, 48
      %v232 = vadd.s32 %v225, 56
      %v233 = vadd.s32 %v225, 64
      %v234 = vadd.s32 %v225, 72
      %v235 = vadd.s32 %v225, 80
      %v236 = vadd.s32 %v225, 88
      %v237 = vadd.s32 %v225, 96
      %v238 = vadd.s32 %v225, 104
      %v239 = vadd.s32 %v225, 112
      %v240 = vadd.s32 %v225, 120
      %v241 = vlaneseq
      %v242 = vand.u32 %v241, 127
      %vm243 = vcmp.eq.s32.totalorder %v225, %v242
      %vm244 = vcmp.eq.s32.totalorder %v226, %v242
      %vm245 = vcmp.eq.s32.totalorder %v227, %v242
      %vm246 = vcmp.eq.s32.totalorder %v228, %v242
      %vm247 = vcmp.eq.s32.totalorder %v229, %v242
      %vm248 = vcmp.eq.s32.totalorder %v230, %v242
      %vm249 = vcmp.eq.s32.totalorder %v231, %v242
      %vm250 = vcmp.eq.s32.totalorder %v232, %v242
      %vm251 = vcmp.eq.s32.totalorder %v233, %v242
      %vm252 = vcmp.eq.s32.totalorder %v234, %v242
      %vm253 = vcmp.eq.s32.totalorder %v235, %v242
      %vm254 = vcmp.eq.s32.totalorder %v236, %v242
      %vm255 = vcmp.eq.s32.totalorder %v237, %v242
      %vm256 = vcmp.eq.s32.totalorder %v238, %v242
      %vm257 = vcmp.eq.s32.totalorder %v239, %v242
      %vm258 = vcmp.eq.s32.totalorder %v240, %v242
      %v259 = vsel %vm243, 1, 0
      %v260 = vsel %vm244, 1, 0
      %v261 = vsel %vm245, 1, 0
      %v262 = vsel %vm246, 1, 0
      %v263 = vsel %vm247, 1, 0
      %v264 = vsel %vm248, 1, 0
      %v265 = vsel %vm249, 1, 0
      %v266 = vsel %vm250, 1, 0
      %v267 = vsel %vm251, 1, 0
      %v268 = vsel %vm252, 1, 0
      %v269 = vsel %vm253, 1, 0
      %v270 = vsel %vm254, 1, 0
      %v271 = vsel %vm255, 1, 0
      %v272 = vsel %vm256, 1, 0
      %v273 = vsel %vm257, 1, 0
      %v274 = vsel %vm258, 1, 0
      %v275 = vcvt.s32.f32 %v259
      %v276 = vcvt.s32.f32 %v260
      %v277 = vcvt.s32.f32 %v261
      %v278 = vcvt.s32.f32 %v262
      %v279 = vcvt.s32.f32 %v263
      %v280 = vcvt.s32.f32 %v264
      %v281 = vcvt.s32.f32 %v265
      %v282 = vcvt.s32.f32 %v266
      %v283 = vcvt.s32.f32 %v267
      %v284 = vcvt.s32.f32 %v268
      %v285 = vcvt.s32.f32 %v269
      %v286 = vcvt.s32.f32 %v270
      %v287 = vcvt.s32.f32 %v271
      %v288 = vcvt.s32.f32 %v272
      %v289 = vcvt.s32.f32 %v273
      %v290 = vcvt.s32.f32 %v274
      %v291 = vadd.f32 %v208, %v275
      %v292 = vadd.f32 %v209, %v276
      %v293 = vadd.f32 %v210, %v277
      %v294 = vadd.f32 %v211, %v278
      %v295 = vadd.f32 %v212, %v279
      %v296 = vadd.f32 %v213, %v280
      %v297 = vadd.f32 %v214, %v281
      %v298 = vadd.f32 %v215, %v282
      %v299 = vadd.f32 %v216, %v283
      %v300 = vadd.f32 %v217, %v284
      %v301 = vadd.f32 %v218, %v285
      %v302 = vadd.f32 %v219, %v286
      %v303 = vadd.f32 %v220, %v287
      %v304 = vadd.f32 %v221, %v288
      %v305 = vadd.f32 %v222, %v289
      %v306 = vadd.f32 %v223, %v290
      %v307 = vmul.f32 %v291, 0.5
      %v308 = vmul.f32 %v292, 0.5
      %v309 = vmul.f32 %v293, 0.5
      %v310 = vmul.f32 %v294, 0.5
      %v311 = vmul.f32 %v295, 0.5
      %v312 = vmul.f32 %v296, 0.5
      %v313 = vmul.f32 %v297, 0.5
      %v314 = vmul.f32 %v298, 0.5
      %v315 = vmul.f32 %v299, 0.5
      %v316 = vmul.f32 %v300, 0.5
      %v317 = vmul.f32 %v301, 0.5
      %v318 = vmul.f32 %v302, 0.5
      %v319 = vmul.f32 %v303, 0.5
      %v320 = vmul.f32 %v304, 0.5
      %v321 = vmul.f32 %v305, 0.5
      %v322 = vmul.f32 %v306, 0.5
      %323 = vadd.xlane.f32.xlu0 %v307
      %v324 = vpop.xlane.xlu0 %323
      %325 = vadd.xlane.f32.xlu0 %v308
      %v326 = vpop.xlane.xlu0 %325
      %327 = vadd.xlane.f32.xlu0 %v309
      %v328 = vpop.xlane.xlu0 %327
      %329 = vadd.xlane.f32.xlu0 %v310
      %v330 = vpop.xlane.xlu0 %329
      %331 = vadd.xlane.f32.xlu0 %v311
      %v332 = vpop.xlane.xlu0 %331
      %333 = vadd.xlane.f32.xlu0 %v312
      %v334 = vpop.xlane.xlu0 %333
      %335 = vadd.xlane.f32.xlu0 %v313
      %v336 = vpop.xlane.xlu0 %335
      %337 = vadd.xlane.f32.xlu0 %v314
      %v338 = vpop.xlane.xlu0 %337
      %339 = vadd.xlane.f32.xlu0 %v315
      %v340 = vpop.xlane.xlu0 %339
      %341 = vadd.xlane.f32.xlu0 %v316
      %v342 = vpop.xlane.xlu0 %341
      %343 = vadd.xlane.f32.xlu0 %v317
      %v344 = vpop.xlane.xlu0 %343
      %345 = vadd.xlane.f32.xlu0 %v318
      %v346 = vpop.xlane.xlu0 %345
      %347 = vadd.xlane.f32.xlu0 %v319
      %v348 = vpop.xlane.xlu0 %347
      %349 = vadd.xlane.f32.xlu0 %v320
      %v350 = vpop.xlane.xlu0 %349
      %351 = vadd.xlane.f32.xlu0 %v321
      %v352 = vpop.xlane.xlu0 %351
      %353 = vadd.xlane.f32.xlu0 %v322
      %v354 = vpop.xlane.xlu0 %353
      %v355 = vrcp.pop %v324
      %v356 = vrcp.pop %v326
      %v357 = vrcp.pop %v328
      %v358 = vrcp.pop %v330
      %v359 = vrcp.pop %v332
      %v360 = vrcp.pop %v334
      %v361 = vrcp.pop %v336
      %v362 = vrcp.pop %v338
      %v363 = vrcp.pop %v340
      %v364 = vrcp.pop %v342
      %v365 = vrcp.pop %v344
      %v366 = vrcp.pop %v346
      %v367 = vrcp.pop %v348
      %v368 = vrcp.pop %v350
      %v369 = vrcp.pop %v352
      %v370 = vrcp.pop %v354
      %v371 = vmul.f32 %v307, %v355
      %v372 = vmul.f32 %v308, %v356
      %v373 = vmul.f32 %v309, %v357
      %v374 = vmul.f32 %v310, %v358
      %v375 = vmul.f32 %v311, %v359
      %v376 = vmul.f32 %v312, %v360
      %v377 = vmul.f32 %v313, %v361
      %v378 = vmul.f32 %v314, %v362
      %v379 = vmul.f32 %v315, %v363
      %v380 = vmul.f32 %v316, %v364
      %v381 = vmul.f32 %v317, %v365
      %v382 = vmul.f32 %v318, %v366
      %v383 = vmul.f32 %v319, %v367
      %v384 = vmul.f32 %v320, %v368
      %v385 = vmul.f32 %v321, %v369
      %v386 = vmul.f32 %v322, %v370
      %p387 = scmp.eq.s32.totalorder %s24, 0
      // Predicated region
      $region25: #{vit_rollout_forward.5} parent=23 // pred_check
        %p388 = pneg %p387
      $region26: #{vit_rollout_forward.5} parent=23 // pred_check_branch
        %390 = sbr.rel (%p388) target = $region28
      $region27: #{vit_rollout_forward.5} parent=23 // pred_region
        %391 = vst [vmem:[%s149] sm:$0xff] %v371
        %392 = vst [vmem:[%s149 + $0x8] sm:$0xff] %v372
        %393 = vst [vmem:[%s149 + $0x10] sm:$0xff] %v373
        %394 = vst [vmem:[%s149 + $0x18] sm:$0xff] %v374
        %395 = vst [vmem:[%s149 + $0x20] sm:$0xff] %v375
        %396 = vst [vmem:[%s149 + $0x28] sm:$0xff] %v376
        %397 = vst [vmem:[%s149 + $0x30] sm:$0xff] %v377
        %398 = vst [vmem:[%s149 + $0x38] sm:$0xff] %v378
        %399 = vst [vmem:[%s149 + $0x40] sm:$0xff] %v379
        %400 = vst [vmem:[%s149 + $0x48] sm:$0xff] %v380
        %401 = vst [vmem:[%s149 + $0x50] sm:$0xff] %v381
        %402 = vst [vmem:[%s149 + $0x58] sm:$0xff] %v382
        %403 = vst [vmem:[%s149 + $0x60] sm:$0xff] %v383
        %404 = vst [vmem:[%s149 + $0x68] sm:$0xff] %v384
        %405 = vst [vmem:[%s149 + $0x70] sm:$0xff] %v385
        %406 = vst [vmem:[%s149 + $0x78] sm:$0xff] %v386
      $region28: #{vit_rollout_forward.5} parent=23 // pred_fallthru
        _
      %p407 = scmp.gt.s32.totalorder %s24, 0
      // Predicated region
      $region29: #{vit_rollout_forward.5} parent=23 // pred_check
        %p408 = pneg %p407
      $region30: #{vit_rollout_forward.5} parent=23 // pred_check_branch
        %410 = sbr.rel (%p408) target = $region32
      $region31: #{vit_rollout_forward.5} parent=23 // pred_region
        %v411 = vpack.c.bf16 %v372, %v371
        %v412 = vpack.c.bf16 %v374, %v373
        %v413 = vpack.c.bf16 %v376, %v375
        %v414 = vpack.c.bf16 %v378, %v377
        %v415 = vpack.c.bf16 %v380, %v379
        %v416 = vpack.c.bf16 %v382, %v381
        %v417 = vpack.c.bf16 %v384, %v383
        %v418 = vpack.c.bf16 %v386, %v385
        %v419 = vld [vmem:[%s149] sm:$0xff]
        %v420 = vld [vmem:[%s149 + $0x8] sm:$0xff]
        %v421 = vld [vmem:[%s149 + $0x10] sm:$0xff]
        %v422 = vld [vmem:[%s149 + $0x18] sm:$0xff]
        %v423 = vld [vmem:[%s149 + $0x20] sm:$0xff]
        %v424 = vld [vmem:[%s149 + $0x28] sm:$0xff]
        %v425 = vld [vmem:[%s149 + $0x30] sm:$0xff]
        %v426 = vld [vmem:[%s149 + $0x38] sm:$0xff]
        %v427 = vld [vmem:[%s149 + $0x40] sm:$0xff]
        %v428 = vld [vmem:[%s149 + $0x48] sm:$0xff]
        %v429 = vld [vmem:[%s149 + $0x50] sm:$0xff]
        %v430 = vld [vmem:[%s149 + $0x58] sm:$0xff]
        %v431 = vld [vmem:[%s149 + $0x60] sm:$0xff]
        %v432 = vld [vmem:[%s149 + $0x68] sm:$0xff]
        %v433 = vld [vmem:[%s149 + $0x70] sm:$0xff]
        %v434 = vld [vmem:[%s149 + $0x78] sm:$0xff]
        %v435 = vpack.c.bf16 %v420, %v419
        %v436 = vpack.c.bf16 %v422, %v421
        %v437 = vpack.c.bf16 %v424, %v423
        %v438 = vpack.c.bf16 %v426, %v425
        %v439 = vpack.c.bf16 %v428, %v427
        %v440 = vpack.c.bf16 %v430, %v429
        %v441 = vpack.c.bf16 %v432, %v431
        %v442 = vpack.c.bf16 %v434, %v433
        %443 = vmatprep.subr.bf16.mxu0 0
        %444 = vmatpush1.bf16.msra.mxu0 %v435
        %445 = vmatprep.subr.bf16.mxu0 0
        %446 = vmatpush1.bf16.msra.mxu0 %v436
        %447 = vmatprep.subr.bf16.mxu0 0
        %448 = vmatpush1.bf16.msra.mxu0 %v437
        %449 = vmatprep.subr.bf16.mxu0 0
        %450 = vmatpush1.bf16.msra.mxu0 %v438
        %451 = vmatprep.subr.bf16.mxu0 0
        %452 = vmatpush1.bf16.msra.mxu0 %v439
        %453 = vmatprep.subr.bf16.mxu0 0
        %454 = vmatpush1.bf16.msra.mxu0 %v440
        %455 = vmatprep.subr.bf16.mxu0 0
        %456 = vmatpush1.bf16.msra.mxu0 %v441
        %457 = vmatprep.subr.bf16.mxu0 0
        %458 = vmatpush1.bf16.msra.mxu0 %v442
        %459 = vmatprep.subr.bf16.mxu0 0
        %460 = vmatpush1.bf16.msra.mxu0 0
        %461 = vmatprep.subr.bf16.mxu0 0
        %462 = vmatpush1.bf16.msra.mxu0 0
        %463 = vmatprep.subr.bf16.mxu0 0
        %464 = vmatpush1.bf16.msra.mxu0 0
        %465 = vmatprep.subr.bf16.mxu0 0
        %466 = vmatpush1.bf16.msra.mxu0 0
        %467 = vmatprep.subr.bf16.mxu0 0
        %468 = vmatpush1.bf16.msra.mxu0 0
        %469 = vmatprep.subr.bf16.mxu0 0
        %470 = vmatpush1.bf16.msra.mxu0 0
        %471 = vmatprep.subr.bf16.mxu0 0
        %472 = vmatpush1.bf16.msra.mxu0 0
        %473 = vmatprep.subr.bf16.mxu0 0
        %474 = vmatpush1.bf16.msra.mxu0 0
        %475 = vmatprep.mubr.bf16.mxu0 0
        %476 = vmatmul.mubr.bf16.gmra.mrb[0].mxu0 %v411
        %v477 = vpop.f32.mrb[0].mxu0
        %v478 = vadd.f32 0.0, %v477
        %v479 = vpop.f32.mrb[0].mxu0
        %v480 = vpop.f32.mrb[0].mxu0
        %v481 = vadd.f32 0.0, %v480
        %v482 = vpop.f32.mrb[0].mxu0
        %483 = vmatprep.mubr.bf16.mxu0 0
        %484 = vmatmul.mubr.bf16.gmra.mrb[0].mxu0 %v412
        %v485 = vpop.f32.mrb[0].mxu0
        %v486 = vadd.f32 0.0, %v485
        %v487 = vpop.f32.mrb[0].mxu0
        %v488 = vpop.f32.mrb[0].mxu0
        %v489 = vadd.f32 0.0, %v488
        %v490 = vpop.f32.mrb[0].mxu0
        %491 = vmatprep.mubr.bf16.mxu0 0
        %492 = vmatmul.mubr.bf16.gmra.mrb[0].mxu0 %v413
        %v493 = vpop.f32.mrb[0].mxu0
        %v494 = vadd.f32 0.0, %v493
        %v495 = vpop.f32.mrb[0].mxu0
        %v496 = vpop.f32.mrb[0].mxu0
        %v497 = vadd.f32 0.0, %v496
        %v498 = vpop.f32.mrb[0].mxu0
        %499 = vmatprep.mubr.bf16.mxu0 0
        %500 = vmatmul.mubr.bf16.gmra.mrb[0].mxu0 %v414
        %v501 = vpop.f32.mrb[0].mxu0
        %v502 = vadd.f32 0.0, %v501
        %v503 = vpop.f32.mrb[0].mxu0
        %v504 = vpop.f32.mrb[0].mxu0
        %v505 = vadd.f32 0.0, %v504
        %v506 = vpop.f32.mrb[0].mxu0
        %507 = vmatprep.mubr.bf16.mxu0 0
        %508 = vmatmul.mubr.bf16.gmra.mrb[0].mxu0 %v415
        %v509 = vpop.f32.mrb[0].mxu0
        %v510 = vadd.f32 0.0, %v509
        %v511 = vpop.f32.mrb[0].mxu0
        %v512 = vpop.f32.mrb[0].mxu0
        %v513 = vadd.f32 0.0, %v512
        %v514 = vpop.f32.mrb[0].mxu0
        %515 = vmatprep.mubr.bf16.mxu0 0
        %516 = vmatmul.mubr.bf16.gmra.mrb[0].mxu0 %v416
        %v517 = vpop.f32.mrb[0].mxu0
        %v518 = vadd.f32 0.0, %v517
        %v519 = vpop.f32.mrb[0].mxu0
        %v520 = vpop.f32.mrb[0].mxu0
        %v521 = vadd.f32 0.0, %v520
        %v522 = vpop.f32.mrb[0].mxu0
        %523 = vmatprep.mubr.bf16.mxu0 0
        %524 = vmatmul.mubr.bf16.gmra.mrb[0].mxu0 %v417
        %v525 = vpop.f32.mrb[0].mxu0
        %v526 = vadd.f32 0.0, %v525
        %v527 = vpop.f32.mrb[0].mxu0
        %v528 = vpop.f32.mrb[0].mxu0
        %v529 = vadd.f32 0.0, %v528
        %v530 = vpop.f32.mrb[0].mxu0
        %531 = vmatprep.mubr.bf16.mxu0 0
        %532 = vmatmul.mubr.bf16.gmra.mrb[0].mxu0 %v418
        %v533 = vpop.f32.mrb[0].mxu0
        %v534 = vadd.f32 0.0, %v533
        %v535 = vpop.f32.mrb[0].mxu0
        %v536 = vpop.f32.mrb[0].mxu0
        %v537 = vadd.f32 0.0, %v536
        %v538 = vpop.f32.mrb[0].mxu0
        %539 = vdwg.mxu0
        %540 = vst [vmem:[%s149] sm:$0xff] %v478
        %541 = vst [vmem:[%s149 + $0x8] sm:$0xff] %v481
        %542 = vst [vmem:[%s149 + $0x10] sm:$0xff] %v486
        %543 = vst [vmem:[%s149 + $0x18] sm:$0xff] %v489
        %544 = vst [vmem:[%s149 + $0x20] sm:$0xff] %v494
        %545 = vst [vmem:[%s149 + $0x28] sm:$0xff] %v497
        %546 = vst [vmem:[%s149 + $0x30] sm:$0xff] %v502
        %547 = vst [vmem:[%s149 + $0x38] sm:$0xff] %v505
        %548 = vst [vmem:[%s149 + $0x40] sm:$0xff] %v510
        %549 = vst [vmem:[%s149 + $0x48] sm:$0xff] %v513
        %550 = vst [vmem:[%s149 + $0x50] sm:$0xff] %v518
        %551 = vst [vmem:[%s149 + $0x58] sm:$0xff] %v521
        %552 = vst [vmem:[%s149 + $0x60] sm:$0xff] %v526
        %553 = vst [vmem:[%s149 + $0x68] sm:$0xff] %v529
        %554 = vst [vmem:[%s149 + $0x70] sm:$0xff] %v534
        %555 = vst [vmem:[%s149 + $0x78] sm:$0xff] %v537
      $region32: #{vit_rollout_forward.5} parent=23 // pred_fallthru
        _
      %p556 = scmp.lt.s32.totalorder %s23, 1
      %s557 = scalar_select %p556, %s23, 1
      %s558 = smul.addr %s557, 16
      %s559 = smul.addr %s558, 8
      %s560 = scalar_lea.vmem %s2, %s559
      // Predicated region
      $region33: #{vit_rollout_forward.5} parent=23 // pred_check
        %p561 = pneg %p77
      $region34: #{vit_rollout_forward.5} parent=23 // pred_check_branch
        %563 = sbr.rel (%p561) target = $region36
      $region35: #{vit_rollout_forward.5} parent=23 // pred_region
        _
      $region36: #{vit_rollout_forward.5} parent=23 // pred_fallthru
        _
    $region24: #{vit_rollout_forward.5} parent=5 // pred_fallthru
      _
    %p564 = scmp.le.s32.totalorder 2, %s14
    // Predicated region
    $region37: #{vit_rollout_forward.5} parent=5 // pred_check
      %p565 = pneg %p564
    $region38: #{vit_rollout_forward.5} parent=5 // pred_check_branch
      %567 = sbr.rel (%p565) target = $region40
    $region39: #{vit_rollout_forward.5} parent=5 // pred_region
      %s568 = ssub.s32 %s14, 2
      // Predicated region
      $region41: #{vit_rollout_forward.5} parent=39 // pred_check
        %p569 = pneg %p83
      $region42: #{vit_rollout_forward.5} parent=39 // pred_check_branch
        %571 = sbr.rel (%p569) target = $region44
      $region43: #{vit_rollout_forward.5} parent=39 // pred_region
        %p572 = scmp.lt.s32.totalorder %s25, 1
        %s573 = scalar_select %p572, %s25, 1
        %s574 = smul.addr %s573, 16
        %s575 = smul.addr %s574, 8
        %s576 = scalar_lea.vmem %s2, %s575
      $region44: #{vit_rollout_forward.5} parent=39 // pred_fallthru
        _
    $region40: #{vit_rollout_forward.5} parent=5 // pred_fallthru
      _
  $region6: #{vit_rollout_forward.5} parent=0 // loop_footer
    %s18 = sadd.s32 1, %s14
  $region7: #{vit_rollout_forward.5} parent=0 // loop_footer_branch
    %13 = sbr.rel target = $region3
  $region8: #{vit_rollout_forward.5} parent=0 // loop_exit
    _

// kernel: vit_rollout_forward.4
$region0: #{vit_rollout_forward.4}
  #allocation0 [shape = 'u32[]', space=smem, size = 0x4, offset = 0x4, fixed_abs, tag = 'smem constant byte address 0x4 - core index']
  #allocation1 [shape = 'u32[144,128]{1,0:T(1,128)}', space=vmem, size = 0x12000, scoped, tag = 'internal scratch']
  %s0 = inlined_call_operand.vmem [shape: f32[2,128,32], index: 0, kind: input, shape index: {}]
  %s1 = inlined_call_operand.vmem [shape: f32[2,1,32], index: 1, kind: input, shape index: {}]
  %s2 = inlined_call_operand.vmem [shape: f32[2,1,32], index: 2, kind: input, shape index: {}]
  %s3 = inlined_call_operand.vmem [shape: bf16[2,32,96], index: 3, kind: input, shape index: {}]
  %s4 = inlined_call_operand.vmem [shape: f32[2,1,96], index: 4, kind: input, shape index: {}]
  %s5 = inlined_call_operand.vmem [shape: bf16[2,32,32], index: 5, kind: input, shape index: {}]
  %s6 = inlined_call_operand.vmem [shape: f32[2,1,32], index: 6, kind: input, shape index: {}]
  %s7 = inlined_call_operand.vmem [shape: f32[2,1,32], index: 7, kind: input, shape index: {}]
  %s8 = inlined_call_operand.vmem [shape: f32[2,1,32], index: 8, kind: input, shape index: {}]
  %s9 = inlined_call_operand.vmem [shape: bf16[2,32,64], index: 9, kind: input, shape index: {}]
  %s10 = inlined_call_operand.vmem [shape: f32[2,1,64], index: 10, kind: input, shape index: {}]
  %s11 = inlined_call_operand.vmem [shape: bf16[2,64,32], index: 11, kind: input, shape index: {}]
  %s12 = inlined_call_operand.vmem [shape: f32[2,1,32], index: 12, kind: input, shape index: {}]
  %s13 = inlined_call_operand.vmem [shape: f32[2,128,32], index: 13, kind: output, shape index: {0}]
  %s14 = inlined_call_operand.vmem [shape: bf16[2,2,128,128], index: 14, kind: output, shape index: {1}]
  %15 = xla_tuple %s13, %s14
  %s16 = sld [smem:[#allocation0]]
  $region97: #{vit_rollout_forward.4} parent=0
    _
  %s18 = ssub.s32 1, %s16
  %s19 = scalar_select 0, %s18, %s16
  loop: start=0, step=1, limit=6
  $region2: #{vit_rollout_forward.4} parent=0 // loop_pre_header
    _
  $region3: #{vit_rollout_forward.4} parent=0 // loop_header
    %s21 = sphi 0, %s25
    %p22 = scmp.ge.s32.totalorder %s21, 6
    %s28 = sphi 0, %s40
    %s29 = sphi 0, %s36
    %s30 = sphi 0, %s28
    %s31 = sphi 0, %s29
    %s32 = sphi 0, %s30
    %s33 = sphi 0, %s31
    %s43 = sphi 0, %s45
    %s46 = sphi 0, %s43
    %s47 = sphi 0, %s46
    %s63 = sphi 0, %s47
    %s69 = sphi 0, %s71
    %s72 = sphi 0, %s69
    %s73 = sphi 0, %s72
    %s89 = sphi 0, %s73
    %s95 = sphi 0, %s97
    %s98 = sphi 0, %s95
    %s99 = sphi 0, %s98
    %s115 = sphi 0, %s99
    %s121 = sphi 0, %s123
    %s124 = sphi 0, %s121
    %s125 = sphi 0, %s124
    %s141 = sphi 0, %s125
    %s147 = sphi 0, %s149
    %s150 = sphi 0, %s147
    %s151 = sphi 0, %s150
    %s167 = sphi 0, %s151
    %s173 = sphi 0, %s175
    %s176 = sphi 0, %s173
    %s177 = sphi 0, %s176
    %s193 = sphi 0, %s177
    %s199 = sphi 0, %s201
    %s202 = sphi 0, %s199
    %s203 = sphi 0, %s202
    %s219 = sphi 0, %s203
    %s225 = sphi 0, %s227
    %s228 = sphi 0, %s225
    %s229 = sphi 0, %s228
    %s245 = sphi 0, %s229
    %s251 = sphi 0, %s253
    %s254 = sphi 0, %s251
    %s255 = sphi 0, %s254
    %s271 = sphi 0, %s255
    %s277 = sphi 0, %s279
    %s280 = sphi 0, %s277
    %s281 = sphi 0, %s280
    %s297 = sphi 0, %s281
    %s303 = sphi 0, %s305
    %s306 = sphi 0, %s303
    %s307 = sphi 0, %s306
    %s323 = sphi 0, %s307
    %s329 = sphi 0, %s331
    %s332 = sphi 0, %s329
    %s333 = sphi 0, %s332
    %s349 = sphi 0, %s333
    %s355 = sphi 0, %s357
    %s358 = sphi 0, %s355
    %s359 = sphi 0, %s358
    %s375 = sphi 0, %s359
    %s381 = sphi 0, %s383
    %s384 = sphi 0, %s381
    %s385 = sphi 0, %s384
    %s401 = sphi 0, %s385
    %s409 = sphi 0, %s411
    %s412 = sphi 0, %s409
    %s413 = sphi 0, %s412
    %s429 = sphi 0, %s413
  $region4: #{vit_rollout_forward.4} parent=0 // loop_header_branch
    %24 = sbr.rel (%p22) target = $region8
  $region5: #{vit_rollout_forward.4} parent=0 // loop_body
    %s26 = ssub.s32 %s21, 1
    %s27 = ssub.s32 %s21, 2
    %s34 = sadd.s32 1, %s29
    %p35 = scmp.ge.s32.totalorder %s34, 2
    %s36 = scalar_select %p35, 0, %s34
    %s37 = sadd.s32 1, %s28
    %s38 = scalar_select %p35, %s37, %s28
    %p39 = scmp.ge.s32.totalorder %s38, 2
    %s40 = scalar_select %p39, 0, %s38
    %s41 = ssub.s32 %s28, %s40
    %p42 = scmp.eq.s32.totalorder %s41, 0
    %s44 = sadd.s32 %s43, 1
    %s45 = scalar_select %p42, %s43, %s44
    %p48 = pneg %p42
    %p49 = scmp.eq.s32.totalorder %s21, 3
    %p50 = por %p48, %p49
    %p51 = scmp.ne.s32.totalorder %s43, %s46
    %p52 = scmp.eq.s32.totalorder %s21, 0
    %p53 = por %p51, %p52
    %p54 = scmp.ne.s32.totalorder %s43, %s46
    %p55 = scmp.eq.s32.totalorder %s26, 3
    %p56 = por %p54, %p55
    %p57 = scmp.ne.s32.totalorder %s46, %s47
    %p58 = scmp.eq.s32.totalorder %s26, 0
    %p59 = por %p57, %p58
    %p60 = scmp.ne.s32.totalorder %s46, %s47
    %p61 = scmp.eq.s32.totalorder %s27, 3
    %p62 = por %p60, %p61
    %p64 = scmp.ne.s32.totalorder %s47, %s63
    %p65 = scmp.eq.s32.totalorder %s27, 0
    %p66 = por %p64, %p65
    %s67 = ssub.s32 %s29, %s36
    %p68 = scmp.eq.s32.totalorder %s67, 0
    %s70 = sadd.s32 %s69, 1
    %s71 = scalar_select %p68, %s69, %s70
    %p74 = pneg %p68
    %p75 = scmp.eq.s32.totalorder %s21, 3
    %p76 = por %p74, %p75
    %p77 = scmp.ne.s32.totalorder %s69, %s72
    %p78 = scmp.eq.s32.totalorder %s21, 0
    %p79 = por %p77, %p78
    %p80 = scmp.ne.s32.totalorder %s69, %s72
    %p81 = scmp.eq.s32.totalorder %s26, 3
    %p82 = por %p80, %p81
    %p83 = scmp.ne.s32.totalorder %s72, %s73
    %p84 = scmp.eq.s32.totalorder %s26, 0
    %p85 = por %p83, %p84
    %p86 = scmp.ne.s32.totalorder %s72, %s73
    %p87 = scmp.eq.s32.totalorder %s27, 3
    %p88 = por %p86, %p87
    %p90 = scmp.ne.s32.totalorder %s73, %s89
    %p91 = scmp.eq.s32.totalorder %s27, 0
    %p92 = por %p90, %p91
    %s93 = ssub.s32 %s29, %s36
    %p94 = scmp.eq.s32.totalorder %s93, 0
    %s96 = sadd.s32 %s95, 1
    %s97 = scalar_select %p94, %s95, %s96
    %p100 = pneg %p94
    %p101 = scmp.eq.s32.totalorder %s21, 3
    %p102 = por %p100, %p101
    %p103 = scmp.ne.s32.totalorder %s95, %s98
    %p104 = scmp.eq.s32.totalorder %s21, 0
    %p105 = por %p103, %p104
    %p106 = scmp.ne.s32.totalorder %s95, %s98
    %p107 = scmp.eq.s32.totalorder %s26, 3
    %p108 = por %p106, %p107
    %p109 = scmp.ne.s32.totalorder %s98, %s99
    %p110 = scmp.eq.s32.totalorder %s26, 0
    %p111 = por %p109, %p110
    %p112 = scmp.ne.s32.totalorder %s98, %s99
    %p113 = scmp.eq.s32.totalorder %s27, 3
    %p114 = por %p112, %p113
    %p116 = scmp.ne.s32.totalorder %s99, %s115
    %p117 = scmp.eq.s32.totalorder %s27, 0
    %p118 = por %p116, %p117
    %s119 = ssub.s32 %s29, %s36
    %p120 = scmp.eq.s32.totalorder %s119, 0
    %s122 = sadd.s32 %s121, 1
    %s123 = scalar_select %p120, %s121, %s122
    %p126 = pneg %p120
    %p127 = scmp.eq.s32.totalorder %s21, 3
    %p128 = por %p126, %p127
    %p129 = scmp.ne.s32.totalorder %s121, %s124
    %p130 = scmp.eq.s32.totalorder %s21, 0
    %p131 = por %p129, %p130
    %p132 = scmp.ne.s32.totalorder %s121, %s124
    %p133 = scmp.eq.s32.totalorder %s26, 3
    %p134 = por %p132, %p133
    %p135 = scmp.ne.s32.totalorder %s124, %s125
    %p136 = scmp.eq.s32.totalorder %s26, 0
    %p137 = por %p135, %p136
    %p138 = scmp.ne.s32.totalorder %s124, %s125
    %p139 = scmp.eq.s32.totalorder %s27, 3
    %p140 = por %p138, %p139
    %p142 = scmp.ne.s32.totalorder %s125, %s141
    %p143 = scmp.eq.s32.totalorder %s27, 0
    %p144 = por %p142, %p143
    %s145 = ssub.s32 %s29, %s36
    %p146 = scmp.eq.s32.totalorder %s145, 0
    %s148 = sadd.s32 %s147, 1
    %s149 = scalar_select %p146, %s147, %s148
    %p152 = pneg %p146
    %p153 = scmp.eq.s32.totalorder %s21, 3
    %p154 = por %p152, %p153
    %p155 = scmp.ne.s32.totalorder %s147, %s150
    %p156 = scmp.eq.s32.totalorder %s21, 0
    %p157 = por %p155, %p156
    %p158 = scmp.ne.s32.totalorder %s147, %s150
    %p159 = scmp.eq.s32.totalorder %s26, 3
    %p160 = por %p158, %p159
    %p161 = scmp.ne.s32.totalorder %s150, %s151
    %p162 = scmp.eq.s32.totalorder %s26, 0
    %p163 = por %p161, %p162
    %p164 = scmp.ne.s32.totalorder %s150, %s151
    %p165 = scmp.eq.s32.totalorder %s27, 3
    %p166 = por %p164, %p165
    %p168 = scmp.ne.s32.totalorder %s151, %s167
    %p169 = scmp.eq.s32.totalorder %s27, 0
    %p170 = por %p168, %p169
    %s171 = ssub.s32 %s29, %s36
    %p172 = scmp.eq.s32.totalorder %s171, 0
    %s174 = sadd.s32 %s173, 1
    %s175 = scalar_select %p172, %s173, %s174
    %p178 = pneg %p172
    %p179 = scmp.eq.s32.totalorder %s21, 3
    %p180 = por %p178, %p179
    %p181 = scmp.ne.s32.totalorder %s173, %s176
    %p182 = scmp.eq.s32.totalorder %s21, 0
    %p183 = por %p181, %p182
    %p184 = scmp.ne.s32.totalorder %s173, %s176
    %p185 = scmp.eq.s32.totalorder %s26, 3
    %p186 = por %p184, %p185
    %p187 = scmp.ne.s32.totalorder %s176, %s177
    %p188 = scmp.eq.s32.totalorder %s26, 0
    %p189 = por %p187, %p188
    %p190 = scmp.ne.s32.totalorder %s176, %s177
    %p191 = scmp.eq.s32.totalorder %s27, 3
    %p192 = por %p190, %p191
    %p194 = scmp.ne.s32.totalorder %s177, %s193
    %p195 = scmp.eq.s32.totalorder %s27, 0
    %p196 = por %p194, %p195
    %s197 = ssub.s32 %s29, %s36
    %p198 = scmp.eq.s32.totalorder %s197, 0
    %s200 = sadd.s32 %s199, 1
    %s201 = scalar_select %p198, %s199, %s200
    %p204 = pneg %p198
    %p205 = scmp.eq.s32.totalorder %s21, 3
    %p206 = por %p204, %p205
    %p207 = scmp.ne.s32.totalorder %s199, %s202
    %p208 = scmp.eq.s32.totalorder %s21, 0
    %p209 = por %p207, %p208
    %p210 = scmp.ne.s32.totalorder %s199, %s202
    %p211 = scmp.eq.s32.totalorder %s26, 3
    %p212 = por %p210, %p211
    %p213 = scmp.ne.s32.totalorder %s202, %s203
    %p214 = scmp.eq.s32.totalorder %s26, 0
    %p215 = por %p213, %p214
    %p216 = scmp.ne.s32.totalorder %s202, %s203
    %p217 = scmp.eq.s32.totalorder %s27, 3
    %p218 = por %p216, %p217
    %p220 = scmp.ne.s32.totalorder %s203, %s219
    %p221 = scmp.eq.s32.totalorder %s27, 0
    %p222 = por %p220, %p221
    %s223 = ssub.s32 %s29, %s36
    %p224 = scmp.eq.s32.totalorder %s223, 0
    %s226 = sadd.s32 %s225, 1
    %s227 = scalar_select %p224, %s225, %s226
    %p230 = pneg %p224
    %p231 = scmp.eq.s32.totalorder %s21, 3
    %p232 = por %p230, %p231
    %p233 = scmp.ne.s32.totalorder %s225, %s228
    %p234 = scmp.eq.s32.totalorder %s21, 0
    %p235 = por %p233, %p234
    %p236 = scmp.ne.s32.totalorder %s225, %s228
    %p237 = scmp.eq.s32.totalorder %s26, 3
    %p238 = por %p236, %p237
    %p239 = scmp.ne.s32.totalorder %s228, %s229
    %p240 = scmp.eq.s32.totalorder %s26, 0
    %p241 = por %p239, %p240
    %p242 = scmp.ne.s32.totalorder %s228, %s229
    %p243 = scmp.eq.s32.totalorder %s27, 3
    %p244 = por %p242, %p243
    %p246 = scmp.ne.s32.totalorder %s229, %s245
    %p247 = scmp.eq.s32.totalorder %s27, 0
    %p248 = por %p246, %p247
    %s249 = ssub.s32 %s29, %s36
    %p250 = scmp.eq.s32.totalorder %s249, 0
    %s252 = sadd.s32 %s251, 1
    %s253 = scalar_select %p250, %s251, %s252
    %p256 = pneg %p250
    %p257 = scmp.eq.s32.totalorder %s21, 3
    %p258 = por %p256, %p257
    %p259 = scmp.ne.s32.totalorder %s251, %s254
    %p260 = scmp.eq.s32.totalorder %s21, 0
    %p261 = por %p259, %p260
    %p262 = scmp.ne.s32.totalorder %s251, %s254
    %p263 = scmp.eq.s32.totalorder %s26, 3
    %p264 = por %p262, %p263
    %p265 = scmp.ne.s32.totalorder %s254, %s255
    %p266 = scmp.eq.s32.totalorder %s26, 0
    %p267 = por %p265, %p266
    %p268 = scmp.ne.s32.totalorder %s254, %s255
    %p269 = scmp.eq.s32.totalorder %s27, 3
    %p270 = por %p268, %p269
    %p272 = scmp.ne.s32.totalorder %s255, %s271
    %p273 = scmp.eq.s32.totalorder %s27, 0
    %p274 = por %p272, %p273
    %s275 = ssub.s32 %s29, %s36
    %p276 = scmp.eq.s32.totalorder %s275, 0
    %s278 = sadd.s32 %s277, 1
    %s279 = scalar_select %p276, %s277, %s278
    %p282 = pneg %p276
    %p283 = scmp.eq.s32.totalorder %s21, 3
    %p284 = por %p282, %p283
    %p285 = scmp.ne.s32.totalorder %s277, %s280
    %p286 = scmp.eq.s32.totalorder %s21, 0
    %p287 = por %p285, %p286
    %p288 = scmp.ne.s32.totalorder %s277, %s280
    %p289 = scmp.eq.s32.totalorder %s26, 3
    %p290 = por %p288, %p289
    %p291 = scmp.ne.s32.totalorder %s280, %s281
    %p292 = scmp.eq.s32.totalorder %s26, 0
    %p293 = por %p291, %p292
    %p294 = scmp.ne.s32.totalorder %s280, %s281
    %p295 = scmp.eq.s32.totalorder %s27, 3
    %p296 = por %p294, %p295
    %p298 = scmp.ne.s32.totalorder %s281, %s297
    %p299 = scmp.eq.s32.totalorder %s27, 0
    %p300 = por %p298, %p299
    %s301 = ssub.s32 %s29, %s36
    %p302 = scmp.eq.s32.totalorder %s301, 0
    %s304 = sadd.s32 %s303, 1
    %s305 = scalar_select %p302, %s303, %s304
    %p308 = pneg %p302
    %p309 = scmp.eq.s32.totalorder %s21, 3
    %p310 = por %p308, %p309
    %p311 = scmp.ne.s32.totalorder %s303, %s306
    %p312 = scmp.eq.s32.totalorder %s21, 0
    %p313 = por %p311, %p312
    %p314 = scmp.ne.s32.totalorder %s303, %s306
    %p315 = scmp.eq.s32.totalorder %s26, 3
    %p316 = por %p314, %p315
    %p317 = scmp.ne.s32.totalorder %s306, %s307
    %p318 = scmp.eq.s32.totalorder %s26, 0
    %p319 = por %p317, %p318
    %p320 = scmp.ne.s32.totalorder %s306, %s307
    %p321 = scmp.eq.s32.totalorder %s27, 3
    %p322 = por %p320, %p321
    %p324 = scmp.ne.s32.totalorder %s307, %s323
    %p325 = scmp.eq.s32.totalorder %s27, 0
    %p326 = por %p324, %p325
    %s327 = ssub.s32 %s29, %s36
    %p328 = scmp.eq.s32.totalorder %s327, 0
    %s330 = sadd.s32 %s329, 1
    %s331 = scalar_select %p328, %s329, %s330
    %p334 = pneg %p328
    %p335 = scmp.eq.s32.totalorder %s21, 3
    %p336 = por %p334, %p335
    %p337 = scmp.ne.s32.totalorder %s329, %s332
    %p338 = scmp.eq.s32.totalorder %s21, 0
    %p339 = por %p337, %p338
    %p340 = scmp.ne.s32.totalorder %s329, %s332
    %p341 = scmp.eq.s32.totalorder %s26, 3
    %p342 = por %p340, %p341
    %p343 = scmp.ne.s32.totalorder %s332, %s333
    %p344 = scmp.eq.s32.totalorder %s26, 0
    %p345 = por %p343, %p344
    %p346 = scmp.ne.s32.totalorder %s332, %s333
    %p347 = scmp.eq.s32.totalorder %s27, 3
    %p348 = por %p346, %p347
    %p350 = scmp.ne.s32.totalorder %s333, %s349
    %p351 = scmp.eq.s32.totalorder %s27, 0
    %p352 = por %p350, %p351
    %s353 = ssub.s32 %s29, %s36
    %p354 = scmp.eq.s32.totalorder %s353, 0
    %s356 = sadd.s32 %s355, 1
    %s357 = scalar_select %p354, %s355, %s356
    %p360 = pneg %p354
    %p361 = scmp.eq.s32.totalorder %s21, 3
    %p362 = por %p360, %p361
    %p363 = scmp.ne.s32.totalorder %s355, %s358
    %p364 = scmp.eq.s32.totalorder %s21, 0
    %p365 = por %p363, %p364
    %p366 = scmp.ne.s32.totalorder %s355, %s358
    %p367 = scmp.eq.s32.totalorder %s26, 3
    %p368 = por %p366, %p367
    %p369 = scmp.ne.s32.totalorder %s358, %s359
    %p370 = scmp.eq.s32.totalorder %s26, 0
    %p371 = por %p369, %p370
    %p372 = scmp.ne.s32.totalorder %s358, %s359
    %p373 = scmp.eq.s32.totalorder %s27, 3
    %p374 = por %p372, %p373
    %p376 = scmp.ne.s32.totalorder %s359, %s375
    %p377 = scmp.eq.s32.totalorder %s27, 0
    %p378 = por %p376, %p377
    %s379 = ssub.s32 %s28, %s40
    %p380 = scmp.eq.s32.totalorder %s379, 0
    %s382 = sadd.s32 %s381, 1
    %s383 = scalar_select %p380, %s381, %s382
    %p386 = pneg %p380
    %p387 = scmp.eq.s32.totalorder %s21, 3
    %p388 = por %p386, %p387
    %p389 = scmp.ne.s32.totalorder %s381, %s384
    %p390 = scmp.eq.s32.totalorder %s21, 0
    %p391 = por %p389, %p390
    %p392 = scmp.ne.s32.totalorder %s381, %s384
    %p393 = scmp.eq.s32.totalorder %s26, 3
    %p394 = por %p392, %p393
    %p395 = scmp.ne.s32.totalorder %s384, %s385
    %p396 = scmp.eq.s32.totalorder %s26, 0
    %p397 = por %p395, %p396
    %p398 = scmp.ne.s32.totalorder %s384, %s385
    %p399 = scmp.eq.s32.totalorder %s27, 3
    %p400 = por %p398, %p399
    %p402 = scmp.ne.s32.totalorder %s385, %s401
    %p403 = scmp.eq.s32.totalorder %s27, 0
    %p404 = por %p402, %p403
    %s405 = ssub.s32 %s29, %s36
    %s406 = ssub.s32 %s28, %s40
    %s407 = sor.u32 %s405, %s406
    %p408 = scmp.eq.s32.totalorder %s407, 0
    %s410 = sadd.s32 %s409, 1
    %s411 = scalar_select %p408, %s409, %s410
    %p414 = pneg %p408
    %p415 = scmp.eq.s32.totalorder %s21, 3
    %p416 = por %p414, %p415
    %p417 = scmp.ne.s32.totalorder %s409, %s412
    %p418 = scmp.eq.s32.totalorder %s21, 0
    %p419 = por %p417, %p418
    %p420 = scmp.ne.s32.totalorder %s409, %s412
    %p421 = scmp.eq.s32.totalorder %s26, 3
    %p422 = por %p420, %p421
    %p423 = scmp.ne.s32.totalorder %s412, %s413
    %p424 = scmp.eq.s32.totalorder %s26, 0
    %p425 = por %p423, %p424
    %p426 = scmp.ne.s32.totalorder %s412, %s413
    %p427 = scmp.eq.s32.totalorder %s27, 3
    %p428 = por %p426, %p427
    %p430 = scmp.ne.s32.totalorder %s413, %s429
    %p431 = scmp.eq.s32.totalorder %s27, 0
    %p432 = por %p430, %p431
    %p433 = scmp.le.s32.totalorder 1, %s21
    %p434 = scmp.lt.s32.totalorder %s21, 5
    %p435 = pnand %p433, %p434
    %p436 = pneg %p435
    // Predicated region
    $region9: #{vit_rollout_forward.4} parent=5 // pred_check
      _
    $region10: #{vit_rollout_forward.4} parent=5 // pred_check_branch
      %438 = sbr.rel (%p435) target = $region12
    $region11: #{vit_rollout_forward.4} parent=5 // pred_region
      %s439 = ssub.s32 %s21, 1
    $region12: #{vit_rollout_forward.4} parent=5 // pred_fallthru
      _
    %p440 = scmp.lt.s32.totalorder %s21, 4
    // Predicated region
    $region13: #{vit_rollout_forward.4} parent=5 // pred_check
      %p441 = pneg %p440
    $region14: #{vit_rollout_forward.4} parent=5 // pred_check_branch
      %443 = sbr.rel (%p441) target = $region16
    $region15: #{vit_rollout_forward.4} parent=5 // pred_region
      // Predicated region
      $region17: #{vit_rollout_forward.4} parent=15 // pred_check
        %p444 = pneg %p53
      $region18: #{vit_rollout_forward.4} parent=15 // pred_check_branch
        %446 = sbr.rel (%p444) target = $region20
      $region19: #{vit_rollout_forward.4} parent=15 // pred_region
        %p447 = scmp.lt.s32.totalorder %s28, 1
        %s448 = scalar_select %p447, %s28, 1
        %s449 = smul.addr %s448, 16
        %s450 = smul.addr %s449, 8
        %s451 = scalar_lea.vmem %s0, %s450
      $region20: #{vit_rollout_forward.4} parent=15 // pred_fallthru
        _
      // Predicated region
      $region21: #{vit_rollout_forward.4} parent=15 // pred_check
        %p452 = pneg %p79
      $region22: #{vit_rollout_forward.4} parent=15 // pred_check_branch
        %454 = sbr.rel (%p452) target = $region24
      $region23: #{vit_rollout_forward.4} parent=15 // pred_region
        %p455 = scmp.lt.s32.totalorder %s29, 1
        %s456 = scalar_select %p455, %s29, 1
        %s457 = scalar_lea.vmem %s1, %s456
      $region24: #{vit_rollout_forward.4} parent=15 // pred_fallthru
        _
      // Predicated region
      $region25: #{vit_rollout_forward.4} parent=15 // pred_check
        %p458 = pneg %p105
      $region26: #{vit_rollout_forward.4} parent=15 // pred_check_branch
        %460 = sbr.rel (%p458) target = $region28
      $region27: #{vit_rollout_forward.4} parent=15 // pred_region
        %p461 = scmp.lt.s32.totalorder %s29, 1
        %s462 = scalar_select %p461, %s29, 1
        %s463 = scalar_lea.vmem %s2, %s462
      $region28: #{vit_rollout_forward.4} parent=15 // pred_fallthru
        _
      // Predicated region
      $region29: #{vit_rollout_forward.4} parent=15 // pred_check
        %p464 = pneg %p131
      $region30: #{vit_rollout_forward.4} parent=15 // pred_check_branch
        %466 = sbr.rel (%p464) target = $region32
      $region31: #{vit_rollout_forward.4} parent=15 // pred_region
        %p467 = scmp.lt.s32.totalorder %s29, 1
        %s468 = scalar_select %p467, %s29, 1
        %s469 = smul.addr %s468, 4
        %s470 = smul.addr %s469, 4
        %s471 = scalar_lea.vmem %s3, %s470
      $region32: #{vit_rollout_forward.4} parent=15 // pred_fallthru
        _
      // Predicated region
      $region33: #{vit_rollout_forward.4} parent=15 // pred_check
        %p472 = pneg %p157
      $region34: #{vit_rollout_forward.4} parent=15 // pred_check_branch
        %474 = sbr.rel (%p472) target = $region36
      $region35: #{vit_rollout_forward.4} parent=15 // pred_region
        %p475 = scmp.lt.s32.totalorder %s29, 1
        %s476 = scalar_select %p475, %s29, 1
        %s477 = scalar_lea.vmem %s4, %s476
      $region36: #{vit_rollout_forward.4} parent=15 // pred_fallthru
        _
      // Predicated region
      $region37: #{vit_rollout_forward.4} parent=15 // pred_check
        %p478 = pneg %p183
      $region38: #{vit_rollout_forward.4} parent=15 // pred_check_branch
        %480 = sbr.rel (%p478) target = $region40
      $region39: #{vit_rollout_forward.4} parent=15 // pred_region
        %p481 = scmp.lt.s32.totalorder %s29, 1
        %s482 = scalar_select %p481, %s29, 1
        %s483 = smul.addr %s482, 4
        %s484 = smul.addr %s483, 4
        %s485 = scalar_lea.vmem %s5, %s484
      $region40: #{vit_rollout_forward.4} parent=15 // pred_fallthru
        _
      // Predicated region
      $region41: #{vit_rollout_forward.4} parent=15 // pred_check
        %p486 = pneg %p209
      $region42: #{vit_rollout_forward.4} parent=15 // pred_check_branch
        %488 = sbr.rel (%p486) target = $region44
      $region43: #{vit_rollout_forward.4} parent=15 // pred_region
        %p489 = scmp.lt.s32.totalorder %s29, 1
        %s490 = scalar_select %p489, %s29, 1
        %s491 = scalar_lea.vmem %s6, %s490
      $region44: #{vit_rollout_forward.4} parent=15 // pred_fallthru
        _
      // Predicated region
      $region45: #{vit_rollout_forward.4} parent=15 // pred_check
        %p492 = pneg %p235
      $region46: #{vit_rollout_forward.4} parent=15 // pred_check_branch
        %494 = sbr.rel (%p492) target = $region48
      $region47: #{vit_rollout_forward.4} parent=15 // pred_region
        %p495 = scmp.lt.s32.totalorder %s29, 1
        %s496 = scalar_select %p495, %s29, 1
        %s497 = scalar_lea.vmem %s7, %s496
      $region48: #{vit_rollout_forward.4} parent=15 // pred_fallthru
        _
      // Predicated region
      $region49: #{vit_rollout_forward.4} parent=15 // pred_check
        %p498 = pneg %p261
      $region50: #{vit_rollout_forward.4} parent=15 // pred_check_branch
        %500 = sbr.rel (%p498) target = $region52
      $region51: #{vit_rollout_forward.4} parent=15 // pred_region
        %p501 = scmp.lt.s32.totalorder %s29, 1
        %s502 = scalar_select %p501, %s29, 1
        %s503 = scalar_lea.vmem %s8, %s502
      $region52: #{vit_rollout_forward.4} parent=15 // pred_fallthru
        _
      // Predicated region
      $region53: #{vit_rollout_forward.4} parent=15 // pred_check
        %p504 = pneg %p287
      $region54: #{vit_rollout_forward.4} parent=15 // pred_check_branch
        %506 = sbr.rel (%p504) target = $region56
      $region55: #{vit_rollout_forward.4} parent=15 // pred_region
        %p507 = scmp.lt.s32.totalorder %s29, 1
        %s508 = scalar_select %p507, %s29, 1
        %s509 = smul.addr %s508, 4
        %s510 = smul.addr %s509, 4
        %s511 = scalar_lea.vmem %s9, %s510
      $region56: #{vit_rollout_forward.4} parent=15 // pred_fallthru
        _
      // Predicated region
      $region57: #{vit_rollout_forward.4} parent=15 // pred_check
        %p512 = pneg %p313
      $region58: #{vit_rollout_forward.4} parent=15 // pred_check_branch
        %514 = sbr.rel (%p512) target = $region60
      $region59: #{vit_rollout_forward.4} parent=15 // pred_region
        %p515 = scmp.lt.s32.totalorder %s29, 1
        %s516 = scalar_select %p515, %s29, 1
        %s517 = scalar_lea.vmem %s10, %s516
      $region60: #{vit_rollout_forward.4} parent=15 // pred_fallthru
        _
      // Predicated region
      $region61: #{vit_rollout_forward.4} parent=15 // pred_check
        %p518 = pneg %p339
      $region62: #{vit_rollout_forward.4} parent=15 // pred_check_branch
        %520 = sbr.rel (%p518) target = $region64
      $region63: #{vit_rollout_forward.4} parent=15 // pred_region
        %p521 = scmp.lt.s32.totalorder %s29, 1
        %s522 = scalar_select %p521, %s29, 1
        %s523 = smul.addr %s522, 8
        %s524 = smul.addr %s523, 4
        %s525 = scalar_lea.vmem %s11, %s524
      $region64: #{vit_rollout_forward.4} parent=15 // pred_fallthru
        _
      // Predicated region
      $region65: #{vit_rollout_forward.4} parent=15 // pred_check
        %p526 = pneg %p365
      $region66: #{vit_rollout_forward.4} parent=15 // pred_check_branch
        %528 = sbr.rel (%p526) target = $region68
      $region67: #{vit_rollout_forward.4} parent=15 // pred_region
        %p529 = scmp.lt.s32.totalorder %s29, 1
        %s530 = scalar_select %p529, %s29, 1
        %s531 = scalar_lea.vmem %s12, %s530
      $region68: #{vit_rollout_forward.4} parent=15 // pred_fallthru
        _
    $region16: #{vit_rollout_forward.4} parent=5 // pred_fallthru
      _
    %p532 = scmp.le.s32.totalorder 1, %s21
    %p533 = scmp.lt.s32.totalorder %s21, 5
    %p534 = pnand %p532, %p533
    %p535 = pneg %p534
    // Predicated region
    $region69: #{vit_rollout_forward.4} parent=5 // pred_check
      _
    $region70: #{vit_rollout_forward.4} parent=5 // pred_check_branch
      %537 = sbr.rel (%p534) target = $region72
    $region71: #{vit_rollout_forward.4} parent=5 // pred_region
      %s538 = ssub.s32 %s21, 1
      %p539 = scmp.lt.s32.totalorder %s30, 1
      %s540 = scalar_select %p539, %s30, 1
      %s541 = smul.addr %s540, 16
      %s542 = smul.addr %s541, 8
      %s543 = scalar_lea.vmem %s0, %s542
      %p544 = pneg %p59
      %p545 = pneg %p56
      %p546 = scmp.lt.s32.totalorder %s31, 1
      %s547 = scalar_select %p546, %s31, 1
      %s548 = scalar_lea.vmem %s1, %s547
      %p549 = pneg %p85
      %p550 = pneg %p82
      %p551 = scmp.lt.s32.totalorder %s31, 1
      %s552 = scalar_select %p551, %s31, 1
      %s553 = scalar_lea.vmem %s2, %s552
      %p554 = pneg %p111
      %p555 = pneg %p108
      %p556 = scmp.lt.s32.totalorder %s31, 1
      %s557 = scalar_select %p556, %s31, 1
      %s558 = smul.addr %s557, 4
      %s559 = smul.addr %s558, 4
      %s560 = scalar_lea.vmem %s3, %s559
      %p561 = pneg %p137
      %p562 = pneg %p134
      %p563 = scmp.lt.s32.totalorder %s31, 1
      %s564 = scalar_select %p563, %s31, 1
      %s565 = scalar_lea.vmem %s4, %s564
      %p566 = pneg %p163
      %p567 = pneg %p160
      %p568 = scmp.lt.s32.totalorder %s31, 1
      %s569 = scalar_select %p568, %s31, 1
      %s570 = smul.addr %s569, 4
      %s571 = smul.addr %s570, 4
      %s572 = scalar_lea.vmem %s5, %s571
      %p573 = pneg %p189
      %p574 = pneg %p186
      %p575 = scmp.lt.s32.totalorder %s31, 1
      %s576 = scalar_select %p575, %s31, 1
      %s577 = scalar_lea.vmem %s6, %s576
      %p578 = pneg %p215
      %p579 = pneg %p212
      %p580 = scmp.lt.s32.totalorder %s31, 1
      %s581 = scalar_select %p580, %s31, 1
      %s582 = scalar_lea.vmem %s7, %s581
      %p583 = pneg %p241
      %p584 = pneg %p238
      %p585 = scmp.lt.s32.totalorder %s31, 1
      %s586 = scalar_select %p585, %s31, 1
      %s587 = scalar_lea.vmem %s8, %s586
      %p588 = pneg %p267
      %p589 = pneg %p264
      %p590 = scmp.lt.s32.totalorder %s31, 1
      %s591 = scalar_select %p590, %s31, 1
      %s592 = smul.addr %s591, 4
      %s593 = smul.addr %s592, 4
      %s594 = scalar_lea.vmem %s9, %s593
      %p595 = pneg %p293
      %p596 = pneg %p290
      %p597 = scmp.lt.s32.totalorder %s31, 1
      %s598 = scalar_select %p597, %s31, 1
      %s599 = scalar_lea.vmem %s10, %s598
      %p600 = pneg %p319
      %p601 = pneg %p316
      %p602 = scmp.lt.s32.totalorder %s31, 1
      %s603 = scalar_select %p602, %s31, 1
      %s604 = smul.addr %s603, 8
      %s605 = smul.addr %s604, 4
      %s606 = scalar_lea.vmem %s11, %s605
      %p607 = pneg %p345
      %p608 = pneg %p342
      %p609 = scmp.lt.s32.totalorder %s31, 1
      %s610 = scalar_select %p609, %s31, 1
      %s611 = scalar_lea.vmem %s12, %s610
      %p612 = pneg %p371
      %p613 = pneg %p368
      %p614 = pneg %p397
      %p615 = pneg %p394
      %p616 = scmp.lt.s32.totalorder %s30, 1
      %s617 = scalar_select %p616, %s30, 1
      %s618 = smul.addr %s617, 16
      %s619 = smul.addr %s618, 8
      %s620 = scalar_lea.vmem %s13, %s619
      %p621 = pneg %p425
      %p622 = pneg %p422
      %p623 = scmp.lt.s32.totalorder %s31, 1
      %s624 = scalar_select %p623, %s31, 1
      %p625 = scmp.lt.s32.totalorder %s30, 1
      %s626 = scalar_select %p625, %s30, 1
      %s627 = smul.addr %s626, 16
      %s628 = smul.addr %s624, 32
      %s629 = sadd.s32 %s627, %s628
      %s630 = smul.addr %s629, 4
      %s631 = scalar_lea.vmem %s14, %s630
      %p632 = scmp.lt.s32.totalorder %s30, 1
      %s633 = scalar_select %p632, %s30, 1
      %s634 = smul.addr %s633, 16
      %s635 = smul.addr %s634, 8
      %s636 = scalar_lea.vmem %s0, %s635
      %p637 = scmp.lt.s32.totalorder %s31, 1
      %s638 = scalar_select %p637, %s31, 1
      %s639 = scalar_lea.vmem %s1, %s638
      %p640 = scmp.lt.s32.totalorder %s31, 1
      %s641 = scalar_select %p640, %s31, 1
      %s642 = scalar_lea.vmem %s2, %s641
      %p643 = scmp.lt.s32.totalorder %s31, 1
      %s644 = scalar_select %p643, %s31, 1
      %s645 = smul.addr %s644, 4
      %s646 = smul.addr %s645, 4
      %s647 = scalar_lea.vmem %s3, %s646
      %p648 = scmp.lt.s32.totalorder %s31, 1
      %s649 = scalar_select %p648, %s31, 1
      %s650 = scalar_lea.vmem %s4, %s649
      %p651 = scmp.lt.s32.totalorder %s31, 1
      %s652 = scalar_select %p651, %s31, 1
      %s653 = smul.addr %s652, 4
      %s654 = smul.addr %s653, 4
      %s655 = scalar_lea.vmem %s5, %s654
      %p656 = scmp.lt.s32.totalorder %s31, 1
      %s657 = scalar_select %p656, %s31, 1
      %s658 = scalar_lea.vmem %s6, %s657
      %p659 = scmp.lt.s32.totalorder %s31, 1
      %s660 = scalar_select %p659, %s31, 1
      %s661 = scalar_lea.vmem %s7, %s660
      %p662 = scmp.lt.s32.totalorder %s31, 1
      %s663 = scalar_select %p662, %s31, 1
      %s664 = scalar_lea.vmem %s8, %s663
      %p665 = scmp.lt.s32.totalorder %s31, 1
      %s666 = scalar_select %p665, %s31, 1
      %s667 = smul.addr %s666, 4
      %s668 = smul.addr %s667, 4
      %s669 = scalar_lea.vmem %s9, %s668
      %p670 = scmp.lt.s32.totalorder %s31, 1
      %s671 = scalar_select %p670, %s31, 1
      %s672 = scalar_lea.vmem %s10, %s671
      %p673 = scmp.lt.s32.totalorder %s31, 1
      %s674 = scalar_select %p673, %s31, 1
      %s675 = smul.addr %s674, 8
      %s676 = smul.addr %s675, 4
      %s677 = scalar_lea.vmem %s11, %s676
      %p678 = scmp.lt.s32.totalorder %s31, 1
      %s679 = scalar_select %p678, %s31, 1
      %s680 = scalar_lea.vmem %s12, %s679
      %p681 = scmp.lt.s32.totalorder %s30, 1
      %s682 = scalar_select %p681, %s30, 1
      %s683 = smul.addr %s682, 16
      %s684 = smul.addr %s683, 8
      %s685 = scalar_lea.vmem %s13, %s684
      %p686 = scmp.lt.s32.totalorder %s31, 1
      %s687 = scalar_select %p686, %s31, 1
      %p688 = scmp.lt.s32.totalorder %s30, 1
      %s689 = scalar_select %p688, %s30, 1
      %s690 = smul.addr %s689, 16
      %s691 = smul.addr %s687, 32
      %s692 = sadd.s32 %s690, %s691
      %s693 = smul.addr %s692, 4
      %s694 = scalar_lea.vmem %s14, %s693
      %p696 = scmp.eq.s32.totalorder %s31, 0
      // Predicated region
      $region73: #{vit_rollout_forward.4} parent=71 // pred_check
        %p697 = pneg %p696
      $region74: #{vit_rollout_forward.4} parent=71 // pred_check_branch
        %699 = sbr.rel (%p697) target = $region76
      $region75: #{vit_rollout_forward.4} parent=71 // pred_region
        %v700 = vld [vmem:[%s636] sm:$0xff]
        %v701 = vld [vmem:[%s636 + $0x8] sm:$0xff]
        %v702 = vld [vmem:[%s636 + $0x10] sm:$0xff]
        %v703 = vld [vmem:[%s636 + $0x18] sm:$0xff]
        %v704 = vld [vmem:[%s636 + $0x20] sm:$0xff]
        %v705 = vld [vmem:[%s636 + $0x28] sm:$0xff]
        %v706 = vld [vmem:[%s636 + $0x30] sm:$0xff]
        %v707 = vld [vmem:[%s636 + $0x38] sm:$0xff]
        %v708 = vld [vmem:[%s636 + $0x40] sm:$0xff]
        %v709 = vld [vmem:[%s636 + $0x48] sm:$0xff]
        %v710 = vld [vmem:[%s636 + $0x50] sm:$0xff]
        %v711 = vld [vmem:[%s636 + $0x58] sm:$0xff]
        %v712 = vld [vmem:[%s636 + $0x60] sm:$0xff]
        %v713 = vld [vmem:[%s636 + $0x68] sm:$0xff]
        %v714 = vld [vmem:[%s636 + $0x70] sm:$0xff]
        %v715 = vld [vmem:[%s636 + $0x78] sm:$0xff]
        %vm716 = vcmask 261120
        %717 = vst.msk [vmem:[%s685] sm:$0xff] %vm716, %v700
        %718 = vst.msk [vmem:[%s685 + $0x8] sm:$0xff] %vm716, %v701
        %719 = vst.msk [vmem:[%s685 + $0x10] sm:$0xff] %vm716, %v702
        %720 = vst.msk [vmem:[%s685 + $0x18] sm:$0xff] %vm716, %v703
        %721 = vst.msk [vmem:[%s685 + $0x20] sm:$0xff] %vm716, %v704
        %722 = vst.msk [vmem:[%s685 + $0x28] sm:$0xff] %vm716, %v705
        %723 = vst.msk [vmem:[%s685 + $0x30] sm:$0xff] %vm716, %v706
        %724 = vst.msk [vmem:[%s685 + $0x38] sm:$0xff] %vm716, %v707
        %725 = vst.msk [vmem:[%s685 + $0x40] sm:$0xff] %vm716, %v708
        %726 = vst.msk [vmem:[%s685 + $0x48] sm:$0xff] %vm716, %v709
        %727 = vst.msk [vmem:[%s685 + $0x50] sm:$0xff] %vm716, %v710
        %728 = vst.msk [vmem:[%s685 + $0x58] sm:$0xff] %vm716, %v711
        %729 = vst.msk [vmem:[%s685 + $0x60] sm:$0xff] %vm716, %v712
        %730 = vst.msk [vmem:[%s685 + $0x68] sm:$0xff] %vm716, %v713
        %731 = vst.msk [vmem:[%s685 + $0x70] sm:$0xff] %vm716, %v714
        %732 = vst.msk [vmem:[%s685 + $0x78] sm:$0xff] %vm716, %v715
      $region76: #{vit_rollout_forward.4} parent=71 // pred_fallthru
        _
      %v733 = vld [vmem:[%s685] sm:$0xff]
      %v734 = vld [vmem:[%s685 + $0x8] sm:$0xff]
      %v735 = vld [vmem:[%s685 + $0x10] sm:$0xff]
      %v736 = vld [vmem:[%s685 + $0x18] sm:$0xff]
      %v737 = vld [vmem:[%s685 + $0x20] sm:$0xff]
      %v738 = vld [vmem:[%s685 + $0x28] sm:$0xff]
      %v739 = vld [vmem:[%s685 + $0x30] sm:$0xff]
      %v740 = vld [vmem:[%s685 + $0x38] sm:$0xff]
      %v741 = vld [vmem:[%s685 + $0x40] sm:$0xff]
      %v742 = vld [vmem:[%s685 + $0x48] sm:$0xff]
      %v743 = vld [vmem:[%s685 + $0x50] sm:$0xff]
      %v744 = vld [vmem:[%s685 + $0x58] sm:$0xff]
      %v745 = vld [vmem:[%s685 + $0x60] sm:$0xff]
      %v746 = vld [vmem:[%s685 + $0x68] sm:$0xff]
      %v747 = vld [vmem:[%s685 + $0x70] sm:$0xff]
      %v748 = vld [vmem:[%s685 + $0x78] sm:$0xff]
      %v749 = vlaneseq
      %v750 = vand.u32 %v749, 127
      %vm751 = vcmp.lt.s32.totalorder %v750, 17
      %v752 = vsel %vm751, 0.0, -1e+30
      %v753 = vld [vmem:[%s639] sm:$0x1]
      %v754 = vld [vmem:[%s642] sm:$0x1]
      %vm755 = vcmask 261120
      %v756 = vsel %vm755, %v733, 0.0
      %757 = vadd.xlane.f32.xlu0 %v756
      %v758 = vpop.xlane.xlu0 %757
      %v759 = vsel %vm755, %v734, 0.0
      %760 = vadd.xlane.f32.xlu0 %v759
      %v761 = vpop.xlane.xlu0 %760
      %v762 = vsel %vm755, %v735, 0.0
      %763 = vadd.xlane.f32.xlu0 %v762
      %v764 = vpop.xlane.xlu0 %763
      %v765 = vsel %vm755, %v736, 0.0
      %766 = vadd.xlane.f32.xlu0 %v765
      %v767 = vpop.xlane.xlu0 %766
      %v768 = vsel %vm755, %v737, 0.0
      %769 = vadd.xlane.f32.xlu0 %v768
      %v770 = vpop.xlane.xlu0 %769
      %v771 = vsel %vm755, %v738, 0.0
      %772 = vadd.xlane.f32.xlu0 %v771
      %v773 = vpop.xlane.xlu0 %772
      %v774 = vsel %vm755, %v739, 0.0
      %775 = vadd.xlane.f32.xlu0 %v774
      %v776 = vpop.xlane.xlu0 %775
      %v777 = vsel %vm755, %v740, 0.0
      %778 = vadd.xlane.f32.xlu0 %v777
      %v779 = vpop.xlane.xlu0 %778
      %v780 = vsel %vm755, %v741, 0.0
      %781 = vadd.xlane.f32.xlu0 %v780
      %v782 = vpop.xlane.xlu0 %781
      %v783 = vsel %vm755, %v742, 0.0
      %784 = vadd.xlane.f32.xlu0 %v783
      %v785 = vpop.xlane.xlu0 %784
      %v786 = vsel %vm755, %v743, 0.0
      %787 = vadd.xlane.f32.xlu0 %v786
      %v788 = vpop.xlane.xlu0 %787
      %v789 = vsel %vm755, %v744, 0.0
      %790 = vadd.xlane.f32.xlu0 %v789
      %v791 = vpop.xlane.xlu0 %790
      %v792 = vsel %vm755, %v745, 0.0
      %793 = vadd.xlane.f32.xlu0 %v792
      %v794 = vpop.xlane.xlu0 %793
      %v795 = vsel %vm755, %v746, 0.0
      %796 = vadd.xlane.f32.xlu0 %v795
      %v797 = vpop.xlane.xlu0 %796
      %v798 = vsel %vm755, %v747, 0.0
      %799 = vadd.xlane.f32.xlu0 %v798
      %v800 = vpop.xlane.xlu0 %799
      %v801 = vsel %vm755, %v748, 0.0
      %802 = vadd.xlane.f32.xlu0 %v801
      %v803 = vpop.xlane.xlu0 %802
      %v804 = vrcp.pop 32.0
      %v805 = vmul.f32 %v758, %v804
      %v806 = vmul.f32 %v761, %v804
      %v807 = vmul.f32 %v764, %v804
      %v808 = vmul.f32 %v767, %v804
      %v809 = vmul.f32 %v770, %v804
      %v810 = vmul.f32 %v773, %v804
      %v811 = vmul.f32 %v776, %v804
      %v812 = vmul.f32 %v779, %v804
      %v813 = vmul.f32 %v782, %v804
      %v814 = vmul.f32 %v785, %v804
      %v815 = vmul.f32 %v788, %v804
      %v816 = vmul.f32 %v791, %v804
      %v817 = vmul.f32 %v794, %v804
      %v818 = vmul.f32 %v797, %v804
      %v819 = vmul.f32 %v800, %v804
      %v820 = vmul.f32 %v803, %v804
      %v821 = vsub.f32 %v733, %v805
      %v822 = vsub.f32 %v734, %v806
      %v823 = vsub.f32 %v735, %v807
      %v824 = vsub.f32 %v736, %v808
      %v825 = vsub.f32 %v737, %v809
      %v826 = vsub.f32 %v738, %v810
      %v827 = vsub.f32 %v739, %v811
      %v828 = vsub.f32 %v740, %v812
      %v829 = vsub.f32 %v741, %v813
      %v830 = vsub.f32 %v742, %v814
      %v831 = vsub.f32 %v743, %v815
      %v832 = vsub.f32 %v744, %v816
      %v833 = vsub.f32 %v745, %v817
      %v834 = vsub.f32 %v746, %v818
      %v835 = vsub.f32 %v747, %v819
      %v836 = vsub.f32 %v748, %v820
      %v837 = vmul.f32 %v821, %v821
      %v838 = vmul.f32 %v822, %v822
      %v839 = vmul.f32 %v823, %v823
      %v840 = vmul.f32 %v824, %v824
      %v841 = vmul.f32 %v825, %v825
      %v842 = vmul.f32 %v826, %v826
      %v843 = vmul.f32 %v827, %v827
      %v844 = vmul.f32 %v828, %v828
      %v845 = vmul.f32 %v829, %v829
      %v846 = vmul.f32 %v830, %v830
      %v847 = vmul.f32 %v831, %v831
      %v848 = vmul.f32 %v832, %v832
      %v849 = vmul.f32 %v833, %v833
      %v850 = vmul.f32 %v834, %v834
      %v851 = vmul.f32 %v835, %v835
      %v852 = vmul.f32 %v836, %v836
      %v853 = vsel %vm755, %v837, 0.0
      %854 = vadd.xlane.f32.xlu0 %v853
      %v855 = vpop.xlane.xlu0 %854
      %v856 = vsel %vm755, %v838, 0.0
      %857 = vadd.xlane.f32.xlu0 %v856
      %v858 = vpop.xlane.xlu0 %857
      %v859 = vsel %vm755, %v839, 0.0
      %860 = vadd.xlane.f32.xlu0 %v859
      %v861 = vpop.xlane.xlu0 %860
      %v862 = vsel %vm755, %v840, 0.0
      %863 = vadd.xlane.f32.xlu0 %v862
      %v864 = vpop.xlane.xlu0 %863
      %v865 = vsel %vm755, %v841, 0.0
      %866 = vadd.xlane.f32.xlu0 %v865
      %v867 = vpop.xlane.xlu0 %866
      %v868 = vsel %vm755, %v842, 0.0
      %869 = vadd.xlane.f32.xlu0 %v868
      %v870 = vpop.xlane.xlu0 %869
      %v871 = vsel %vm755, %v843, 0.0
      %872 = vadd.xlane.f32.xlu0 %v871
      %v873 = vpop.xlane.xlu0 %872
      %v874 = vsel %vm755, %v844, 0.0
      %875 = vadd.xlane.f32.xlu0 %v874
      %v876 = vpop.xlane.xlu0 %875
      %v877 = vsel %vm755, %v845, 0.0
      %878 = vadd.xlane.f32.xlu0 %v877
      %v879 = vpop.xlane.xlu0 %878
      %v880 = vsel %vm755, %v846, 0.0
      %881 = vadd.xlane.f32.xlu0 %v880
      %v882 = vpop.xlane.xlu0 %881
      %v883 = vsel %vm755, %v847, 0.0
      %884 = vadd.xlane.f32.xlu0 %v883
      %v885 = vpop.xlane.xlu0 %884
      %v886 = vsel %vm755, %v848, 0.0
      %887 = vadd.xlane.f32.xlu0 %v886
      %v888 = vpop.xlane.xlu0 %887
      %v889 = vsel %vm755, %v849, 0.0
      %890 = vadd.xlane.f32.xlu0 %v889
      %v891 = vpop.xlane.xlu0 %890
      %v892 = vsel %vm755, %v850, 0.0
      %893 = vadd.xlane.f32.xlu0 %v892
      %v894 = vpop.xlane.xlu0 %893
      %v895 = vsel %vm755, %v851, 0.0
      %896 = vadd.xlane.f32.xlu0 %v895
      %v897 = vpop.xlane.xlu0 %896
      %v898 = vsel %vm755, %v852, 0.0
      %899 = vadd.xlane.f32.xlu0 %v898
      %v900 = vpop.xlane.xlu0 %899
      %v901 = vmul.f32 %v855, %v804
      %v902 = vmul.f32 %v858, %v804
      %v903 = vmul.f32 %v861, %v804
      %v904 = vmul.f32 %v864, %v804
      %v905 = vmul.f32 %v867, %v804
      %v906 = vmul.f32 %v870, %v804
      %v907 = vmul.f32 %v873, %v804
      %v908 = vmul.f32 %v876, %v804
      %v909 = vmul.f32 %v879, %v804
      %v910 = vmul.f32 %v882, %v804
      %v911 = vmul.f32 %v885, %v804
      %v912 = vmul.f32 %v888, %v804
      %v913 = vmul.f32 %v891, %v804
      %v914 = vmul.f32 %v894, %v804
      %v915 = vmul.f32 %v897, %v804
      %v916 = vmul.f32 %v900, %v804
      %v917 = vadd.f32 %v901, 1e-06
      %v918 = vadd.f32 %v902, 1e-06
      %v919 = vadd.f32 %v903, 1e-06
      %v920 = vadd.f32 %v904, 1e-06
      %v921 = vadd.f32 %v905, 1e-06
      %v922 = vadd.f32 %v906, 1e-06
      %v923 = vadd.f32 %v907, 1e-06
      %v924 = vadd.f32 %v908, 1e-06
      %v925 = vadd.f32 %v909, 1e-06
      %v926 = vadd.f32 %v910, 1e-06
      %v927 = vadd.f32 %v911, 1e-06
      %v928 = vadd.f32 %v912, 1e-06
      %v929 = vadd.f32 %v913, 1e-06
      %v930 = vadd.f32 %v914, 1e-06
      %v931 = vadd.f32 %v915, 1e-06
      %v932 = vadd.f32 %v916, 1e-06
      %v933 = vrsqrt.pop %v917
      %v934 = vrsqrt.pop %v918
      %v935 = vrsqrt.pop %v919
      %v936 = vrsqrt.pop %v920
      %v937 = vrsqrt.pop %v921
      %v938 = vrsqrt.pop %v922
      %v939 = vrsqrt.pop %v923
      %v940 = vrsqrt.pop %v924
      %v941 = vrsqrt.pop %v925
      %v942 = vrsqrt.pop %v926
      %v943 = vrsqrt.pop %v927
      %v944 = vrsqrt.pop %v928
      %v945 = vrsqrt.pop %v929
      %v946 = vrsqrt.pop %v930
      %v947 = vrsqrt.pop %v931
      %v948 = vrsqrt.pop %v932
      %v949 = vmul.f32 %v821, %v933
      %v950 = vmul.f32 %v822, %v934
      %v951 = vmul.f32 %v823, %v935
      %v952 = vmul.f32 %v824, %v936
      %v953 = vmul.f32 %v825, %v937
      %v954 = vmul.f32 %v826, %v938
      %v955 = vmul.f32 %v827, %v939
      %v956 = vmul.f32 %v828, %v940
      %v957 = vmul.f32 %v829, %v941
      %v958 = vmul.f32 %v830, %v942
      %v959 = vmul.f32 %v831, %v943
      %v960 = vmul.f32 %v832, %v944
      %v961 = vmul.f32 %v833, %v945
      %v962 = vmul.f32 %v834, %v946
      %v963 = vmul.f32 %v835, %v947
      %v964 = vmul.f32 %v836, %v948
      %v966 = vlaneseq
      %v967 = vshrl.u32 %v966, 7
      %v968 = vsub.s32 0, %v967
      %v969 = vrot.slane %v753, %v968
      %v971 = vmul.f32 %v949, %v969
      %v972 = vmul.f32 %v950, %v969
      %v973 = vmul.f32 %v951, %v969
      %v974 = vmul.f32 %v952, %v969
      %v975 = vmul.f32 %v953, %v969
      %v976 = vmul.f32 %v954, %v969
      %v977 = vmul.f32 %v955, %v969
      %v978 = vmul.f32 %v956, %v969
      %v979 = vmul.f32 %v957, %v969
      %v980 = vmul.f32 %v958, %v969
      %v981 = vmul.f32 %v959, %v969
      %v982 = vmul.f32 %v960, %v969
      %v983 = vmul.f32 %v961, %v969
      %v984 = vmul.f32 %v962, %v969
      %v985 = vmul.f32 %v963, %v969
      %v986 = vmul.f32 %v964, %v969
      %v988 = vlaneseq
      %v989 = vshrl.u32 %v988, 7
      %v990 = vsub.s32 0, %v989
      %v991 = vrot.slane %v754, %v990
      %v993 = vadd.f32 %v971, %v991
      %v994 = vadd.f32 %v972, %v991
      %v995 = vadd.f32 %v973, %v991
      %v996 = vadd.f32 %v974, %v991
      %v997 = vadd.f32 %v975, %v991
      %v998 = vadd.f32 %v976, %v991
      %v999 = vadd.f32 %v977, %v991
      %v1000 = vadd.f32 %v978, %v991
      %v1001 = vadd.f32 %v979, %v991
      %v1002 = vadd.f32 %v980, %v991
      %v1003 = vadd.f32 %v981, %v991
      %v1004 = vadd.f32 %v982, %v991
      %v1005 = vadd.f32 %v983, %v991
      %v1006 = vadd.f32 %v984, %v991
      %v1007 = vadd.f32 %v985, %v991
      %v1008 = vadd.f32 %v986, %v991
      %v1009 = vpack.c.bf16 %v994, %v993
      %v1010 = vpack.c.bf16 %v996, %v995
      %v1011 = vpack.c.bf16 %v998, %v997
      %v1012 = vpack.c.bf16 %v1000, %v999
      %v1013 = vpack.c.bf16 %v1002, %v1001
      %v1014 = vpack.c.bf16 %v1004, %v1003
      %v1015 = vpack.c.bf16 %v1006, %v1005
      %v1016 = vpack.c.bf16 %v1008, %v1007
      %v1017 = vld [vmem:[%s647] sm:$0xf]
      %v1018 = vld [vmem:[%s647 + $0x4] sm:$0xf]
      %v1019 = vld [vmem:[%s647 + $0x8] sm:$0xf]
      %v1020 = vld [vmem:[%s647 + $0xc] sm:$0xf]
      %v1021 = vld [vmem:[%s650] sm:$0x1]
      %v1023 = vlaneseq
      %v1024 = vshrl.u32 %v1023, 7
      %v1025 = vsub.s32 0, %v1024
      %v1026 = vrot.slane %v1021, %v1025
      %v1032 = vunpack.c.l.b16 %v1017
      %v1033 = vunpack.c.l.b16 %v1018
      %v1034 = vunpack.c.l.b16 %v1019
      %v1035 = vunpack.c.l.b16 %v1020
      %v1036 = vpack.c.b16 %v1033, %v1032
      %v1037 = vpack.c.b16 %v1035, %v1034
      %v1041 = vsel %vm755, %v1009, 0
      %v1044 = vsel %vm755, %v1010, 0
      %v1047 = vsel %vm755, %v1011, 0
      %v1050 = vsel %vm755, %v1012, 0
      %v1053 = vsel %vm755, %v1013, 0
      %v1056 = vsel %vm755, %v1014, 0
      %v1059 = vsel %vm755, %v1015, 0
      %v1062 = vsel %vm755, %v1016, 0
      %1064 = vmatprep.subr.bf16.mxu0 0
      %1065 = vmatpush1.bf16.msra.mxu0 %v1036
      %1066 = vmatprep.subr.bf16.mxu0 0
      %1067 = vmatpush1.bf16.msra.mxu0 %v1037
      %1068 = vmatprep.subr.bf16.mxu0 0
      %1069 = vmatpush1.bf16.msra.mxu0 0
      %1070 = vmatprep.subr.bf16.mxu0 0
      %1071 = vmatpush1.bf16.msra.mxu0 0
      %1072 = vmatprep.subr.bf16.mxu0 0
      %1073 = vmatpush1.bf16.msra.mxu0 0
      %1074 = vmatprep.subr.bf16.mxu0 0
      %1075 = vmatpush1.bf16.msra.mxu0 0
      %1076 = vmatprep.subr.bf16.mxu0 0
      %1077 = vmatpush1.bf16.msra.mxu0 0
      %1078 = vmatprep.subr.bf16.mxu0 0
      %1079 = vmatpush1.bf16.msra.mxu0 0
      %1080 = vmatprep.subr.bf16.mxu0 0
      %1081 = vmatpush1.bf16.msra.mxu0 0
      %1082 = vmatprep.subr.bf16.mxu0 0
      %1083 = vmatpush1.bf16.msra.mxu0 0
      %1084 = vmatprep.subr.bf16.mxu0 0
      %1085 = vmatpush1.bf16.msra.mxu0 0
      %1086 = vmatprep.subr.bf16.mxu0 0
      %1087 = vmatpush1.bf16.msra.mxu0 0
      %1088 = vmatprep.subr.bf16.mxu0 0
      %1089 = vmatpush1.bf16.msra.mxu0 0
      %1090 = vmatprep.subr.bf16.mxu0 0
      %1091 = vmatpush1.bf16.msra.mxu0 0
      %1092 = vmatprep.subr.bf16.mxu0 0
      %1093 = vmatpush1.bf16.msra.mxu0 0
      %1094 = vmatprep.subr.bf16.mxu0 0
      %1095 = vmatpush1.bf16.msra.mxu0 0
      %1096 = vmatprep.mubr.bf16.mxu0 0
      %1097 = vmatmul.mubr.bf16.gmra.mrb[0].mxu0 %v1041
      %v1098 = vpop.f32.mrb[0].mxu0
      %v1099 = vadd.f32 %v1026, %v1098
      %v1100 = vpop.f32.mrb[0].mxu0
      %v1101 = vpop.f32.mrb[0].mxu0
      %v1102 = vadd.f32 %v1026, %v1101
      %v1103 = vpop.f32.mrb[0].mxu0
      %1104 = vmatprep.mubr.bf16.mxu0 0
      %1105 = vmatmul.mubr.bf16.gmra.mrb[0].mxu0 %v1044
      %v1106 = vpop.f32.mrb[0].mxu0
      %v1107 = vadd.f32 %v1026, %v1106
      %v1108 = vpop.f32.mrb[0].mxu0
      %v1109 = vpop.f32.mrb[0].mxu0
      %v1110 = vadd.f32 %v1026, %v1109
      %v1111 = vpop.f32.mrb[0].mxu0
      %1112 = vmatprep.mubr.bf16.mxu0 0
      %1113 = vmatmul.mubr.bf16.gmra.mrb[0].mxu0 %v1047
      %v1114 = vpop.f32.mrb[0].mxu0
      %v1115 = vadd.f32 %v1026, %v1114
      %v1116 = vpop.f32.mrb[0].mxu0
      %v1117 = vpop.f32.mrb[0].mxu0
      %v1118 = vadd.f32 %v1026, %v1117
      %v1119 = vpop.f32.mrb[0].mxu0
      %1120 = vmatprep.mubr.bf16.mxu0 0
      %1121 = vmatmul.mubr.bf16.gmra.mrb[0].mxu0 %v1050
      %v1122 = vpop.f32.mrb[0].mxu0
      %v1123 = vadd.f32 %v1026, %v1122
      %v1124 = vpop.f32.mrb[0].mxu0
      %v1125 = vpop.f32.mrb[0].mxu0
      %v1126 = vadd.f32 %v1026, %v1125
      %v1127 = vpop.f32.mrb[0].mxu0
      %1128 = vmatprep.mubr.bf16.mxu0 0
      %1129 = vmatmul.mubr.bf16.gmra.mrb[0].mxu0 %v1053
      %v1130 = vpop.f32.mrb[0].mxu0
      %v1131 = vadd.f32 %v1026, %v1130
      %v1132 = vpop.f32.mrb[0].mxu0
      %v1133 = vpop.f32.mrb[0].mxu0
      %v1134 = vadd.f32 %v1026, %v1133
      %v1135 = vpop.f32.mrb[0].mxu0
      %1136 = vmatprep.mubr.bf16.mxu0 0
      %1137 = vmatmul.mubr.bf16.gmra.mrb[0].mxu0 %v1056
      %v1138 = vpop.f32.mrb[0].mxu0
      %v1139 = vadd.f32 %v1026, %v1138
      %v1140 = vpop.f32.mrb[0].mxu0
      %v1141 = vpop.f32.mrb[0].mxu0
      %v1142 = vadd.f32 %v1026, %v1141
      %v1143 = vpop.f32.mrb[0].mxu0
      %1144 = vmatprep.mubr.bf16.mxu0 0
      %1145 = vmatmul.mubr.bf16.gmra.mrb[0].mxu0 %v1059
      %v1146 = vpop.f32.mrb[0].mxu0
      %v1147 = vadd.f32 %v1026, %v1146
      %v1148 = vpop.f32.mrb[0].mxu0
      %v1149 = vpop.f32.mrb[0].mxu0
      %v1150 = vadd.f32 %v1026, %v1149
      %v1151 = vpop.f32.mrb[0].mxu0
      %1152 = vmatprep.mubr.bf16.mxu0 0
      %1153 = vmatmul.mubr.bf16.gmra.mrb[0].mxu0 %v1062
      %v1154 = vpop.f32.mrb[0].mxu0
      %v1155 = vadd.f32 %v1026, %v1154
      %v1156 = vpop.f32.mrb[0].mxu0
      %v1157 = vpop.f32.mrb[0].mxu0
      %v1158 = vadd.f32 %v1026, %v1157
      %v1159 = vpop.f32.mrb[0].mxu0
      %1160 = vdwg.mxu0
      %v1161 = vmul.f32 %v1099, 0.35355338
      %v1162 = vmul.f32 %v1102, 0.35355338
      %v1163 = vmul.f32 %v1107, 0.35355338
      %v1164 = vmul.f32 %v1110, 0.35355338
      %v1165 = vmul.f32 %v1115, 0.35355338
      %v1166 = vmul.f32 %v1118, 0.35355338
      %v1167 = vmul.f32 %v1123, 0.35355338
      %v1168 = vmul.f32 %v1126, 0.35355338
      %v1169 = vmul.f32 %v1131, 0.35355338
      %v1170 = vmul.f32 %v1134, 0.35355338
      %v1171 = vmul.f32 %v1139, 0.35355338
      %v1172 = vmul.f32 %v1142, 0.35355338
      %v1173 = vmul.f32 %v1147, 0.35355338
      %v1174 = vmul.f32 %v1150, 0.35355338
      %v1175 = vmul.f32 %v1155, 0.35355338
      %v1176 = vmul.f32 %v1158, 0.35355338
      %v1177 = vpack.c.bf16 %v1162, %v1161
      %v1178 = vpack.c.bf16 %v1164, %v1163
      %v1179 = vpack.c.bf16 %v1166, %v1165
      %v1180 = vpack.c.bf16 %v1168, %v1167
      %v1181 = vpack.c.bf16 %v1170, %v1169
      %v1182 = vpack.c.bf16 %v1172, %v1171
      %v1183 = vpack.c.bf16 %v1174, %v1173
      %v1184 = vpack.c.bf16 %v1176, %v1175
      %v1185 = vpack.c.bf16 %v1102, %v1099
      %v1186 = vpack.c.bf16 %v1110, %v1107
      %v1187 = vpack.c.bf16 %v1118, %v1115
      %v1188 = vpack.c.bf16 %v1126, %v1123
      %v1189 = vpack.c.bf16 %v1134, %v1131
      %v1190 = vpack.c.bf16 %v1142, %v1139
      %v1191 = vpack.c.bf16 %v1150, %v1147
      %v1192 = vpack.c.bf16 %v1158, %v1155
      %v1193 = vld [vmem:[%s655] sm:$0xf]
      %v1194 = vld [vmem:[%s655 + $0x4] sm:$0xf]
      %v1195 = vld [vmem:[%s655 + $0x8] sm:$0xf]
      %v1196 = vld [vmem:[%s655 + $0xc] sm:$0xf]
      %1205 = vrot.lane.b32.xlu0 %v1185, 96
      %v1206 = vpop.permute.xlu0 %1205
      %1207 = vrot.lane.b32.xlu0 %v1186, 96
      %v1208 = vpop.permute.xlu0 %1207
      %1209 = vrot.lane.b32.xlu0 %v1187, 96
      %v1210 = vpop.permute.xlu0 %1209
      %1211 = vrot.lane.b32.xlu0 %v1188, 96
      %v1212 = vpop.permute.xlu0 %1211
      %1213 = vrot.lane.b32.xlu0 %v1189, 96
      %v1214 = vpop.permute.xlu0 %1213
      %1215 = vrot.lane.b32.xlu0 %v1190, 96
      %v1216 = vpop.permute.xlu0 %1215
      %1217 = vrot.lane.b32.xlu0 %v1191, 96
      %v1218 = vpop.permute.xlu0 %1217
      %1219 = vrot.lane.b32.xlu0 %v1192, 96
      %v1220 = vpop.permute.xlu0 %1219
      %vm1221 = vcmask 64512
      %v1223 = vsel %vm1221, %v1177, 0
      %v1226 = vsel %vm1221, %v1178, 0
      %v1229 = vsel %vm1221, %v1179, 0
      %v1232 = vsel %vm1221, %v1180, 0
      %v1235 = vsel %vm1221, %v1181, 0
      %v1238 = vsel %vm1221, %v1182, 0
      %v1241 = vsel %vm1221, %v1183, 0
      %v1244 = vsel %vm1221, %v1184, 0
      %v1247 = vsel %vm1221, %v1206, 0
      %v1250 = vsel %vm1221, %v1208, 0
      %v1253 = vsel %vm1221, %v1210, 0
      %v1256 = vsel %vm1221, %v1212, 0
      %v1259 = vsel %vm1221, %v1214, 0
      %v1262 = vsel %vm1221, %v1216, 0
      %v1265 = vsel %vm1221, %v1218, 0
      %v1268 = vsel %vm1221, %v1220, 0
      %1270 = vmatprep.subr.bf16.mxu0 0
      %1271 = vmatpush1.bf16.xpose.msra.mxu0 %v1247
      %1272 = vmatprep.subr.bf16.mxu0 0
      %1273 = vmatpush1.bf16.xpose.msra.mxu0 %v1250
      %1274 = vmatprep.subr.bf16.mxu0 0
      %1275 = vmatpush1.bf16.xpose.msra.mxu0 %v1253
      %1276 = vmatprep.subr.bf16.mxu0 0
      %1277 = vmatpush1.bf16.xpose.msra.mxu0 %v1256
      %1278 = vmatprep.subr.bf16.mxu0 0
      %1279 = vmatpush1.bf16.xpose.msra.mxu0 %v1259
      %1280 = vmatprep.subr.bf16.mxu0 0
      %1281 = vmatpush1.bf16.xpose.msra.mxu0 %v1262
      %1282 = vmatprep.subr.bf16.mxu0 0
      %1283 = vmatpush1.bf16.xpose.msra.mxu0 %v1265
      %1284 = vmatprep.subr.bf16.mxu0 0
      %1285 = vmatpush1.bf16.xpose.msra.mxu0 %v1268
      %1286 = vmatprep.subr.bf16.mxu0 0
      %1287 = vmatpush1.bf16.xpose.msra.mxu0 0
      %1288 = vmatprep.subr.bf16.mxu0 0
      %1289 = vmatpush1.bf16.xpose.msra.mxu0 0
      %1290 = vmatprep.subr.bf16.mxu0 0
      %1291 = vmatpush1.bf16.xpose.msra.mxu0 0
      %1292 = vmatprep.subr.bf16.mxu0 0
      %1293 = vmatpush1.bf16.xpose.msra.mxu0 0
      %1294 = vmatprep.subr.bf16.mxu0 0
      %1295 = vmatpush1.bf16.xpose.msra.mxu0 0
      %1296 = vmatprep.subr.bf16.mxu0 0
      %1297 = vmatpush1.bf16.xpose.msra.mxu0 0
      %1298 = vmatprep.subr.bf16.mxu0 0
      %1299 = vmatpush1.bf16.xpose.msra.mxu0 0
      %1300 = vmatprep.subr.bf16.mxu0 0
      %1301 = vmatpush1.bf16.xpose.msra.mxu0 0
      %1302 = vmatprep.mubr.bf16.mxu0 0
      %1303 = vmatmul.mubr.bf16.gmra.mrb[0].mxu0 %v1223
      %v1304 = vpop.f32.mrb[0].mxu0
      %v1305 = vadd.f32 %v752, %v1304
      %v1306 = vpop.f32.mrb[0].mxu0
      %v1307 = vpop.f32.mrb[0].mxu0
      %v1308 = vadd.f32 %v752, %v1307
      %v1309 = vpop.f32.mrb[0].mxu0
      %1310 = vmatprep.mubr.bf16.mxu0 0
      %1311 = vmatmul.mubr.bf16.gmra.mrb[0].mxu0 %v1226
      %v1312 = vpop.f32.mrb[0].mxu0
      %v1313 = vadd.f32 %v752, %v1312
      %v1314 = vpop.f32.mrb[0].mxu0
      %v1315 = vpop.f32.mrb[0].mxu0
      %v1316 = vadd.f32 %v752, %v1315
      %v1317 = vpop.f32.mrb[0].mxu0
      %1318 = vmatprep.mubr.bf16.mxu0 0
      %1319 = vmatmul.mubr.bf16.gmra.mrb[0].mxu0 %v1229
      %v1320 = vpop.f32.mrb[0].mxu0
      %v1321 = vadd.f32 %v752, %v1320
      %v1322 = vpop.f32.mrb[0].mxu0
      %v1323 = vpop.f32.mrb[0].mxu0
      %v1324 = vadd.f32 %v752, %v1323
      %v1325 = vpop.f32.mrb[0].mxu0
      %1326 = vmatprep.mubr.bf16.mxu0 0
      %1327 = vmatmul.mubr.bf16.gmra.mrb[0].mxu0 %v1232
      %v1328 = vpop.f32.mrb[0].mxu0
      %v1329 = vadd.f32 %v752, %v1328
      %v1330 = vpop.f32.mrb[0].mxu0
      %v1331 = vpop.f32.mrb[0].mxu0
      %v1332 = vadd.f32 %v752, %v1331
      %v1333 = vpop.f32.mrb[0].mxu0
      %1334 = vmatprep.mubr.bf16.mxu0 0
      %1335 = vmatmul.mubr.bf16.gmra.mrb[0].mxu0 %v1235
      %v1336 = vpop.f32.mrb[0].mxu0
      %v1337 = vadd.f32 %v752, %v1336
      %v1338 = vpop.f32.mrb[0].mxu0
      %v1339 = vpop.f32.mrb[0].mxu0
      %v1340 = vadd.f32 %v752, %v1339
      %v1341 = vpop.f32.mrb[0].mxu0
      %1342 = vmatprep.mubr.bf16.mxu0 0
      %1343 = vmatmul.mubr.bf16.gmra.mrb[0].mxu0 %v1238
      %v1344 = vpop.f32.mrb[0].mxu0
      %v1345 = vadd.f32 %v752, %v1344
      %v1346 = vpop.f32.mrb[0].mxu0
      %v1347 = vpop.f32.mrb[0].mxu0
      %v1348 = vadd.f32 %v752, %v1347
      %v1349 = vpop.f32.mrb[0].mxu0
      %1350 = vmatprep.mubr.bf16.mxu0 0
      %1351 = vmatmul.mubr.bf16.gmra.mrb[0].mxu0 %v1241
      %v1352 = vpop.f32.mrb[0].mxu0
      %v1353 = vadd.f32 %v752, %v1352
      %v1354 = vpop.f32.mrb[0].mxu0
      %v1355 = vpop.f32.mrb[0].mxu0
      %v1356 = vadd.f32 %v752, %v1355
      %v1357 = vpop.f32.mrb[0].mxu0
      %1358 = vmatprep.mubr.bf16.mxu0 0
      %1359 = vmatmul.mubr.bf16.gmra.mrb[0].mxu0 %v1244
      %v1360 = vpop.f32.mrb[0].mxu0
      %v1361 = vadd.f32 %v752, %v1360
      %v1362 = vpop.f32.mrb[0].mxu0
      %v1363 = vpop.f32.mrb[0].mxu0
      %v1364 = vadd.f32 %v752, %v1363
      %v1365 = vpop.f32.mrb[0].mxu0
      %1366 = vdwg.mxu0
      %1367 = vmax.xlane.f32.xlu0 %v1305
      %v1368 = vpop.xlane.xlu0 %1367
      %1369 = vmax.xlane.f32.xlu0 %v1308
      %v1370 = vpop.xlane.xlu0 %1369
      %1371 = vmax.xlane.f32.xlu0 %v1313
      %v1372 = vpop.xlane.xlu0 %1371
      %1373 = vmax.xlane.f32.xlu0 %v1316
      %v1374 = vpop.xlane.xlu0 %1373
      %1375 = vmax.xlane.f32.xlu0 %v1321
      %v1376 = vpop.xlane.xlu0 %1375
      %1377 = vmax.xlane.f32.xlu0 %v1324
      %v1378 = vpop.xlane.xlu0 %1377
      %1379 = vmax.xlane.f32.xlu0 %v1329
      %v1380 = vpop.xlane.xlu0 %1379
      %1381 = vmax.xlane.f32.xlu0 %v1332
      %v1382 = vpop.xlane.xlu0 %1381
      %1383 = vmax.xlane.f32.xlu0 %v1337
      %v1384 = vpop.xlane.xlu0 %1383
      %1385 = vmax.xlane.f32.xlu0 %v1340
      %v1386 = vpop.xlane.xlu0 %1385
      %1387 = vmax.xlane.f32.xlu0 %v1345
      %v1388 = vpop.xlane.xlu0 %1387
      %1389 = vmax.xlane.f32.xlu0 %v1348
      %v1390 = vpop.xlane.xlu0 %1389
      %1391 = vmax.xlane.f32.xlu0 %v1353
      %v1392 = vpop.xlane.xlu0 %1391
      %1393 = vmax.xlane.f32.xlu0 %v1356
      %v1394 = vpop.xlane.xlu0 %1393
      %1395 = vmax.xlane.f32.xlu0 %v1361
      %v1396 = vpop.xlane.xlu0 %1395
      %1397 = vmax.xlane.f32.xlu0 %v1364
      %v1398 = vpop.xlane.xlu0 %1397
      %v1399 = vsub.f32 %v1305, %v1368
      %v1400 = vsub.f32 %v1308, %v1370
      %v1401 = vsub.f32 %v1313, %v1372
      %v1402 = vsub.f32 %v1316, %v1374
      %v1403 = vsub.f32 %v1321, %v1376
      %v1404 = vsub.f32 %v1324, %v1378
      %v1405 = vsub.f32 %v1329, %v1380
      %v1406 = vsub.f32 %v1332, %v1382
      %v1407 = vsub.f32 %v1337, %v1384
      %v1408 = vsub.f32 %v1340, %v1386
      %v1409 = vsub.f32 %v1345, %v1388
      %v1410 = vsub.f32 %v1348, %v1390
      %v1411 = vsub.f32 %v1353, %v1392
      %v1412 = vsub.f32 %v1356, %v1394
      %v1413 = vsub.f32 %v1361, %v1396
      %v1414 = vsub.f32 %v1364, %v1398
      %v1415 = vmul.f32 %v1399, 1.442695
      %v1416 = vpow.pop %v1415
      %v1417 = vmul.f32 %v1400, 1.442695
      %v1418 = vpow.pop %v1417
      %v1419 = vmul.f32 %v1401, 1.442695
      %v1420 = vpow.pop %v1419
      %v1421 = vmul.f32 %v1402, 1.442695
      %v1422 = vpow.pop %v1421
      %v1423 = vmul.f32 %v1403, 1.442695
      %v1424 = vpow.pop %v1423
      %v1425 = vmul.f32 %v1404, 1.442695
      %v1426 = vpow.pop %v1425
      %v1427 = vmul.f32 %v1405, 1.442695
      %v1428 = vpow.pop %v1427
      %v1429 = vmul.f32 %v1406, 1.442695
      %v1430 = vpow.pop %v1429
      %v1431 = vmul.f32 %v1407, 1.442695
      %v1432 = vpow.pop %v1431
      %v1433 = vmul.f32 %v1408, 1.442695
      %v1434 = vpow.pop %v1433
      %v1435 = vmul.f32 %v1409, 1.442695
      %v1436 = vpow.pop %v1435
      %v1437 = vmul.f32 %v1410, 1.442695
      %v1438 = vpow.pop %v1437
      %v1439 = vmul.f32 %v1411, 1.442695
      %v1440 = vpow.pop %v1439
      %v1441 = vmul.f32 %v1412, 1.442695
      %v1442 = vpow.pop %v1441
      %v1443 = vmul.f32 %v1413, 1.442695
      %v1444 = vpow.pop %v1443
      %v1445 = vmul.f32 %v1414, 1.442695
      %v1446 = vpow.pop %v1445
      %1447 = vadd.xlane.f32.xlu0 %v1416
      %v1448 = vpop.xlane.xlu0 %1447
      %1449 = vadd.xlane.f32.xlu0 %v1418
      %v1450 = vpop.xlane.xlu0 %1449
      %1451 = vadd.xlane.f32.xlu0 %v1420
      %v1452 = vpop.xlane.xlu0 %1451
      %1453 = vadd.xlane.f32.xlu0 %v1422
      %v1454 = vpop.xlane.xlu0 %1453
      %1455 = vadd.xlane.f32.xlu0 %v1424
      %v1456 = vpop.xlane.xlu0 %1455
      %1457 = vadd.xlane.f32.xlu0 %v1426
      %v1458 = vpop.xlane.xlu0 %1457
      %1459 = vadd.xlane.f32.xlu0 %v1428
      %v1460 = vpop.xlane.xlu0 %1459
      %1461 = vadd.xlane.f32.xlu0 %v1430
      %v1462 = vpop.xlane.xlu0 %1461
      %1463 = vadd.xlane.f32.xlu0 %v1432
      %v1464 = vpop.xlane.xlu0 %1463
      %1465 = vadd.xlane.f32.xlu0 %v1434
      %v1466 = vpop.xlane.xlu0 %1465
      %1467 = vadd.xlane.f32.xlu0 %v1436
      %v1468 = vpop.xlane.xlu0 %1467
      %1469 = vadd.xlane.f32.xlu0 %v1438
      %v1470 = vpop.xlane.xlu0 %1469
      %1471 = vadd.xlane.f32.xlu0 %v1440
      %v1472 = vpop.xlane.xlu0 %1471
      %1473 = vadd.xlane.f32.xlu0 %v1442
      %v1474 = vpop.xlane.xlu0 %1473
      %1475 = vadd.xlane.f32.xlu0 %v1444
      %v1476 = vpop.xlane.xlu0 %1475
      %1477 = vadd.xlane.f32.xlu0 %v1446
      %v1478 = vpop.xlane.xlu0 %1477
      %v1479 = vrcp.pop %v1448
      %v1480 = vrcp.pop %v1450
      %v1481 = vrcp.pop %v1452
      %v1482 = vrcp.pop %v1454
      %v1483 = vrcp.pop %v1456
      %v1484 = vrcp.pop %v1458
      %v1485 = vrcp.pop %v1460
      %v1486 = vrcp.pop %v1462
      %v1487 = vrcp.pop %v1464
      %v1488 = vrcp.pop %v1466
      %v1489 = vrcp.pop %v1468
      %v1490 = vrcp.pop %v1470
      %v1491 = vrcp.pop %v1472
      %v1492 = vrcp.pop %v1474
      %v1493 = vrcp.pop %v1476
      %v1494 = vrcp.pop %v1478
      %v1495 = vmul.f32 %v1416, %v1479
      %v1496 = vmul.f32 %v1418, %v1480
      %v1497 = vmul.f32 %v1420, %v1481
      %v1498 = vmul.f32 %v1422, %v1482
      %v1499 = vmul.f32 %v1424, %v1483
      %v1500 = vmul.f32 %v1426, %v1484
      %v1501 = vmul.f32 %v1428, %v1485
      %v1502 = vmul.f32 %v1430, %v1486
      %v1503 = vmul.f32 %v1432, %v1487
      %v1504 = vmul.f32 %v1434, %v1488
      %v1505 = vmul.f32 %v1436, %v1489
      %v1506 = vmul.f32 %v1438, %v1490
      %v1507 = vmul.f32 %v1440, %v1491
      %v1508 = vmul.f32 %v1442, %v1492
      %v1509 = vmul.f32 %v1444, %v1493
      %v1510 = vmul.f32 %v1446, %v1494
      %v1511 = vpack.c.bf16 %v1496, %v1495
      %v1512 = vpack.c.bf16 %v1498, %v1497
      %v1513 = vpack.c.bf16 %v1500, %v1499
      %v1514 = vpack.c.bf16 %v1502, %v1501
      %v1515 = vpack.c.bf16 %v1504, %v1503
      %v1516 = vpack.c.bf16 %v1506, %v1505
      %v1517 = vpack.c.bf16 %v1508, %v1507
      %v1518 = vpack.c.bf16 %v1510, %v1509
      %1519 = vrot.lane.b32.xlu0 %v1185, 64
      %v1520 = vpop.permute.xlu0 %1519
      %1521 = vrot.lane.b32.xlu0 %v1186, 64
      %v1522 = vpop.permute.xlu0 %1521
      %1523 = vrot.lane.b32.xlu0 %v1187, 64
      %v1524 = vpop.permute.xlu0 %1523
      %1525 = vrot.lane.b32.xlu0 %v1188, 64
      %v1526 = vpop.permute.xlu0 %1525
      %1527 = vrot.lane.b32.xlu0 %v1189, 64
      %v1528 = vpop.permute.xlu0 %1527
      %1529 = vrot.lane.b32.xlu0 %v1190, 64
      %v1530 = vpop.permute.xlu0 %1529
      %1531 = vrot.lane.b32.xlu0 %v1191, 64
      %v1532 = vpop.permute.xlu0 %1531
      %1533 = vrot.lane.b32.xlu0 %v1192, 64
      %v1534 = vpop.permute.xlu0 %1533
      %1543 = vmatprep.subr.bf16.mxu0 0
      %1544 = vmatpush1.bf16.msra.mxu0 %v1520
      %1545 = vmatprep.subr.bf16.mxu0 0
      %1546 = vmatpush1.bf16.msra.mxu0 %v1522
      %1547 = vmatprep.subr.bf16.mxu0 0
      %1548 = vmatpush1.bf16.msra.mxu0 %v1524
      %1549 = vmatprep.subr.bf16.mxu0 0
      %1550 = vmatpush1.bf16.msra.mxu0 %v1526
      %1551 = vmatprep.subr.bf16.mxu0 0
      %1552 = vmatpush1.bf16.msra.mxu0 %v1528
      %1553 = vmatprep.subr.bf16.mxu0 0
      %1554 = vmatpush1.bf16.msra.mxu0 %v1530
      %1555 = vmatprep.subr.bf16.mxu0 0
      %1556 = vmatpush1.bf16.msra.mxu0 %v1532
      %1557 = vmatprep.subr.bf16.mxu0 0
      %1558 = vmatpush1.bf16.msra.mxu0 %v1534
      %1559 = vmatprep.subr.bf16.mxu0 0
      %1560 = vmatpush1.bf16.msra.mxu0 0
      %1561 = vmatprep.subr.bf16.mxu0 0
      %1562 = vmatpush1.bf16.msra.mxu0 0
      %1563 = vmatprep.subr.bf16.mxu0 0
      %1564 = vmatpush1.bf16.msra.mxu0 0
      %1565 = vmatprep.subr.bf16.mxu0 0
      %1566 = vmatpush1.bf16.msra.mxu0 0
      %1567 = vmatprep.subr.bf16.mxu0 0
      %1568 = vmatpush1.bf16.msra.mxu0 0
      %1569 = vmatprep.subr.bf16.mxu0 0
      %1570 = vmatpush1.bf16.msra.mxu0 0
      %1571 = vmatprep.subr.bf16.mxu0 0
      %1572 = vmatpush1.bf16.msra.mxu0 0
      %1573 = vmatprep.subr.bf16.mxu0 0
      %1574 = vmatpush1.bf16.msra.mxu0 0
      %1575 = vmatprep.mubr.bf16.mxu0 0
      %1576 = vmatmul.mubr.bf16.gmra.mrb[0].mxu0 %v1511
      %v1577 = vpop.f32.mrb[0].mxu0
      %v1578 = vadd.f32 0.0, %v1577
      %v1579 = vpop.f32.mrb[0].mxu0
      %v1580 = vpop.f32.mrb[0].mxu0
      %v1581 = vadd.f32 0.0, %v1580
      %v1582 = vpop.f32.mrb[0].mxu0
      %1583 = vmatprep.mubr.bf16.mxu0 0
      %1584 = vmatmul.mubr.bf16.gmra.mrb[0].mxu0 %v1512
      %v1585 = vpop.f32.mrb[0].mxu0
      %v1586 = vadd.f32 0.0, %v1585
      %v1587 = vpop.f32.mrb[0].mxu0
      %v1588 = vpop.f32.mrb[0].mxu0
      %v1589 = vadd.f32 0.0, %v1588
      %v1590 = vpop.f32.mrb[0].mxu0
      %1591 = vmatprep.mubr.bf16.mxu0 0
      %1592 = vmatmul.mubr.bf16.gmra.mrb[0].mxu0 %v1513
      %v1593 = vpop.f32.mrb[0].mxu0
      %v1594 = vadd.f32 0.0, %v1593
      %v1595 = vpop.f32.mrb[0].mxu0
      %v1596 = vpop.f32.mrb[0].mxu0
      %v1597 = vadd.f32 0.0, %v1596
      %v1598 = vpop.f32.mrb[0].mxu0
      %1599 = vmatprep.mubr.bf16.mxu0 0
      %1600 = vmatmul.mubr.bf16.gmra.mrb[0].mxu0 %v1514
      %v1601 = vpop.f32.mrb[0].mxu0
      %v1602 = vadd.f32 0.0, %v1601
      %v1603 = vpop.f32.mrb[0].mxu0
      %v1604 = vpop.f32.mrb[0].mxu0
      %v1605 = vadd.f32 0.0, %v1604
      %v1606 = vpop.f32.mrb[0].mxu0
      %1607 = vmatprep.mubr.bf16.mxu0 0
      %1608 = vmatmul.mubr.bf16.gmra.mrb[0].mxu0 %v1515
      %v1609 = vpop.f32.mrb[0].mxu0
      %v1610 = vadd.f32 0.0, %v1609
      %v1611 = vpop.f32.mrb[0].mxu0
      %v1612 = vpop.f32.mrb[0].mxu0
      %v1613 = vadd.f32 0.0, %v1612
      %v1614 = vpop.f32.mrb[0].mxu0
      %1615 = vmatprep.mubr.bf16.mxu0 0
      %1616 = vmatmul.mubr.bf16.gmra.mrb[0].mxu0 %v1516
      %v1617 = vpop.f32.mrb[0].mxu0
      %v1618 = vadd.f32 0.0, %v1617
      %v1619 = vpop.f32.mrb[0].mxu0
      %v1620 = vpop.f32.mrb[0].mxu0
      %v1621 = vadd.f32 0.0, %v1620
      %v1622 = vpop.f32.mrb[0].mxu0
      %1623 = vmatprep.mubr.bf16.mxu0 0
      %1624 = vmatmul.mubr.bf16.gmra.mrb[0].mxu0 %v1517
      %v1625 = vpop.f32.mrb[0].mxu0
      %v1626 = vadd.f32 0.0, %v1625
      %v1627 = vpop.f32.mrb[0].mxu0
      %v1628 = vpop.f32.mrb[0].mxu0
      %v1629 = vadd.f32 0.0, %v1628
      %v1630 = vpop.f32.mrb[0].mxu0
      %1631 = vmatprep.mubr.bf16.mxu0 0
      %1632 = vmatmul.mubr.bf16.gmra.mrb[0].mxu0 %v1518
      %v1633 = vpop.f32.mrb[0].mxu0
      %v1634 = vadd.f32 0.0, %v1633
      %v1635 = vpop.f32.mrb[0].mxu0
      %v1636 = vpop.f32.mrb[0].mxu0
      %v1637 = vadd.f32 0.0, %v1636
      %v1638 = vpop.f32.mrb[0].mxu0
      %1639 = vdwg.mxu0
      %v1640 = vpack.c.bf16 %v1581, %v1578
      %v1641 = vpack.c.bf16 %v1589, %v1586
      %v1642 = vpack.c.bf16 %v1597, %v1594
      %v1643 = vpack.c.bf16 %v1605, %v1602
      %v1644 = vpack.c.bf16 %v1613, %v1610
      %v1645 = vpack.c.bf16 %v1621, %v1618
      %v1646 = vpack.c.bf16 %v1629, %v1626
      %v1647 = vpack.c.bf16 %v1637, %v1634
      %1656 = vrot.lane.b32.xlu0 %v1177, 120
      %v1657 = vpop.permute.xlu0 %1656
      %1658 = vrot.lane.b32.xlu0 %v1178, 120
      %v1659 = vpop.permute.xlu0 %1658
      %1660 = vrot.lane.b32.xlu0 %v1179, 120
      %v1661 = vpop.permute.xlu0 %1660
      %1662 = vrot.lane.b32.xlu0 %v1180, 120
      %v1663 = vpop.permute.xlu0 %1662
      %1664 = vrot.lane.b32.xlu0 %v1181, 120
      %v1665 = vpop.permute.xlu0 %1664
      %1666 = vrot.lane.b32.xlu0 %v1182, 120
      %v1667 = vpop.permute.xlu0 %1666
      %1668 = vrot.lane.b32.xlu0 %v1183, 120
      %v1669 = vpop.permute.xlu0 %1668
      %1670 = vrot.lane.b32.xlu0 %v1184, 120
      %v1671 = vpop.permute.xlu0 %1670
      %1672 = vrot.lane.b32.xlu0 %v1185, 88
      %v1673 = vpop.permute.xlu0 %1672
      %1674 = vrot.lane.b32.xlu0 %v1186, 88
      %v1675 = vpop.permute.xlu0 %1674
      %1676 = vrot.lane.b32.xlu0 %v1187, 88
      %v1677 = vpop.permute.xlu0 %1676
      %1678 = vrot.lane.b32.xlu0 %v1188, 88
      %v1679 = vpop.permute.xlu0 %1678
      %1680 = vrot.lane.b32.xlu0 %v1189, 88
      %v1681 = vpop.permute.xlu0 %1680
      %1682 = vrot.lane.b32.xlu0 %v1190, 88
      %v1683 = vpop.permute.xlu0 %1682
      %1684 = vrot.lane.b32.xlu0 %v1191, 88
      %v1685 = vpop.permute.xlu0 %1684
      %1686 = vrot.lane.b32.xlu0 %v1192, 88
      %v1687 = vpop.permute.xlu0 %1686
      %v1689 = vsel %vm1221, %v1657, 0
      %v1692 = vsel %vm1221, %v1659, 0
      %v1695 = vsel %vm1221, %v1661, 0
      %v1698 = vsel %vm1221, %v1663, 0
      %v1701 = vsel %vm1221, %v1665, 0
      %v1704 = vsel %vm1221, %v1667, 0
      %v1707 = vsel %vm1221, %v1669, 0
      %v1710 = vsel %vm1221, %v1671, 0
      %v1713 = vsel %vm1221, %v1673, 0
      %v1716 = vsel %vm1221, %v1675, 0
      %v1719 = vsel %vm1221, %v1677, 0
      %v1722 = vsel %vm1221, %v1679, 0
      %v1725 = vsel %vm1221, %v1681, 0
      %v1728 = vsel %vm1221, %v1683, 0
      %v1731 = vsel %vm1221, %v1685, 0
      %v1734 = vsel %vm1221, %v1687, 0
      %1736 = vmatprep.subr.bf16.mxu0 0
      %1737 = vmatpush1.bf16.xpose.msra.mxu0 %v1713
      %1738 = vmatprep.subr.bf16.mxu0 0
      %1739 = vmatpush1.bf16.xpose.msra.mxu0 %v1716
      %1740 = vmatprep.subr.bf16.mxu0 0
      %1741 = vmatpush1.bf16.xpose.msra.mxu0 %v1719
      %1742 = vmatprep.subr.bf16.mxu0 0
      %1743 = vmatpush1.bf16.xpose.msra.mxu0 %v1722
      %1744 = vmatprep.subr.bf16.mxu0 0
      %1745 = vmatpush1.bf16.xpose.msra.mxu0 %v1725
      %1746 = vmatprep.subr.bf16.mxu0 0
      %1747 = vmatpush1.bf16.xpose.msra.mxu0 %v1728
      %1748 = vmatprep.subr.bf16.mxu0 0
      %1749 = vmatpush1.bf16.xpose.msra.mxu0 %v1731
      %1750 = vmatprep.subr.bf16.mxu0 0
      %1751 = vmatpush1.bf16.xpose.msra.mxu0 %v1734
      %1752 = vmatprep.subr.bf16.mxu0 0
      %1753 = vmatpush1.bf16.xpose.msra.mxu0 0
      %1754 = vmatprep.subr.bf16.mxu0 0
      %1755 = vmatpush1.bf16.xpose.msra.mxu0 0
      %1756 = vmatprep.subr.bf16.mxu0 0
      %1757 = vmatpush1.bf16.xpose.msra.mxu0 0
      %1758 = vmatprep.subr.bf16.mxu0 0
      %1759 = vmatpush1.bf16.xpose.msra.mxu0 0
      %1760 = vmatprep.subr.bf16.mxu0 0
      %1761 = vmatpush1.bf16.xpose.msra.mxu0 0
      %1762 = vmatprep.subr.bf16.mxu0 0
      %1763 = vmatpush1.bf16.xpose.msra.mxu0 0
      %1764 = vmatprep.subr.bf16.mxu0 0
      %1765 = vmatpush1.bf16.xpose.msra.mxu0 0
      %1766 = vmatprep.subr.bf16.mxu0 0
      %1767 = vmatpush1.bf16.xpose.msra.mxu0 0
      %1768 = vmatprep.mubr.bf16.mxu0 0
      %1769 = vmatmul.mubr.bf16.gmra.mrb[0].mxu0 %v1689
      %v1770 = vpop.f32.mrb[0].mxu0
      %v1771 = vadd.f32 %v752, %v1770
      %v1772 = vpop.f32.mrb[0].mxu0
      %v1773 = vpop.f32.mrb[0].mxu0
      %v1774 = vadd.f32 %v752, %v1773
      %v1775 = vpop.f32.mrb[0].mxu0
      %1776 = vmatprep.mubr.bf16.mxu0 0
      %1777 = vmatmul.mubr.bf16.gmra.mrb[0].mxu0 %v1692
      %v1778 = vpop.f32.mrb[0].mxu0
      %v1779 = vadd.f32 %v752, %v1778
      %v1780 = vpop.f32.mrb[0].mxu0
      %v1781 = vpop.f32.mrb[0].mxu0
      %v1782 = vadd.f32 %v752, %v1781
      %v1783 = vpop.f32.mrb[0].mxu0
      %1784 = vmatprep.mubr.bf16.mxu0 0
      %1785 = vmatmul.mubr.bf16.gmra.mrb[0].mxu0 %v1695
      %v1786 = vpop.f32.mrb[0].mxu0
      %v1787 = vadd.f32 %v752, %v1786
      %v1788 = vpop.f32.mrb[0].mxu0
      %v1789 = vpop.f32.mrb[0].mxu0
      %v1790 = vadd.f32 %v752, %v1789
      %v1791 = vpop.f32.mrb[0].mxu0
      %1792 = vmatprep.mubr.bf16.mxu0 0
      %1793 = vmatmul.mubr.bf16.gmra.mrb[0].mxu0 %v1698
      %v1794 = vpop.f32.mrb[0].mxu0
      %v1795 = vadd.f32 %v752, %v1794
      %v1796 = vpop.f32.mrb[0].mxu0
      %v1797 = vpop.f32.mrb[0].mxu0
      %v1798 = vadd.f32 %v752, %v1797
      %v1799 = vpop.f32.mrb[0].mxu0
      %1800 = vmatprep.mubr.bf16.mxu0 0
      %1801 = vmatmul.mubr.bf16.gmra.mrb[0].mxu0 %v1701
      %v1802 = vpop.f32.mrb[0].mxu0
      %v1803 = vadd.f32 %v752, %v1802
      %v1804 = vpop.f32.mrb[0].mxu0
      %v1805 = vpop.f32.mrb[0].mxu0
      %v1806 = vadd.f32 %v752, %v1805
      %v1807 = vpop.f32.mrb[0].mxu0
      %1808 = vmatprep.mubr.bf16.mxu0 0
      %1809 = vmatmul.mubr.bf16.gmra.mrb[0].mxu0 %v1704
      %v1810 = vpop.f32.mrb[0].mxu0
      %v1811 = vadd.f32 %v752, %v1810
      %v1812 = vpop.f32.mrb[0].mxu0
      %v1813 = vpop.f32.mrb[0].mxu0
      %v1814 = vadd.f32 %v752, %v1813
      %v1815 = vpop.f32.mrb[0].mxu0
      %1816 = vmatprep.mubr.bf16.mxu0 0
      %1817 = vmatmul.mubr.bf16.gmra.mrb[0].mxu0 %v1707
      %v1818 = vpop.f32.mrb[0].mxu0
      %v1819 = vadd.f32 %v752, %v1818
      %v1820 = vpop.f32.mrb[0].mxu0
      %v1821 = vpop.f32.mrb[0].mxu0
      %v1822 = vadd.f32 %v752, %v1821
      %v1823 = vpop.f32.mrb[0].mxu0
      %1824 = vmatprep.mubr.bf16.mxu0 0
      %1825 = vmatmul.mubr.bf16.gmra.mrb[0].mxu0 %v1710
      %v1826 = vpop.f32.mrb[0].mxu0
      %v1827 = vadd.f32 %v752, %v1826
      %v1828 = vpop.f32.mrb[0].mxu0
      %v1829 = vpop.f32.mrb[0].mxu0
      %v1830 = vadd.f32 %v752, %v1829
      %v1831 = vpop.f32.mrb[0].mxu0
      %1832 = vdwg.mxu0
      %1833 = vmax.xlane.f32.xlu0 %v1771
      %v1834 = vpop.xlane.xlu0 %1833
      %1835 = vmax.xlane.f32.xlu0 %v1774
      %v1836 = vpop.xlane.xlu0 %1835
      %1837 = vmax.xlane.f32.xlu0 %v1779
      %v1838 = vpop.xlane.xlu0 %1837
      %1839 = vmax.xlane.f32.xlu0 %v1782
      %v1840 = vpop.xlane.xlu0 %1839
      %1841 = vmax.xlane.f32.xlu0 %v1787
      %v1842 = vpop.xlane.xlu0 %1841
      %1843 = vmax.xlane.f32.xlu0 %v1790
      %v1844 = vpop.xlane.xlu0 %1843
      %1845 = vmax.xlane.f32.xlu0 %v1795
      %v1846 = vpop.xlane.xlu0 %1845
      %1847 = vmax.xlane.f32.xlu0 %v1798
      %v1848 = vpop.xlane.xlu0 %1847
      %1849 = vmax.xlane.f32.xlu0 %v1803
      %v1850 = vpop.xlane.xlu0 %1849
      %1851 = vmax.xlane.f32.xlu0 %v1806
      %v1852 = vpop.xlane.xlu0 %1851
      %1853 = vmax.xlane.f32.xlu0 %v1811
      %v1854 = vpop.xlane.xlu0 %1853
      %1855 = vmax.xlane.f32.xlu0 %v1814
      %v1856 = vpop.xlane.xlu0 %1855
      %1857 = vmax.xlane.f32.xlu0 %v1819
      %v1858 = vpop.xlane.xlu0 %1857
      %1859 = vmax.xlane.f32.xlu0 %v1822
      %v1860 = vpop.xlane.xlu0 %1859
      %1861 = vmax.xlane.f32.xlu0 %v1827
      %v1862 = vpop.xlane.xlu0 %1861
      %1863 = vmax.xlane.f32.xlu0 %v1830
      %v1864 = vpop.xlane.xlu0 %1863
      %v1865 = vsub.f32 %v1771, %v1834
      %v1866 = vsub.f32 %v1774, %v1836
      %v1867 = vsub.f32 %v1779, %v1838
      %v1868 = vsub.f32 %v1782, %v1840
      %v1869 = vsub.f32 %v1787, %v1842
      %v1870 = vsub.f32 %v1790, %v1844
      %v1871 = vsub.f32 %v1795, %v1846
      %v1872 = vsub.f32 %v1798, %v1848
      %v1873 = vsub.f32 %v1803, %v1850
      %v1874 = vsub.f32 %v1806, %v1852
      %v1875 = vsub.f32 %v1811, %v1854
      %v1876 = vsub.f32 %v1814, %v1856
      %v1877 = vsub.f32 %v1819, %v1858
      %v1878 = vsub.f32 %v1822, %v1860
      %v1879 = vsub.f32 %v1827, %v1862
      %v1880 = vsub.f32 %v1830, %v1864
      %v1881 = vmul.f32 %v1865, 1.442695
      %v1882 = vpow.pop %v1881
      %v1883 = vmul.f32 %v1866, 1.442695
      %v1884 = vpow.pop %v1883
      %v1885 = vmul.f32 %v1867, 1.442695
      %v1886 = vpow.pop %v1885
      %v1887 = vmul.f32 %v1868, 1.442695
      %v1888 = vpow.pop %v1887
      %v1889 = vmul.f32 %v1869, 1.442695
      %v1890 = vpow.pop %v1889
      %v1891 = vmul.f32 %v1870, 1.442695
      %v1892 = vpow.pop %v1891
      %v1893 = vmul.f32 %v1871, 1.442695
      %v1894 = vpow.pop %v1893
      %v1895 = vmul.f32 %v1872, 1.442695
      %v1896 = vpow.pop %v1895
      %v1897 = vmul.f32 %v1873, 1.442695
      %v1898 = vpow.pop %v1897
      %v1899 = vmul.f32 %v1874, 1.442695
      %v1900 = vpow.pop %v1899
      %v1901 = vmul.f32 %v1875, 1.442695
      %v1902 = vpow.pop %v1901
      %v1903 = vmul.f32 %v1876, 1.442695
      %v1904 = vpow.pop %v1903
      %v1905 = vmul.f32 %v1877, 1.442695
      %v1906 = vpow.pop %v1905
      %v1907 = vmul.f32 %v1878, 1.442695
      %v1908 = vpow.pop %v1907
      %v1909 = vmul.f32 %v1879, 1.442695
      %v1910 = vpow.pop %v1909
      %v1911 = vmul.f32 %v1880, 1.442695
      %v1912 = vpow.pop %v1911
      %1913 = vadd.xlane.f32.xlu0 %v1882
      %v1914 = vpop.xlane.xlu0 %1913
      %1915 = vadd.xlane.f32.xlu0 %v1884
      %v1916 = vpop.xlane.xlu0 %1915
      %1917 = vadd.xlane.f32.xlu0 %v1886
      %v1918 = vpop.xlane.xlu0 %1917
      %1919 = vadd.xlane.f32.xlu0 %v1888
      %v1920 = vpop.xlane.xlu0 %1919
      %1921 = vadd.xlane.f32.xlu0 %v1890
      %v1922 = vpop.xlane.xlu0 %1921
      %1923 = vadd.xlane.f32.xlu0 %v1892
      %v1924 = vpop.xlane.xlu0 %1923
      %1925 = vadd.xlane.f32.xlu0 %v1894
      %v1926 = vpop.xlane.xlu0 %1925
      %1927 = vadd.xlane.f32.xlu0 %v1896
      %v1928 = vpop.xlane.xlu0 %1927
      %1929 = vadd.xlane.f32.xlu0 %v1898
      %v1930 = vpop.xlane.xlu0 %1929
      %1931 = vadd.xlane.f32.xlu0 %v1900
      %v1932 = vpop.xlane.xlu0 %1931
      %1933 = vadd.xlane.f32.xlu0 %v1902
      %v1934 = vpop.xlane.xlu0 %1933
      %1935 = vadd.xlane.f32.xlu0 %v1904
      %v1936 = vpop.xlane.xlu0 %1935
      %1937 = vadd.xlane.f32.xlu0 %v1906
      %v1938 = vpop.xlane.xlu0 %1937
      %1939 = vadd.xlane.f32.xlu0 %v1908
      %v1940 = vpop.xlane.xlu0 %1939
      %1941 = vadd.xlane.f32.xlu0 %v1910
      %v1942 = vpop.xlane.xlu0 %1941
      %1943 = vadd.xlane.f32.xlu0 %v1912
      %v1944 = vpop.xlane.xlu0 %1943
      %v1945 = vrcp.pop %v1914
      %v1946 = vrcp.pop %v1916
      %v1947 = vrcp.pop %v1918
      %v1948 = vrcp.pop %v1920
      %v1949 = vrcp.pop %v1922
      %v1950 = vrcp.pop %v1924
      %v1951 = vrcp.pop %v1926
      %v1952 = vrcp.pop %v1928
      %v1953 = vrcp.pop %v1930
      %v1954 = vrcp.pop %v1932
      %v1955 = vrcp.pop %v1934
      %v1956 = vrcp.pop %v1936
      %v1957 = vrcp.pop %v1938
      %v1958 = vrcp.pop %v1940
      %v1959 = vrcp.pop %v1942
      %v1960 = vrcp.pop %v1944
      %v1961 = vmul.f32 %v1882, %v1945
      %v1962 = vmul.f32 %v1884, %v1946
      %v1963 = vmul.f32 %v1886, %v1947
      %v1964 = vmul.f32 %v1888, %v1948
      %v1965 = vmul.f32 %v1890, %v1949
      %v1966 = vmul.f32 %v1892, %v1950
      %v1967 = vmul.f32 %v1894, %v1951
      %v1968 = vmul.f32 %v1896, %v1952
      %v1969 = vmul.f32 %v1898, %v1953
      %v1970 = vmul.f32 %v1900, %v1954
      %v1971 = vmul.f32 %v1902, %v1955
      %v1972 = vmul.f32 %v1904, %v1956
      %v1973 = vmul.f32 %v1906, %v1957
      %v1974 = vmul.f32 %v1908, %v1958
      %v1975 = vmul.f32 %v1910, %v1959
      %v1976 = vmul.f32 %v1912, %v1960
      %v1977 = vadd.f32 %v1495, %v1961
      %v1978 = vadd.f32 %v1496, %v1962
      %v1979 = vadd.f32 %v1497, %v1963
      %v1980 = vadd.f32 %v1498, %v1964
      %v1981 = vadd.f32 %v1499, %v1965
      %v1982 = vadd.f32 %v1500, %v1966
      %v1983 = vadd.f32 %v1501, %v1967
      %v1984 = vadd.f32 %v1502, %v1968
      %v1985 = vadd.f32 %v1503, %v1969
      %v1986 = vadd.f32 %v1504, %v1970
      %v1987 = vadd.f32 %v1505, %v1971
      %v1988 = vadd.f32 %v1506, %v1972
      %v1989 = vadd.f32 %v1507, %v1973
      %v1990 = vadd.f32 %v1508, %v1974
      %v1991 = vadd.f32 %v1509, %v1975
      %v1992 = vadd.f32 %v1510, %v1976
      %v1993 = vpack.c.bf16 %v1962, %v1961
      %v1994 = vpack.c.bf16 %v1964, %v1963
      %v1995 = vpack.c.bf16 %v1966, %v1965
      %v1996 = vpack.c.bf16 %v1968, %v1967
      %v1997 = vpack.c.bf16 %v1970, %v1969
      %v1998 = vpack.c.bf16 %v1972, %v1971
      %v1999 = vpack.c.bf16 %v1974, %v1973
      %v2000 = vpack.c.bf16 %v1976, %v1975
      %2001 = vrot.lane.b32.xlu0 %v1185, 56
      %v2002 = vpop.permute.xlu0 %2001
      %2003 = vrot.lane.b32.xlu0 %v1186, 56
      %v2004 = vpop.permute.xlu0 %2003
      %2005 = vrot.lane.b32.xlu0 %v1187, 56
      %v2006 = vpop.permute.xlu0 %2005
      %2007 = vrot.lane.b32.xlu0 %v1188, 56
      %v2008 = vpop.permute.xlu0 %2007
      %2009 = vrot.lane.b32.xlu0 %v1189, 56
      %v2010 = vpop.permute.xlu0 %2009
      %2011 = vrot.lane.b32.xlu0 %v1190, 56
      %v2012 = vpop.permute.xlu0 %2011
      %2013 = vrot.lane.b32.xlu0 %v1191, 56
      %v2014 = vpop.permute.xlu0 %2013
      %2015 = vrot.lane.b32.xlu0 %v1192, 56
      %v2016 = vpop.permute.xlu0 %2015
      %2025 = vmatprep.subr.bf16.mxu0 0
      %2026 = vmatpush1.bf16.msra.mxu0 %v2002
      %2027 = vmatprep.subr.bf16.mxu0 0
      %2028 = vmatpush1.bf16.msra.mxu0 %v2004
      %2029 = vmatprep.subr.bf16.mxu0 0
      %2030 = vmatpush1.bf16.msra.mxu0 %v2006
      %2031 = vmatprep.subr.bf16.mxu0 0
      %2032 = vmatpush1.bf16.msra.mxu0 %v2008
      %2033 = vmatprep.subr.bf16.mxu0 0
      %2034 = vmatpush1.bf16.msra.mxu0 %v2010
      %2035 = vmatprep.subr.bf16.mxu0 0
      %2036 = vmatpush1.bf16.msra.mxu0 %v2012
      %2037 = vmatprep.subr.bf16.mxu0 0
      %2038 = vmatpush1.bf16.msra.mxu0 %v2014
      %2039 = vmatprep.subr.bf16.mxu0 0
      %2040 = vmatpush1.bf16.msra.mxu0 %v2016
      %2041 = vmatprep.subr.bf16.mxu0 0
      %2042 = vmatpush1.bf16.msra.mxu0 0
      %2043 = vmatprep.subr.bf16.mxu0 0
      %2044 = vmatpush1.bf16.msra.mxu0 0
      %2045 = vmatprep.subr.bf16.mxu0 0
      %2046 = vmatpush1.bf16.msra.mxu0 0
      %2047 = vmatprep.subr.bf16.mxu0 0
      %2048 = vmatpush1.bf16.msra.mxu0 0
      %2049 = vmatprep.subr.bf16.mxu0 0
      %2050 = vmatpush1.bf16.msra.mxu0 0
      %2051 = vmatprep.subr.bf16.mxu0 0
      %2052 = vmatpush1.bf16.msra.mxu0 0
      %2053 = vmatprep.subr.bf16.mxu0 0
      %2054 = vmatpush1.bf16.msra.mxu0 0
      %2055 = vmatprep.subr.bf16.mxu0 0
      %2056 = vmatpush1.bf16.msra.mxu0 0
      %2057 = vmatprep.mubr.bf16.mxu0 0
      %2058 = vmatmul.mubr.bf16.gmra.mrb[0].mxu0 %v1993
      %v2059 = vpop.f32.mrb[0].mxu0
      %v2060 = vadd.f32 0.0, %v2059
      %v2061 = vpop.f32.mrb[0].mxu0
      %v2062 = vpop.f32.mrb[0].mxu0
      %v2063 = vadd.f32 0.0, %v2062
      %v2064 = vpop.f32.mrb[0].mxu0
      %2065 = vmatprep.mubr.bf16.mxu0 0
      %2066 = vmatmul.mubr.bf16.gmra.mrb[0].mxu0 %v1994
      %v2067 = vpop.f32.mrb[0].mxu0
      %v2068 = vadd.f32 0.0, %v2067
      %v2069 = vpop.f32.mrb[0].mxu0
      %v2070 = vpop.f32.mrb[0].mxu0
      %v2071 = vadd.f32 0.0, %v2070
      %v2072 = vpop.f32.mrb[0].mxu0
      %2073 = vmatprep.mubr.bf16.mxu0 0
      %2074 = vmatmul.mubr.bf16.gmra.mrb[0].mxu0 %v1995
      %v2075 = vpop.f32.mrb[0].mxu0
      %v2076 = vadd.f32 0.0, %v2075
      %v2077 = vpop.f32.mrb[0].mxu0
      %v2078 = vpop.f32.mrb[0].mxu0
      %v2079 = vadd.f32 0.0, %v2078
      %v2080 = vpop.f32.mrb[0].mxu0
      %2081 = vmatprep.mubr.bf16.mxu0 0
      %2082 = vmatmul.mubr.bf16.gmra.mrb[0].mxu0 %v1996
      %v2083 = vpop.f32.mrb[0].mxu0
      %v2084 = vadd.f32 0.0, %v2083
      %v2085 = vpop.f32.mrb[0].mxu0
      %v2086 = vpop.f32.mrb[0].mxu0
      %v2087 = vadd.f32 0.0, %v2086
      %v2088 = vpop.f32.mrb[0].mxu0
      %2089 = vmatprep.mubr.bf16.mxu0 0
      %2090 = vmatmul.mubr.bf16.gmra.mrb[0].mxu0 %v1997
      %v2091 = vpop.f32.mrb[0].mxu0
      %v2092 = vadd.f32 0.0, %v2091
      %v2093 = vpop.f32.mrb[0].mxu0
      %v2094 = vpop.f32.mrb[0].mxu0
      %v2095 = vadd.f32 0.0, %v2094
      %v2096 = vpop.f32.mrb[0].mxu0
      %2097 = vmatprep.mubr.bf16.mxu0 0
      %2098 = vmatmul.mubr.bf16.gmra.mrb[0].mxu0 %v1998
      %v2099 = vpop.f32.mrb[0].mxu0
      %v2100 = vadd.f32 0.0, %v2099
      %v2101 = vpop.f32.mrb[0].mxu0
      %v2102 = vpop.f32.mrb[0].mxu0
      %v2103 = vadd.f32 0.0, %v2102
      %v2104 = vpop.f32.mrb[0].mxu0
      %2105 = vmatprep.mubr.bf16.mxu0 0
      %2106 = vmatmul.mubr.bf16.gmra.mrb[0].mxu0 %v1999
      %v2107 = vpop.f32.mrb[0].mxu0
      %v2108 = vadd.f32 0.0, %v2107
      %v2109 = vpop.f32.mrb[0].mxu0
      %v2110 = vpop.f32.mrb[0].mxu0
      %v2111 = vadd.f32 0.0, %v2110
      %v2112 = vpop.f32.mrb[0].mxu0
      %2113 = vmatprep.mubr.bf16.mxu0 0
      %2114 = vmatmul.mubr.bf16.gmra.mrb[0].mxu0 %v2000
      %v2115 = vpop.f32.mrb[0].mxu0
      %v2116 = vadd.f32 0.0, %v2115
      %v2117 = vpop.f32.mrb[0].mxu0
      %v2118 = vpop.f32.mrb[0].mxu0
      %v2119 = vadd.f32 0.0, %v2118
      %v2120 = vpop.f32.mrb[0].mxu0
      %2121 = vdwg.mxu0
      %v2122 = vpack.c.bf16 %v2063, %v2060
      %v2123 = vpack.c.bf16 %v2071, %v2068
      %v2124 = vpack.c.bf16 %v2079, %v2076
      %v2125 = vpack.c.bf16 %v2087, %v2084
      %v2126 = vpack.c.bf16 %v2095, %v2092
      %v2127 = vpack.c.bf16 %v2103, %v2100
      %v2128 = vpack.c.bf16 %v2111, %v2108
      %v2129 = vpack.c.bf16 %v2119, %v2116
      %v2131 = vsel %vm1221, %v2122, 0
      %v2134 = vsel %vm1221, %v2123, 0
      %v2137 = vsel %vm1221, %v2124, 0
      %v2140 = vsel %vm1221, %v2125, 0
      %v2143 = vsel %vm1221, %v2126, 0
      %v2146 = vsel %vm1221, %v2127, 0
      %v2149 = vsel %vm1221, %v2128, 0
      %v2152 = vsel %vm1221, %v2129, 0
      %vm2154 = vcmask 1043456
      %v2156 = vsel %vm2154, %v1194, 0
      %2158 = vmatprep.subr.bf16.mxu0 0
      %2159 = vmatpush1.bf16.msra.mxu0 %v2156
      %2160 = vmatprep.subr.bf16.mxu0 0
      %2161 = vmatpush1.bf16.msra.mxu0 0
      %2162 = vmatprep.subr.bf16.mxu0 0
      %2163 = vmatpush1.bf16.msra.mxu0 0
      %2164 = vmatprep.subr.bf16.mxu0 0
      %2165 = vmatpush1.bf16.msra.mxu0 0
      %2166 = vmatprep.subr.bf16.mxu0 0
      %2167 = vmatpush1.bf16.msra.mxu0 0
      %2168 = vmatprep.subr.bf16.mxu0 0
      %2169 = vmatpush1.bf16.msra.mxu0 0
      %2170 = vmatprep.subr.bf16.mxu0 0
      %2171 = vmatpush1.bf16.msra.mxu0 0
      %2172 = vmatprep.subr.bf16.mxu0 0
      %2173 = vmatpush1.bf16.msra.mxu0 0
      %2174 = vmatprep.subr.bf16.mxu0 0
      %2175 = vmatpush1.bf16.msra.mxu0 0
      %2176 = vmatprep.subr.bf16.mxu0 0
      %2177 = vmatpush1.bf16.msra.mxu0 0
      %2178 = vmatprep.subr.bf16.mxu0 0
      %2179 = vmatpush1.bf16.msra.mxu0 0
      %2180 = vmatprep.subr.bf16.mxu0 0
      %2181 = vmatpush1.bf16.msra.mxu0 0
      %2182 = vmatprep.subr.bf16.mxu0 0
      %2183 = vmatpush1.bf16.msra.mxu0 0
      %2184 = vmatprep.subr.bf16.mxu0 0
      %2185 = vmatpush1.bf16.msra.mxu0 0
      %2186 = vmatprep.subr.bf16.mxu0 0
      %2187 = vmatpush1.bf16.msra.mxu0 0
      %2188 = vmatprep.subr.bf16.mxu0 0
      %2189 = vmatpush1.bf16.msra.mxu0 0
      %2190 = vmatprep.mubr.bf16.mxu0 0
      %2191 = vmatmul.mubr.bf16.gmra.mrb[0].mxu0 %v2131
      %v2192 = vpop.f32.mrb[0].mxu0
      %v2193 = vadd.f32 0.0, %v2192
      %v2194 = vpop.f32.mrb[0].mxu0
      %v2195 = vpop.f32.mrb[0].mxu0
      %v2196 = vadd.f32 0.0, %v2195
      %v2197 = vpop.f32.mrb[0].mxu0
      %2198 = vmatprep.mubr.bf16.mxu0 0
      %2199 = vmatmul.mubr.bf16.gmra.mrb[0].mxu0 %v2134
      %v2200 = vpop.f32.mrb[0].mxu0
      %v2201 = vadd.f32 0.0, %v2200
      %v2202 = vpop.f32.mrb[0].mxu0
      %v2203 = vpop.f32.mrb[0].mxu0
      %v2204 = vadd.f32 0.0, %v2203
      %v2205 = vpop.f32.mrb[0].mxu0
      %2206 = vmatprep.mubr.bf16.mxu0 0
      %2207 = vmatmul.mubr.bf16.gmra.mrb[0].mxu0 %v2137
      %v2208 = vpop.f32.mrb[0].mxu0
      %v2209 = vadd.f32 0.0, %v2208
      %v2210 = vpop.f32.mrb[0].mxu0
      %v2211 = vpop.f32.mrb[0].mxu0
      %v2212 = vadd.f32 0.0, %v2211
      %v2213 = vpop.f32.mrb[0].mxu0
      %2214 = vmatprep.mubr.bf16.mxu0 0
      %2215 = vmatmul.mubr.bf16.gmra.mrb[0].mxu0 %v2140
      %v2216 = vpop.f32.mrb[0].mxu0
      %v2217 = vadd.f32 0.0, %v2216
      %v2218 = vpop.f32.mrb[0].mxu0
      %v2219 = vpop.f32.mrb[0].mxu0
      %v2220 = vadd.f32 0.0, %v2219
      %v2221 = vpop.f32.mrb[0].mxu0
      %2222 = vmatprep.mubr.bf16.mxu0 0
      %2223 = vmatmul.mubr.bf16.gmra.mrb[0].mxu0 %v2143
      %v2224 = vpop.f32.mrb[0].mxu0
      %v2225 = vadd.f32 0.0, %v2224
      %v2226 = vpop.f32.mrb[0].mxu0
      %v2227 = vpop.f32.mrb[0].mxu0
      %v2228 = vadd.f32 0.0, %v2227
      %v2229 = vpop.f32.mrb[0].mxu0
      %2230 = vmatprep.mubr.bf16.mxu0 0
      %2231 = vmatmul.mubr.bf16.gmra.mrb[0].mxu0 %v2146
      %v2232 = vpop.f32.mrb[0].mxu0
      %v2233 = vadd.f32 0.0, %v2232
      %v2234 = vpop.f32.mrb[0].mxu0
      %v2235 = vpop.f32.mrb[0].mxu0
      %v2236 = vadd.f32 0.0, %v2235
      %v2237 = vpop.f32.mrb[0].mxu0
      %2238 = vmatprep.mubr.bf16.mxu0 0
      %2239 = vmatmul.mubr.bf16.gmra.mrb[0].mxu0 %v2149
      %v2240 = vpop.f32.mrb[0].mxu0
      %v2241 = vadd.f32 0.0, %v2240
      %v2242 = vpop.f32.mrb[0].mxu0
      %v2243 = vpop.f32.mrb[0].mxu0
      %v2244 = vadd.f32 0.0, %v2243
      %v2245 = vpop.f32.mrb[0].mxu0
      %2246 = vmatprep.mubr.bf16.mxu0 0
      %2247 = vmatmul.mubr.bf16.gmra.mrb[0].mxu0 %v2152
      %v2248 = vpop.f32.mrb[0].mxu0
      %v2249 = vadd.f32 0.0, %v2248
      %v2250 = vpop.f32.mrb[0].mxu0
      %v2251 = vpop.f32.mrb[0].mxu0
      %v2252 = vadd.f32 0.0, %v2251
      %v2253 = vpop.f32.mrb[0].mxu0
      %2254 = vdwg.mxu0
      %v2256 = vsel %vm1221, %v1640, 0
      %v2259 = vsel %vm1221, %v1641, 0
      %v2262 = vsel %vm1221, %v1642, 0
      %v2265 = vsel %vm1221, %v1643, 0
      %v2268 = vsel %vm1221, %v1644, 0
      %v2271 = vsel %vm1221, %v1645, 0
      %v2274 = vsel %vm1221, %v1646, 0
      %v2277 = vsel %vm1221, %v1647, 0
      %v2280 = vsel %vm2154, %v1193, 0
      %2282 = vmatprep.subr.bf16.mxu0 0
      %2283 = vmatpush1.bf16.msra.mxu0 %v2280
      %2284 = vmatprep.subr.bf16.mxu0 0
      %2285 = vmatpush1.bf16.msra.mxu0 0
      %2286 = vmatprep.subr.bf16.mxu0 0
      %2287 = vmatpush1.bf16.msra.mxu0 0
      %2288 = vmatprep.subr.bf16.mxu0 0
      %2289 = vmatpush1.bf16.msra.mxu0 0
      %2290 = vmatprep.subr.bf16.mxu0 0
      %2291 = vmatpush1.bf16.msra.mxu0 0
      %2292 = vmatprep.subr.bf16.mxu0 0
      %2293 = vmatpush1.bf16.msra.mxu0 0
      %2294 = vmatprep.subr.bf16.mxu0 0
      %2295 = vmatpush1.bf16.msra.mxu0 0
      %2296 = vmatprep.subr.bf16.mxu0 0
      %2297 = vmatpush1.bf16.msra.mxu0 0
      %2298 = vmatprep.subr.bf16.mxu0 0
      %2299 = vmatpush1.bf16.msra.mxu0 0
      %2300 = vmatprep.subr.bf16.mxu0 0
      %2301 = vmatpush1.bf16.msra.mxu0 0
      %2302 = vmatprep.subr.bf16.mxu0 0
      %2303 = vmatpush1.bf16.msra.mxu0 0
      %2304 = vmatprep.subr.bf16.mxu0 0
      %2305 = vmatpush1.bf16.msra.mxu0 0
      %2306 = vmatprep.subr.bf16.mxu0 0
      %2307 = vmatpush1.bf16.msra.mxu0 0
      %2308 = vmatprep.subr.bf16.mxu0 0
      %2309 = vmatpush1.bf16.msra.mxu0 0
      %2310 = vmatprep.subr.bf16.mxu0 0
      %2311 = vmatpush1.bf16.msra.mxu0 0
      %2312 = vmatprep.subr.bf16.mxu0 0
      %2313 = vmatpush1.bf16.msra.mxu0 0
      %2314 = vmatprep.mubr.bf16.mxu0 0
      %2315 = vmatmul.mubr.bf16.gmra.mrb[0].mxu0 %v2256
      %v2316 = vpop.f32.mrb[0].mxu0
      %v2317 = vadd.f32 %v2193, %v2316
      %v2318 = vpop.f32.mrb[0].mxu0
      %v2319 = vpop.f32.mrb[0].mxu0
      %v2320 = vadd.f32 %v2196, %v2319
      %v2321 = vpop.f32.mrb[0].mxu0
      %2322 = vmatprep.mubr.bf16.mxu0 0
      %2323 = vmatmul.mubr.bf16.gmra.mrb[0].mxu0 %v2259
      %v2324 = vpop.f32.mrb[0].mxu0
      %v2325 = vadd.f32 %v2201, %v2324
      %v2326 = vpop.f32.mrb[0].mxu0
      %v2327 = vpop.f32.mrb[0].mxu0
      %v2328 = vadd.f32 %v2204, %v2327
      %v2329 = vpop.f32.mrb[0].mxu0
      %2330 = vmatprep.mubr.bf16.mxu0 0
      %2331 = vmatmul.mubr.bf16.gmra.mrb[0].mxu0 %v2262
      %v2332 = vpop.f32.mrb[0].mxu0
      %v2333 = vadd.f32 %v2209, %v2332
      %v2334 = vpop.f32.mrb[0].mxu0
      %v2335 = vpop.f32.mrb[0].mxu0
      %v2336 = vadd.f32 %v2212, %v2335
      %v2337 = vpop.f32.mrb[0].mxu0
      %2338 = vmatprep.mubr.bf16.mxu0 0
      %2339 = vmatmul.mubr.bf16.gmra.mrb[0].mxu0 %v2265
      %v2340 = vpop.f32.mrb[0].mxu0
      %v2341 = vadd.f32 %v2217, %v2340
      %v2342 = vpop.f32.mrb[0].mxu0
      %v2343 = vpop.f32.mrb[0].mxu0
      %v2344 = vadd.f32 %v2220, %v2343
      %v2345 = vpop.f32.mrb[0].mxu0
      %2346 = vmatprep.mubr.bf16.mxu0 0
      %2347 = vmatmul.mubr.bf16.gmra.mrb[0].mxu0 %v2268
      %v2348 = vpop.f32.mrb[0].mxu0
      %v2349 = vadd.f32 %v2225, %v2348
      %v2350 = vpop.f32.mrb[0].mxu0
      %v2351 = vpop.f32.mrb[0].mxu0
      %v2352 = vadd.f32 %v2228, %v2351
      %v2353 = vpop.f32.mrb[0].mxu0
      %2354 = vmatprep.mubr.bf16.mxu0 0
      %2355 = vmatmul.mubr.bf16.gmra.mrb[0].mxu0 %v2271
      %v2356 = vpop.f32.mrb[0].mxu0
      %v2357 = vadd.f32 %v2233, %v2356
      %v2358 = vpop.f32.mrb[0].mxu0
      %v2359 = vpop.f32.mrb[0].mxu0
      %v2360 = vadd.f32 %v2236, %v2359
      %v2361 = vpop.f32.mrb[0].mxu0
      %2362 = vmatprep.mubr.bf16.mxu0 0
      %2363 = vmatmul.mubr.bf16.gmra.mrb[0].mxu0 %v2274
      %v2364 = vpop.f32.mrb[0].mxu0
      %v2365 = vadd.f32 %v2241, %v2364
      %v2366 = vpop.f32.mrb[0].mxu0
      %v2367 = vpop.f32.mrb[0].mxu0
      %v2368 = vadd.f32 %v2244, %v2367
      %v2369 = vpop.f32.mrb[0].mxu0
      %2370 = vmatprep.mubr.bf16.mxu0 0
      %2371 = vmatmul.mubr.bf16.gmra.mrb[0].mxu0 %v2277
      %v2372 = vpop.f32.mrb[0].mxu0
      %v2373 = vadd.f32 %v2249, %v2372
      %v2374 = vpop.f32.mrb[0].mxu0
      %v2375 = vpop.f32.mrb[0].mxu0
      %v2376 = vadd.f32 %v2252, %v2375
      %v2377 = vpop.f32.mrb[0].mxu0
      %2378 = vdwg.mxu0
      %2379 = vrot.lane.b32.xlu0 %v1177, 112
      %v2380 = vpop.permute.xlu0 %2379
      %2381 = vrot.lane.b32.xlu0 %v1178, 112
      %v2382 = vpop.permute.xlu0 %2381
      %2383 = vrot.lane.b32.xlu0 %v1179, 112
      %v2384 = vpop.permute.xlu0 %2383
      %2385 = vrot.lane.b32.xlu0 %v1180, 112
      %v2386 = vpop.permute.xlu0 %2385
      %2387 = vrot.lane.b32.xlu0 %v1181, 112
      %v2388 = vpop.permute.xlu0 %2387
      %2389 = vrot.lane.b32.xlu0 %v1182, 112
      %v2390 = vpop.permute.xlu0 %2389
      %2391 = vrot.lane.b32.xlu0 %v1183, 112
      %v2392 = vpop.permute.xlu0 %2391
      %2393 = vrot.lane.b32.xlu0 %v1184, 112
      %v2394 = vpop.permute.xlu0 %2393
      %2395 = vrot.lane.b32.xlu0 %v1185, 80
      %v2396 = vpop.permute.xlu0 %2395
      %2397 = vrot.lane.b32.xlu0 %v1186, 80
      %v2398 = vpop.permute.xlu0 %2397
      %2399 = vrot.lane.b32.xlu0 %v1187, 80
      %v2400 = vpop.permute.xlu0 %2399
      %2401 = vrot.lane.b32.xlu0 %v1188, 80
      %v2402 = vpop.permute.xlu0 %2401
      %2403 = vrot.lane.b32.xlu0 %v1189, 80
      %v2404 = vpop.permute.xlu0 %2403
      %2405 = vrot.lane.b32.xlu0 %v1190, 80
      %v2406 = vpop.permute.xlu0 %2405
      %2407 = vrot.lane.b32.xlu0 %v1191, 80
      %v2408 = vpop.permute.xlu0 %2407
      %2409 = vrot.lane.b32.xlu0 %v1192, 80
      %v2410 = vpop.permute.xlu0 %2409
      %v2412 = vsel %vm1221, %v2380, 0
      %v2415 = vsel %vm1221, %v2382, 0
      %v2418 = vsel %vm1221, %v2384, 0
      %v2421 = vsel %vm1221, %v2386, 0
      %v2424 = vsel %vm1221, %v2388, 0
      %v2427 = vsel %vm1221, %v2390, 0
      %v2430 = vsel %vm1221, %v2392, 0
      %v2433 = vsel %vm1221, %v2394, 0
      %v2436 = vsel %vm1221, %v2396, 0
      %v2439 = vsel %vm1221, %v2398, 0
      %v2442 = vsel %vm1221, %v2400, 0
      %v2445 = vsel %vm1221, %v2402, 0
      %v2448 = vsel %vm1221, %v2404, 0
      %v2451 = vsel %vm1221, %v2406, 0
      %v2454 = vsel %vm1221, %v2408, 0
      %v2457 = vsel %vm1221, %v2410, 0
      %2459 = vmatprep.subr.bf16.mxu0 0
      %2460 = vmatpush1.bf16.xpose.msra.mxu0 %v2436
      %2461 = vmatprep.subr.bf16.mxu0 0
      %2462 = vmatpush1.bf16.xpose.msra.mxu0 %v2439
      %2463 = vmatprep.subr.bf16.mxu0 0
      %2464 = vmatpush1.bf16.xpose.msra.mxu0 %v2442
      %2465 = vmatprep.subr.bf16.mxu0 0
      %2466 = vmatpush1.bf16.xpose.msra.mxu0 %v2445
      %2467 = vmatprep.subr.bf16.mxu0 0
      %2468 = vmatpush1.bf16.xpose.msra.mxu0 %v2448
      %2469 = vmatprep.subr.bf16.mxu0 0
      %2470 = vmatpush1.bf16.xpose.msra.mxu0 %v2451
      %2471 = vmatprep.subr.bf16.mxu0 0
      %2472 = vmatpush1.bf16.xpose.msra.mxu0 %v2454
      %2473 = vmatprep.subr.bf16.mxu0 0
      %2474 = vmatpush1.bf16.xpose.msra.mxu0 %v2457
      %2475 = vmatprep.subr.bf16.mxu0 0
      %2476 = vmatpush1.bf16.xpose.msra.mxu0 0
      %2477 = vmatprep.subr.bf16.mxu0 0
      %2478 = vmatpush1.bf16.xpose.msra.mxu0 0
      %2479 = vmatprep.subr.bf16.mxu0 0
      %2480 = vmatpush1.bf16.xpose.msra.mxu0 0
      %2481 = vmatprep.subr.bf16.mxu0 0
      %2482 = vmatpush1.bf16.xpose.msra.mxu0 0
      %2483 = vmatprep.subr.bf16.mxu0 0
      %2484 = vmatpush1.bf16.xpose.msra.mxu0 0
      %2485 = vmatprep.subr.bf16.mxu0 0
      %2486 = vmatpush1.bf16.xpose.msra.mxu0 0
      %2487 = vmatprep.subr.bf16.mxu0 0
      %2488 = vmatpush1.bf16.xpose.msra.mxu0 0
      %2489 = vmatprep.subr.bf16.mxu0 0
      %2490 = vmatpush1.bf16.xpose.msra.mxu0 0
      %2491 = vmatprep.mubr.bf16.mxu0 0
      %2492 = vmatmul.mubr.bf16.gmra.mrb[0].mxu0 %v2412
      %v2493 = vpop.f32.mrb[0].mxu0
      %v2494 = vadd.f32 %v752, %v2493
      %v2495 = vpop.f32.mrb[0].mxu0
      %v2496 = vpop.f32.mrb[0].mxu0
      %v2497 = vadd.f32 %v752, %v2496
      %v2498 = vpop.f32.mrb[0].mxu0
      %2499 = vmatprep.mubr.bf16.mxu0 0
      %2500 = vmatmul.mubr.bf16.gmra.mrb[0].mxu0 %v2415
      %v2501 = vpop.f32.mrb[0].mxu0
      %v2502 = vadd.f32 %v752, %v2501
      %v2503 = vpop.f32.mrb[0].mxu0
      %v2504 = vpop.f32.mrb[0].mxu0
      %v2505 = vadd.f32 %v752, %v2504
      %v2506 = vpop.f32.mrb[0].mxu0
      %2507 = vmatprep.mubr.bf16.mxu0 0
      %2508 = vmatmul.mubr.bf16.gmra.mrb[0].mxu0 %v2418
      %v2509 = vpop.f32.mrb[0].mxu0
      %v2510 = vadd.f32 %v752, %v2509
      %v2511 = vpop.f32.mrb[0].mxu0
      %v2512 = vpop.f32.mrb[0].mxu0
      %v2513 = vadd.f32 %v752, %v2512
      %v2514 = vpop.f32.mrb[0].mxu0
      %2515 = vmatprep.mubr.bf16.mxu0 0
      %2516 = vmatmul.mubr.bf16.gmra.mrb[0].mxu0 %v2421
      %v2517 = vpop.f32.mrb[0].mxu0
      %v2518 = vadd.f32 %v752, %v2517
      %v2519 = vpop.f32.mrb[0].mxu0
      %v2520 = vpop.f32.mrb[0].mxu0
      %v2521 = vadd.f32 %v752, %v2520
      %v2522 = vpop.f32.mrb[0].mxu0
      %2523 = vmatprep.mubr.bf16.mxu0 0
      %2524 = vmatmul.mubr.bf16.gmra.mrb[0].mxu0 %v2424
      %v2525 = vpop.f32.mrb[0].mxu0
      %v2526 = vadd.f32 %v752, %v2525
      %v2527 = vpop.f32.mrb[0].mxu0
      %v2528 = vpop.f32.mrb[0].mxu0
      %v2529 = vadd.f32 %v752, %v2528
      %v2530 = vpop.f32.mrb[0].mxu0
      %2531 = vmatprep.mubr.bf16.mxu0 0
      %2532 = vmatmul.mubr.bf16.gmra.mrb[0].mxu0 %v2427
      %v2533 = vpop.f32.mrb[0].mxu0
      %v2534 = vadd.f32 %v752, %v2533
      %v2535 = vpop.f32.mrb[0].mxu0
      %v2536 = vpop.f32.mrb[0].mxu0
      %v2537 = vadd.f32 %v752, %v2536
      %v2538 = vpop.f32.mrb[0].mxu0
      %2539 = vmatprep.mubr.bf16.mxu0 0
      %2540 = vmatmul.mubr.bf16.gmra.mrb[0].mxu0 %v2430
      %v2541 = vpop.f32.mrb[0].mxu0
      %v2542 = vadd.f32 %v752, %v2541
      %v2543 = vpop.f32.mrb[0].mxu0
      %v2544 = vpop.f32.mrb[0].mxu0
      %v2545 = vadd.f32 %v752, %v2544
      %v2546 = vpop.f32.mrb[0].mxu0
      %2547 = vmatprep.mubr.bf16.mxu0 0
      %2548 = vmatmul.mubr.bf16.gmra.mrb[0].mxu0 %v2433
      %v2549 = vpop.f32.mrb[0].mxu0
      %v2550 = vadd.f32 %v752, %v2549
      %v2551 = vpop.f32.mrb[0].mxu0
      %v2552 = vpop.f32.mrb[0].mxu0
      %v2553 = vadd.f32 %v752, %v2552
      %v2554 = vpop.f32.mrb[0].mxu0
      %2555 = vdwg.mxu0
      %2556 = vmax.xlane.f32.xlu0 %v2494
      %v2557 = vpop.xlane.xlu0 %2556
      %2558 = vmax.xlane.f32.xlu0 %v2497
      %v2559 = vpop.xlane.xlu0 %2558
      %2560 = vmax.xlane.f32.xlu0 %v2502
      %v2561 = vpop.xlane.xlu0 %2560
      %2562 = vmax.xlane.f32.xlu0 %v2505
      %v2563 = vpop.xlane.xlu0 %2562
      %2564 = vmax.xlane.f32.xlu0 %v2510
      %v2565 = vpop.xlane.xlu0 %2564
      %2566 = vmax.xlane.f32.xlu0 %v2513
      %v2567 = vpop.xlane.xlu0 %2566
      %2568 = vmax.xlane.f32.xlu0 %v2518
      %v2569 = vpop.xlane.xlu0 %2568
      %2570 = vmax.xlane.f32.xlu0 %v2521
      %v2571 = vpop.xlane.xlu0 %2570
      %2572 = vmax.xlane.f32.xlu0 %v2526
      %v2573 = vpop.xlane.xlu0 %2572
      %2574 = vmax.xlane.f32.xlu0 %v2529
      %v2575 = vpop.xlane.xlu0 %2574
      %2576 = vmax.xlane.f32.xlu0 %v2534
      %v2577 = vpop.xlane.xlu0 %2576
      %2578 = vmax.xlane.f32.xlu0 %v2537
      %v2579 = vpop.xlane.xlu0 %2578
      %2580 = vmax.xlane.f32.xlu0 %v2542
      %v2581 = vpop.xlane.xlu0 %2580
      %2582 = vmax.xlane.f32.xlu0 %v2545
      %v2583 = vpop.xlane.xlu0 %2582
      %2584 = vmax.xlane.f32.xlu0 %v2550
      %v2585 = vpop.xlane.xlu0 %2584
      %2586 = vmax.xlane.f32.xlu0 %v2553
      %v2587 = vpop.xlane.xlu0 %2586
      %v2588 = vsub.f32 %v2494, %v2557
      %v2589 = vsub.f32 %v2497, %v2559
      %v2590 = vsub.f32 %v2502, %v2561
      %v2591 = vsub.f32 %v2505, %v2563
      %v2592 = vsub.f32 %v2510, %v2565
      %v2593 = vsub.f32 %v2513, %v2567
      %v2594 = vsub.f32 %v2518, %v2569
      %v2595 = vsub.f32 %v2521, %v2571
      %v2596 = vsub.f32 %v2526, %v2573
      %v2597 = vsub.f32 %v2529, %v2575
      %v2598 = vsub.f32 %v2534, %v2577
      %v2599 = vsub.f32 %v2537, %v2579
      %v2600 = vsub.f32 %v2542, %v2581
      %v2601 = vsub.f32 %v2545, %v2583
      %v2602 = vsub.f32 %v2550, %v2585
      %v2603 = vsub.f32 %v2553, %v2587
      %v2604 = vmul.f32 %v2588, 1.442695
      %v2605 = vpow.pop %v2604
      %v2606 = vmul.f32 %v2589, 1.442695
      %v2607 = vpow.pop %v2606
      %v2608 = vmul.f32 %v2590, 1.442695
      %v2609 = vpow.pop %v2608
      %v2610 = vmul.f32 %v2591, 1.442695
      %v2611 = vpow.pop %v2610
      %v2612 = vmul.f32 %v2592, 1.442695
      %v2613 = vpow.pop %v2612
      %v2614 = vmul.f32 %v2593, 1.442695
      %v2615 = vpow.pop %v2614
      %v2616 = vmul.f32 %v2594, 1.442695
      %v2617 = vpow.pop %v2616
      %v2618 = vmul.f32 %v2595, 1.442695
      %v2619 = vpow.pop %v2618
      %v2620 = vmul.f32 %v2596, 1.442695
      %v2621 = vpow.pop %v2620
      %v2622 = vmul.f32 %v2597, 1.442695
      %v2623 = vpow.pop %v2622
      %v2624 = vmul.f32 %v2598, 1.442695
      %v2625 = vpow.pop %v2624
      %v2626 = vmul.f32 %v2599, 1.442695
      %v2627 = vpow.pop %v2626
      %v2628 = vmul.f32 %v2600, 1.442695
      %v2629 = vpow.pop %v2628
      %v2630 = vmul.f32 %v2601, 1.442695
      %v2631 = vpow.pop %v2630
      %v2632 = vmul.f32 %v2602, 1.442695
      %v2633 = vpow.pop %v2632
      %v2634 = vmul.f32 %v2603, 1.442695
      %v2635 = vpow.pop %v2634
      %2636 = vadd.xlane.f32.xlu0 %v2605
      %v2637 = vpop.xlane.xlu0 %2636
      %2638 = vadd.xlane.f32.xlu0 %v2607
      %v2639 = vpop.xlane.xlu0 %2638
      %2640 = vadd.xlane.f32.xlu0 %v2609
      %v2641 = vpop.xlane.xlu0 %2640
      %2642 = vadd.xlane.f32.xlu0 %v2611
      %v2643 = vpop.xlane.xlu0 %2642
      %2644 = vadd.xlane.f32.xlu0 %v2613
      %v2645 = vpop.xlane.xlu0 %2644
      %2646 = vadd.xlane.f32.xlu0 %v2615
      %v2647 = vpop.xlane.xlu0 %2646
      %2648 = vadd.xlane.f32.xlu0 %v2617
      %v2649 = vpop.xlane.xlu0 %2648
      %2650 = vadd.xlane.f32.xlu0 %v2619
      %v2651 = vpop.xlane.xlu0 %2650
      %2652 = vadd.xlane.f32.xlu0 %v2621
      %v2653 = vpop.xlane.xlu0 %2652
      %2654 = vadd.xlane.f32.xlu0 %v2623
      %v2655 = vpop.xlane.xlu0 %2654
      %2656 = vadd.xlane.f32.xlu0 %v2625
      %v2657 = vpop.xlane.xlu0 %2656
      %2658 = vadd.xlane.f32.xlu0 %v2627
      %v2659 = vpop.xlane.xlu0 %2658
      %2660 = vadd.xlane.f32.xlu0 %v2629
      %v2661 = vpop.xlane.xlu0 %2660
      %2662 = vadd.xlane.f32.xlu0 %v2631
      %v2663 = vpop.xlane.xlu0 %2662
      %2664 = vadd.xlane.f32.xlu0 %v2633
      %v2665 = vpop.xlane.xlu0 %2664
      %2666 = vadd.xlane.f32.xlu0 %v2635
      %v2667 = vpop.xlane.xlu0 %2666
      %v2668 = vrcp.pop %v2637
      %v2669 = vrcp.pop %v2639
      %v2670 = vrcp.pop %v2641
      %v2671 = vrcp.pop %v2643
      %v2672 = vrcp.pop %v2645
      %v2673 = vrcp.pop %v2647
      %v2674 = vrcp.pop %v2649
      %v2675 = vrcp.pop %v2651
      %v2676 = vrcp.pop %v2653
      %v2677 = vrcp.pop %v2655
      %v2678 = vrcp.pop %v2657
      %v2679 = vrcp.pop %v2659
      %v2680 = vrcp.pop %v2661
      %v2681 = vrcp.pop %v2663
      %v2682 = vrcp.pop %v2665
      %v2683 = vrcp.pop %v2667
      %v2684 = vmul.f32 %v2605, %v2668
      %v2685 = vmul.f32 %v2607, %v2669
      %v2686 = vmul.f32 %v2609, %v2670
      %v2687 = vmul.f32 %v2611, %v2671
      %v2688 = vmul.f32 %v2613, %v2672
      %v2689 = vmul.f32 %v2615, %v2673
      %v2690 = vmul.f32 %v2617, %v2674
      %v2691 = vmul.f32 %v2619, %v2675
      %v2692 = vmul.f32 %v2621, %v2676
      %v2693 = vmul.f32 %v2623, %v2677
      %v2694 = vmul.f32 %v2625, %v2678
      %v2695 = vmul.f32 %v2627, %v2679
      %v2696 = vmul.f32 %v2629, %v2680
      %v2697 = vmul.f32 %v2631, %v2681
      %v2698 = vmul.f32 %v2633, %v2682
      %v2699 = vmul.f32 %v2635, %v2683
      %v2700 = vadd.f32 %v1977, %v2684
      %v2701 = vadd.f32 %v1978, %v2685
      %v2702 = vadd.f32 %v1979, %v2686
      %v2703 = vadd.f32 %v1980, %v2687
      %v2704 = vadd.f32 %v1981, %v2688
      %v2705 = vadd.f32 %v1982, %v2689
      %v2706 = vadd.f32 %v1983, %v2690
      %v2707 = vadd.f32 %v1984, %v2691
      %v2708 = vadd.f32 %v1985, %v2692
      %v2709 = vadd.f32 %v1986, %v2693
      %v2710 = vadd.f32 %v1987, %v2694
      %v2711 = vadd.f32 %v1988, %v2695
      %v2712 = vadd.f32 %v1989, %v2696
      %v2713 = vadd.f32 %v1990, %v2697
      %v2714 = vadd.f32 %v1991, %v2698
      %v2715 = vadd.f32 %v1992, %v2699
      %v2716 = vpack.c.bf16 %v2685, %v2684
      %v2717 = vpack.c.bf16 %v2687, %v2686
      %v2718 = vpack.c.bf16 %v2689, %v2688
      %v2719 = vpack.c.bf16 %v2691, %v2690
      %v2720 = vpack.c.bf16 %v2693, %v2692
      %v2721 = vpack.c.bf16 %v2695, %v2694
      %v2722 = vpack.c.bf16 %v2697, %v2696
      %v2723 = vpack.c.bf16 %v2699, %v2698
      %2724 = vrot.lane.b32.xlu0 %v1185, 48
      %v2725 = vpop.permute.xlu0 %2724
      %2726 = vrot.lane.b32.xlu0 %v1186, 48
      %v2727 = vpop.permute.xlu0 %2726
      %2728 = vrot.lane.b32.xlu0 %v1187, 48
      %v2729 = vpop.permute.xlu0 %2728
      %2730 = vrot.lane.b32.xlu0 %v1188, 48
      %v2731 = vpop.permute.xlu0 %2730
      %2732 = vrot.lane.b32.xlu0 %v1189, 48
      %v2733 = vpop.permute.xlu0 %2732
      %2734 = vrot.lane.b32.xlu0 %v1190, 48
      %v2735 = vpop.permute.xlu0 %2734
      %2736 = vrot.lane.b32.xlu0 %v1191, 48
      %v2737 = vpop.permute.xlu0 %2736
      %2738 = vrot.lane.b32.xlu0 %v1192, 48
      %v2739 = vpop.permute.xlu0 %2738
      %2748 = vmatprep.subr.bf16.mxu0 0
      %2749 = vmatpush1.bf16.msra.mxu0 %v2725
      %2750 = vmatprep.subr.bf16.mxu0 0
      %2751 = vmatpush1.bf16.msra.mxu0 %v2727
      %2752 = vmatprep.subr.bf16.mxu0 0
      %2753 = vmatpush1.bf16.msra.mxu0 %v2729
      %2754 = vmatprep.subr.bf16.mxu0 0
      %2755 = vmatpush1.bf16.msra.mxu0 %v2731
      %2756 = vmatprep.subr.bf16.mxu0 0
      %2757 = vmatpush1.bf16.msra.mxu0 %v2733
      %2758 = vmatprep.subr.bf16.mxu0 0
      %2759 = vmatpush1.bf16.msra.mxu0 %v2735
      %2760 = vmatprep.subr.bf16.mxu0 0
      %2761 = vmatpush1.bf16.msra.mxu0 %v2737
      %2762 = vmatprep.subr.bf16.mxu0 0
      %2763 = vmatpush1.bf16.msra.mxu0 %v2739
      %2764 = vmatprep.subr.bf16.mxu0 0
      %2765 = vmatpush1.bf16.msra.mxu0 0
      %2766 = vmatprep.subr.bf16.mxu0 0
      %2767 = vmatpush1.bf16.msra.mxu0 0
      %2768 = vmatprep.subr.bf16.mxu0 0
      %2769 = vmatpush1.bf16.msra.mxu0 0
      %2770 = vmatprep.subr.bf16.mxu0 0
      %2771 = vmatpush1.bf16.msra.mxu0 0
      %2772 = vmatprep.subr.bf16.mxu0 0
      %2773 = vmatpush1.bf16.msra.mxu0 0
      %2774 = vmatprep.subr.bf16.mxu0 0
      %2775 = vmatpush1.bf16.msra.mxu0 0
      %2776 = vmatprep.subr.bf16.mxu0 0
      %2777 = vmatpush1.bf16.msra.mxu0 0
      %2778 = vmatprep.subr.bf16.mxu0 0
      %2779 = vmatpush1.bf16.msra.mxu0 0
      %2780 = vmatprep.mubr.bf16.mxu0 0
      %2781 = vmatmul.mubr.bf16.gmra.mrb[0].mxu0 %v2716
      %v2782 = vpop.f32.mrb[0].mxu0
      %v2783 = vadd.f32 0.0, %v2782
      %v2784 = vpop.f32.mrb[0].mxu0
      %v2785 = vpop.f32.mrb[0].mxu0
      %v2786 = vadd.f32 0.0, %v2785
      %v2787 = vpop.f32.mrb[0].mxu0
      %2788 = vmatprep.mubr.bf16.mxu0 0
      %2789 = vmatmul.mubr.bf16.gmra.mrb[0].mxu0 %v2717
      %v2790 = vpop.f32.mrb[0].mxu0
      %v2791 = vadd.f32 0.0, %v2790
      %v2792 = vpop.f32.mrb[0].mxu0
      %v2793 = vpop.f32.mrb[0].mxu0
      %v2794 = vadd.f32 0.0, %v2793
      %v2795 = vpop.f32.mrb[0].mxu0
      %2796 = vmatprep.mubr.bf16.mxu0 0
      %2797 = vmatmul.mubr.bf16.gmra.mrb[0].mxu0 %v2718
      %v2798 = vpop.f32.mrb[0].mxu0
      %v2799 = vadd.f32 0.0, %v2798
      %v2800 = vpop.f32.mrb[0].mxu0
      %v2801 = vpop.f32.mrb[0].mxu0
      %v2802 = vadd.f32 0.0, %v2801
      %v2803 = vpop.f32.mrb[0].mxu0
      %2804 = vmatprep.mubr.bf16.mxu0 0
      %2805 = vmatmul.mubr.bf16.gmra.mrb[0].mxu0 %v2719
      %v2806 = vpop.f32.mrb[0].mxu0
      %v2807 = vadd.f32 0.0, %v2806
      %v2808 = vpop.f32.mrb[0].mxu0
      %v2809 = vpop.f32.mrb[0].mxu0
      %v2810 = vadd.f32 0.0, %v2809
      %v2811 = vpop.f32.mrb[0].mxu0
      %2812 = vmatprep.mubr.bf16.mxu0 0
      %2813 = vmatmul.mubr.bf16.gmra.mrb[0].mxu0 %v2720
      %v2814 = vpop.f32.mrb[0].mxu0
      %v2815 = vadd.f32 0.0, %v2814
      %v2816 = vpop.f32.mrb[0].mxu0
      %v2817 = vpop.f32.mrb[0].mxu0
      %v2818 = vadd.f32 0.0, %v2817
      %v2819 = vpop.f32.mrb[0].mxu0
      %2820 = vmatprep.mubr.bf16.mxu0 0
      %2821 = vmatmul.mubr.bf16.gmra.mrb[0].mxu0 %v2721
      %v2822 = vpop.f32.mrb[0].mxu0
      %v2823 = vadd.f32 0.0, %v2822
      %v2824 = vpop.f32.mrb[0].mxu0
      %v2825 = vpop.f32.mrb[0].mxu0
      %v2826 = vadd.f32 0.0, %v2825
      %v2827 = vpop.f32.mrb[0].mxu0
      %2828 = vmatprep.mubr.bf16.mxu0 0
      %2829 = vmatmul.mubr.bf16.gmra.mrb[0].mxu0 %v2722
      %v2830 = vpop.f32.mrb[0].mxu0
      %v2831 = vadd.f32 0.0, %v2830
      %v2832 = vpop.f32.mrb[0].mxu0
      %v2833 = vpop.f32.mrb[0].mxu0
      %v2834 = vadd.f32 0.0, %v2833
      %v2835 = vpop.f32.mrb[0].mxu0
      %2836 = vmatprep.mubr.bf16.mxu0 0
      %2837 = vmatmul.mubr.bf16.gmra.mrb[0].mxu0 %v2723
      %v2838 = vpop.f32.mrb[0].mxu0
      %v2839 = vadd.f32 0.0, %v2838
      %v2840 = vpop.f32.mrb[0].mxu0
      %v2841 = vpop.f32.mrb[0].mxu0
      %v2842 = vadd.f32 0.0, %v2841
      %v2843 = vpop.f32.mrb[0].mxu0
      %2844 = vdwg.mxu0
      %v2845 = vpack.c.bf16 %v2786, %v2783
      %v2846 = vpack.c.bf16 %v2794, %v2791
      %v2847 = vpack.c.bf16 %v2802, %v2799
      %v2848 = vpack.c.bf16 %v2810, %v2807
      %v2849 = vpack.c.bf16 %v2818, %v2815
      %v2850 = vpack.c.bf16 %v2826, %v2823
      %v2851 = vpack.c.bf16 %v2834, %v2831
      %v2852 = vpack.c.bf16 %v2842, %v2839
      %v2854 = vsel %vm1221, %v2845, 0
      %v2857 = vsel %vm1221, %v2846, 0
      %v2860 = vsel %vm1221, %v2847, 0
      %v2863 = vsel %vm1221, %v2848, 0
      %v2866 = vsel %vm1221, %v2849, 0
      %v2869 = vsel %vm1221, %v2850, 0
      %v2872 = vsel %vm1221, %v2851, 0
      %v2875 = vsel %vm1221, %v2852, 0
      %v2878 = vsel %vm2154, %v1195, 0
      %2880 = vmatprep.subr.bf16.mxu0 0
      %2881 = vmatpush1.bf16.msra.mxu0 %v2878
      %2882 = vmatprep.subr.bf16.mxu0 0
      %2883 = vmatpush1.bf16.msra.mxu0 0
      %2884 = vmatprep.subr.bf16.mxu0 0
      %2885 = vmatpush1.bf16.msra.mxu0 0
      %2886 = vmatprep.subr.bf16.mxu0 0
      %2887 = vmatpush1.bf16.msra.mxu0 0
      %2888 = vmatprep.subr.bf16.mxu0 0
      %2889 = vmatpush1.bf16.msra.mxu0 0
      %2890 = vmatprep.subr.bf16.mxu0 0
      %2891 = vmatpush1.bf16.msra.mxu0 0
      %2892 = vmatprep.subr.bf16.mxu0 0
      %2893 = vmatpush1.bf16.msra.mxu0 0
      %2894 = vmatprep.subr.bf16.mxu0 0
      %2895 = vmatpush1.bf16.msra.mxu0 0
      %2896 = vmatprep.subr.bf16.mxu0 0
      %2897 = vmatpush1.bf16.msra.mxu0 0
      %2898 = vmatprep.subr.bf16.mxu0 0
      %2899 = vmatpush1.bf16.msra.mxu0 0
      %2900 = vmatprep.subr.bf16.mxu0 0
      %2901 = vmatpush1.bf16.msra.mxu0 0
      %2902 = vmatprep.subr.bf16.mxu0 0
      %2903 = vmatpush1.bf16.msra.mxu0 0
      %2904 = vmatprep.subr.bf16.mxu0 0
      %2905 = vmatpush1.bf16.msra.mxu0 0
      %2906 = vmatprep.subr.bf16.mxu0 0
      %2907 = vmatpush1.bf16.msra.mxu0 0
      %2908 = vmatprep.subr.bf16.mxu0 0
      %2909 = vmatpush1.bf16.msra.mxu0 0
      %2910 = vmatprep.subr.bf16.mxu0 0
      %2911 = vmatpush1.bf16.msra.mxu0 0
      %2912 = vmatprep.mubr.bf16.mxu0 0
      %2913 = vmatmul.mubr.bf16.gmra.mrb[0].mxu0 %v2854
      %v2914 = vpop.f32.mrb[0].mxu0
      %v2915 = vadd.f32 0.0, %v2914
      %v2916 = vpop.f32.mrb[0].mxu0
      %v2917 = vpop.f32.mrb[0].mxu0
      %v2918 = vadd.f32 0.0, %v2917
      %v2919 = vpop.f32.mrb[0].mxu0
      %2920 = vmatprep.mubr.bf16.mxu0 0
      %2921 = vmatmul.mubr.bf16.gmra.mrb[0].mxu0 %v2857
      %v2922 = vpop.f32.mrb[0].mxu0
      %v2923 = vadd.f32 0.0, %v2922
      %v2924 = vpop.f32.mrb[0].mxu0
      %v2925 = vpop.f32.mrb[0].mxu0
      %v2926 = vadd.f32 0.0, %v2925
      %v2927 = vpop.f32.mrb[0].mxu0
      %2928 = vmatprep.mubr.bf16.mxu0 0
      %2929 = vmatmul.mubr.bf16.gmra.mrb[0].mxu0 %v2860
      %v2930 = vpop.f32.mrb[0].mxu0
      %v2931 = vadd.f32 0.0, %v2930
      %v2932 = vpop.f32.mrb[0].mxu0
      %v2933 = vpop.f32.mrb[0].mxu0
      %v2934 = vadd.f32 0.0, %v2933
      %v2935 = vpop.f32.mrb[0].mxu0
      %2936 = vmatprep.mubr.bf16.mxu0 0
      %2937 = vmatmul.mubr.bf16.gmra.mrb[0].mxu0 %v2863
      %v2938 = vpop.f32.mrb[0].mxu0
      %v2939 = vadd.f32 0.0, %v2938
      %v2940 = vpop.f32.mrb[0].mxu0
      %v2941 = vpop.f32.mrb[0].mxu0
      %v2942 = vadd.f32 0.0, %v2941
      %v2943 = vpop.f32.mrb[0].mxu0
      %2944 = vmatprep.mubr.bf16.mxu0 0
      %2945 = vmatmul.mubr.bf16.gmra.mrb[0].mxu0 %v2866
      %v2946 = vpop.f32.mrb[0].mxu0
      %v2947 = vadd.f32 0.0, %v2946
      %v2948 = vpop.f32.mrb[0].mxu0
      %v2949 = vpop.f32.mrb[0].mxu0
      %v2950 = vadd.f32 0.0, %v2949
      %v2951 = vpop.f32.mrb[0].mxu0
      %2952 = vmatprep.mubr.bf16.mxu0 0
      %2953 = vmatmul.mubr.bf16.gmra.mrb[0].mxu0 %v2869
      %v2954 = vpop.f32.mrb[0].mxu0
      %v2955 = vadd.f32 0.0, %v2954
      %v2956 = vpop.f32.mrb[0].mxu0
      %v2957 = vpop.f32.mrb[0].mxu0
      %v2958 = vadd.f32 0.0, %v2957
      %v2959 = vpop.f32.mrb[0].mxu0
      %2960 = vmatprep.mubr.bf16.mxu0 0
      %2961 = vmatmul.mubr.bf16.gmra.mrb[0].mxu0 %v2872
      %v2962 = vpop.f32.mrb[0].mxu0
      %v2963 = vadd.f32 0.0, %v2962
      %v2964 = vpop.f32.mrb[0].mxu0
      %v2965 = vpop.f32.mrb[0].mxu0
      %v2966 = vadd.f32 0.0, %v2965
      %v2967 = vpop.f32.mrb[0].mxu0
      %2968 = vmatprep.mubr.bf16.mxu0 0
      %2969 = vmatmul.mubr.bf16.gmra.mrb[0].mxu0 %v2875
      %v2970 = vpop.f32.mrb[0].mxu0
      %v2971 = vadd.f32 0.0, %v2970
      %v2972 = vpop.f32.mrb[0].mxu0
      %v2973 = vpop.f32.mrb[0].mxu0
      %v2974 = vadd.f32 0.0, %v2973
      %v2975 = vpop.f32.mrb[0].mxu0
      %2976 = vdwg.mxu0
      %v2977 = vadd.f32 %v2317, %v2915
      %v2978 = vadd.f32 %v2320, %v2918
      %v2979 = vadd.f32 %v2325, %v2923
      %v2980 = vadd.f32 %v2328, %v2926
      %v2981 = vadd.f32 %v2333, %v2931
      %v2982 = vadd.f32 %v2336, %v2934
      %v2983 = vadd.f32 %v2341, %v2939
      %v2984 = vadd.f32 %v2344, %v2942
      %v2985 = vadd.f32 %v2349, %v2947
      %v2986 = vadd.f32 %v2352, %v2950
      %v2987 = vadd.f32 %v2357, %v2955
      %v2988 = vadd.f32 %v2360, %v2958
      %v2989 = vadd.f32 %v2365, %v2963
      %v2990 = vadd.f32 %v2368, %v2966
      %v2991 = vadd.f32 %v2373, %v2971
      %v2992 = vadd.f32 %v2376, %v2974
      %2993 = vrot.lane.b32.xlu0 %v1177, 104
      %v2994 = vpop.permute.xlu0 %2993
      %2995 = vrot.lane.b32.xlu0 %v1178, 104
      %v2996 = vpop.permute.xlu0 %2995
      %2997 = vrot.lane.b32.xlu0 %v1179, 104
      %v2998 = vpop.permute.xlu0 %2997
      %2999 = vrot.lane.b32.xlu0 %v1180, 104
      %v3000 = vpop.permute.xlu0 %2999
      %3001 = vrot.lane.b32.xlu0 %v1181, 104
      %v3002 = vpop.permute.xlu0 %3001
      %3003 = vrot.lane.b32.xlu0 %v1182, 104
      %v3004 = vpop.permute.xlu0 %3003
      %3005 = vrot.lane.b32.xlu0 %v1183, 104
      %v3006 = vpop.permute.xlu0 %3005
      %3007 = vrot.lane.b32.xlu0 %v1184, 104
      %v3008 = vpop.permute.xlu0 %3007
      %3009 = vrot.lane.b32.xlu0 %v1185, 72
      %v3010 = vpop.permute.xlu0 %3009
      %3011 = vrot.lane.b32.xlu0 %v1186, 72
      %v3012 = vpop.permute.xlu0 %3011
      %3013 = vrot.lane.b32.xlu0 %v1187, 72
      %v3014 = vpop.permute.xlu0 %3013
      %3015 = vrot.lane.b32.xlu0 %v1188, 72
      %v3016 = vpop.permute.xlu0 %3015
      %3017 = vrot.lane.b32.xlu0 %v1189, 72
      %v3018 = vpop.permute.xlu0 %3017
      %3019 = vrot.lane.b32.xlu0 %v1190, 72
      %v3020 = vpop.permute.xlu0 %3019
      %3021 = vrot.lane.b32.xlu0 %v1191, 72
      %v3022 = vpop.permute.xlu0 %3021
      %3023 = vrot.lane.b32.xlu0 %v1192, 72
      %v3024 = vpop.permute.xlu0 %3023
      %v3026 = vsel %vm1221, %v2994, 0
      %v3029 = vsel %vm1221, %v2996, 0
      %v3032 = vsel %vm1221, %v2998, 0
      %v3035 = vsel %vm1221, %v3000, 0
      %v3038 = vsel %vm1221, %v3002, 0
      %v3041 = vsel %vm1221, %v3004, 0
      %v3044 = vsel %vm1221, %v3006, 0
      %v3047 = vsel %vm1221, %v3008, 0
      %v3050 = vsel %vm1221, %v3010, 0
      %v3053 = vsel %vm1221, %v3012, 0
      %v3056 = vsel %vm1221, %v3014, 0
      %v3059 = vsel %vm1221, %v3016, 0
      %v3062 = vsel %vm1221, %v3018, 0
      %v3065 = vsel %vm1221, %v3020, 0
      %v3068 = vsel %vm1221, %v3022, 0
      %v3071 = vsel %vm1221, %v3024, 0
      %3073 = vmatprep.subr.bf16.mxu0 0
      %3074 = vmatpush1.bf16.xpose.msra.mxu0 %v3050
      %3075 = vmatprep.subr.bf16.mxu0 0
      %3076 = vmatpush1.bf16.xpose.msra.mxu0 %v3053
      %3077 = vmatprep.subr.bf16.mxu0 0
      %3078 = vmatpush1.bf16.xpose.msra.mxu0 %v3056
      %3079 = vmatprep.subr.bf16.mxu0 0
      %3080 = vmatpush1.bf16.xpose.msra.mxu0 %v3059
      %3081 = vmatprep.subr.bf16.mxu0 0
      %3082 = vmatpush1.bf16.xpose.msra.mxu0 %v3062
      %3083 = vmatprep.subr.bf16.mxu0 0
      %3084 = vmatpush1.bf16.xpose.msra.mxu0 %v3065
      %3085 = vmatprep.subr.bf16.mxu0 0
      %3086 = vmatpush1.bf16.xpose.msra.mxu0 %v3068
      %3087 = vmatprep.subr.bf16.mxu0 0
      %3088 = vmatpush1.bf16.xpose.msra.mxu0 %v3071
      %3089 = vmatprep.subr.bf16.mxu0 0
      %3090 = vmatpush1.bf16.xpose.msra.mxu0 0
      %3091 = vmatprep.subr.bf16.mxu0 0
      %3092 = vmatpush1.bf16.xpose.msra.mxu0 0
      %3093 = vmatprep.subr.bf16.mxu0 0
      %3094 = vmatpush1.bf16.xpose.msra.mxu0 0
      %3095 = vmatprep.subr.bf16.mxu0 0
      %3096 = vmatpush1.bf16.xpose.msra.mxu0 0
      %3097 = vmatprep.subr.bf16.mxu0 0
      %3098 = vmatpush1.bf16.xpose.msra.mxu0 0
      %3099 = vmatprep.subr.bf16.mxu0 0
      %3100 = vmatpush1.bf16.xpose.msra.mxu0 0
      %3101 = vmatprep.subr.bf16.mxu0 0
      %3102 = vmatpush1.bf16.xpose.msra.mxu0 0
      %3103 = vmatprep.subr.bf16.mxu0 0
      %3104 = vmatpush1.bf16.xpose.msra.mxu0 0
      %3105 = vmatprep.mubr.bf16.mxu0 0
      %3106 = vmatmul.mubr.bf16.gmra.mrb[0].mxu0 %v3026
      %v3107 = vpop.f32.mrb[0].mxu0
      %v3108 = vadd.f32 %v752, %v3107
      %v3109 = vpop.f32.mrb[0].mxu0
      %v3110 = vpop.f32.mrb[0].mxu0
      %v3111 = vadd.f32 %v752, %v3110
      %v3112 = vpop.f32.mrb[0].mxu0
      %3113 = vmatprep.mubr.bf16.mxu0 0
      %3114 = vmatmul.mubr.bf16.gmra.mrb[0].mxu0 %v3029
      %v3115 = vpop.f32.mrb[0].mxu0
      %v3116 = vadd.f32 %v752, %v3115
      %v3117 = vpop.f32.mrb[0].mxu0
      %v3118 = vpop.f32.mrb[0].mxu0
      %v3119 = vadd.f32 %v752, %v3118
      %v3120 = vpop.f32.mrb[0].mxu0
      %3121 = vmatprep.mubr.bf16.mxu0 0
      %3122 = vmatmul.mubr.bf16.gmra.mrb[0].mxu0 %v3032
      %v3123 = vpop.f32.mrb[0].mxu0
      %v3124 = vadd.f32 %v752, %v3123
      %v3125 = vpop.f32.mrb[0].mxu0
      %v3126 = vpop.f32.mrb[0].mxu0
      %v3127 = vadd.f32 %v752, %v3126
      %v3128 = vpop.f32.mrb[0].mxu0
      %3129 = vmatprep.mubr.bf16.mxu0 0
      %3130 = vmatmul.mubr.bf16.gmra.mrb[0].mxu0 %v3035
      %v3131 = vpop.f32.mrb[0].mxu0
      %v3132 = vadd.f32 %v752, %v3131
      %v3133 = vpop.f32.mrb[0].mxu0
      %v3134 = vpop.f32.mrb[0].mxu0
      %v3135 = vadd.f32 %v752, %v3134
      %v3136 = vpop.f32.mrb[0].mxu0
      %3137 = vmatprep.mubr.bf16.mxu0 0
      %3138 = vmatmul.mubr.bf16.gmra.mrb[0].mxu0 %v3038
      %v3139 = vpop.f32.mrb[0].mxu0
      %v3140 = vadd.f32 %v752, %v3139
      %v3141 = vpop.f32.mrb[0].mxu0
      %v3142 = vpop.f32.mrb[0].mxu0
      %v3143 = vadd.f32 %v752, %v3142
      %v3144 = vpop.f32.mrb[0].mxu0
      %3145 = vmatprep.mubr.bf16.mxu0 0
      %3146 = vmatmul.mubr.bf16.gmra.mrb[0].mxu0 %v3041
      %v3147 = vpop.f32.mrb[0].mxu0
      %v3148 = vadd.f32 %v752, %v3147
      %v3149 = vpop.f32.mrb[0].mxu0
      %v3150 = vpop.f32.mrb[0].mxu0
      %v3151 = vadd.f32 %v752, %v3150
      %v3152 = vpop.f32.mrb[0].mxu0
      %3153 = vmatprep.mubr.bf16.mxu0 0
      %3154 = vmatmul.mubr.bf16.gmra.mrb[0].mxu0 %v3044
      %v3155 = vpop.f32.mrb[0].mxu0
      %v3156 = vadd.f32 %v752, %v3155
      %v3157 = vpop.f32.mrb[0].mxu0
      %v3158 = vpop.f32.mrb[0].mxu0
      %v3159 = vadd.f32 %v752, %v3158
      %v3160 = vpop.f32.mrb[0].mxu0
      %3161 = vmatprep.mubr.bf16.mxu0 0
      %3162 = vmatmul.mubr.bf16.gmra.mrb[0].mxu0 %v3047
      %v3163 = vpop.f32.mrb[0].mxu0
      %v3164 = vadd.f32 %v752, %v3163
      %v3165 = vpop.f32.mrb[0].mxu0
      %v3166 = vpop.f32.mrb[0].mxu0
      %v3167 = vadd.f32 %v752, %v3166
      %v3168 = vpop.f32.mrb[0].mxu0
      %3169 = vdwg.mxu0
      %3170 = vmax.xlane.f32.xlu0 %v3108
      %v3171 = vpop.xlane.xlu0 %3170
      %3172 = vmax.xlane.f32.xlu0 %v3111
      %v3173 = vpop.xlane.xlu0 %3172
      %3174 = vmax.xlane.f32.xlu0 %v3116
      %v3175 = vpop.xlane.xlu0 %3174
      %3176 = vmax.xlane.f32.xlu0 %v3119
      %v3177 = vpop.xlane.xlu0 %3176
      %3178 = vmax.xlane.f32.xlu0 %v3124
      %v3179 = vpop.xlane.xlu0 %3178
      %3180 = vmax.xlane.f32.xlu0 %v3127
      %v3181 = vpop.xlane.xlu0 %3180
      %3182 = vmax.xlane.f32.xlu0 %v3132
      %v3183 = vpop.xlane.xlu0 %3182
      %3184 = vmax.xlane.f32.xlu0 %v3135
      %v3185 = vpop.xlane.xlu0 %3184
      %3186 = vmax.xlane.f32.xlu0 %v3140
      %v3187 = vpop.xlane.xlu0 %3186
      %3188 = vmax.xlane.f32.xlu0 %v3143
      %v3189 = vpop.xlane.xlu0 %3188
      %3190 = vmax.xlane.f32.xlu0 %v3148
      %v3191 = vpop.xlane.xlu0 %3190
      %3192 = vmax.xlane.f32.xlu0 %v3151
      %v3193 = vpop.xlane.xlu0 %3192
      %3194 = vmax.xlane.f32.xlu0 %v3156
      %v3195 = vpop.xlane.xlu0 %3194
      %3196 = vmax.xlane.f32.xlu0 %v3159
      %v3197 = vpop.xlane.xlu0 %3196
      %3198 = vmax.xlane.f32.xlu0 %v3164
      %v3199 = vpop.xlane.xlu0 %3198
      %3200 = vmax.xlane.f32.xlu0 %v3167
      %v3201 = vpop.xlane.xlu0 %3200
      %v3202 = vsub.f32 %v3108, %v3171
      %v3203 = vsub.f32 %v3111, %v3173
      %v3204 = vsub.f32 %v3116, %v3175
      %v3205 = vsub.f32 %v3119, %v3177
      %v3206 = vsub.f32 %v3124, %v3179
      %v3207 = vsub.f32 %v3127, %v3181
      %v3208 = vsub.f32 %v3132, %v3183
      %v3209 = vsub.f32 %v3135, %v3185
      %v3210 = vsub.f32 %v3140, %v3187
      %v3211 = vsub.f32 %v3143, %v3189
      %v3212 = vsub.f32 %v3148, %v3191
      %v3213 = vsub.f32 %v3151, %v3193
      %v3214 = vsub.f32 %v3156, %v3195
      %v3215 = vsub.f32 %v3159, %v3197
      %v3216 = vsub.f32 %v3164, %v3199
      %v3217 = vsub.f32 %v3167, %v3201
      %v3218 = vmul.f32 %v3202, 1.442695
      %v3219 = vpow.pop %v3218
      %v3220 = vmul.f32 %v3203, 1.442695
      %v3221 = vpow.pop %v3220
      %v3222 = vmul.f32 %v3204, 1.442695
      %v3223 = vpow.pop %v3222
      %v3224 = vmul.f32 %v3205, 1.442695
      %v3225 = vpow.pop %v3224
      %v3226 = vmul.f32 %v3206, 1.442695
      %v3227 = vpow.pop %v3226
      %v3228 = vmul.f32 %v3207, 1.442695
      %v3229 = vpow.pop %v3228
      %v3230 = vmul.f32 %v3208, 1.442695
      %v3231 = vpow.pop %v3230
      %v3232 = vmul.f32 %v3209, 1.442695
      %v3233 = vpow.pop %v3232
      %v3234 = vmul.f32 %v3210, 1.442695
      %v3235 = vpow.pop %v3234
      %v3236 = vmul.f32 %v3211, 1.442695
      %v3237 = vpow.pop %v3236
      %v3238 = vmul.f32 %v3212, 1.442695
      %v3239 = vpow.pop %v3238
      %v3240 = vmul.f32 %v3213, 1.442695
      %v3241 = vpow.pop %v3240
      %v3242 = vmul.f32 %v3214, 1.442695
      %v3243 = vpow.pop %v3242
      %v3244 = vmul.f32 %v3215, 1.442695
      %v3245 = vpow.pop %v3244
      %v3246 = vmul.f32 %v3216, 1.442695
      %v3247 = vpow.pop %v3246
      %v3248 = vmul.f32 %v3217, 1.442695
      %v3249 = vpow.pop %v3248
      %3250 = vadd.xlane.f32.xlu0 %v3219
      %v3251 = vpop.xlane.xlu0 %3250
      %3252 = vadd.xlane.f32.xlu0 %v3221
      %v3253 = vpop.xlane.xlu0 %3252
      %3254 = vadd.xlane.f32.xlu0 %v3223
      %v3255 = vpop.xlane.xlu0 %3254
      %3256 = vadd.xlane.f32.xlu0 %v3225
      %v3257 = vpop.xlane.xlu0 %3256
      %3258 = vadd.xlane.f32.xlu0 %v3227
      %v3259 = vpop.xlane.xlu0 %3258
      %3260 = vadd.xlane.f32.xlu0 %v3229
      %v3261 = vpop.xlane.xlu0 %3260
      %3262 = vadd.xlane.f32.xlu0 %v3231
      %v3263 = vpop.xlane.xlu0 %3262
      %3264 = vadd.xlane.f32.xlu0 %v3233
      %v3265 = vpop.xlane.xlu0 %3264
      %3266 = vadd.xlane.f32.xlu0 %v3235
      %v3267 = vpop.xlane.xlu0 %3266
      %3268 = vadd.xlane.f32.xlu0 %v3237
      %v3269 = vpop.xlane.xlu0 %3268
      %3270 = vadd.xlane.f32.xlu0 %v3239
      %v3271 = vpop.xlane.xlu0 %3270
      %3272 = vadd.xlane.f32.xlu0 %v3241
      %v3273 = vpop.xlane.xlu0 %3272
      %3274 = vadd.xlane.f32.xlu0 %v3243
      %v3275 = vpop.xlane.xlu0 %3274
      %3276 = vadd.xlane.f32.xlu0 %v3245
      %v3277 = vpop.xlane.xlu0 %3276
      %3278 = vadd.xlane.f32.xlu0 %v3247
      %v3279 = vpop.xlane.xlu0 %3278
      %3280 = vadd.xlane.f32.xlu0 %v3249
      %v3281 = vpop.xlane.xlu0 %3280
      %v3282 = vrcp.pop %v3251
      %v3283 = vrcp.pop %v3253
      %v3284 = vrcp.pop %v3255
      %v3285 = vrcp.pop %v3257
      %v3286 = vrcp.pop %v3259
      %v3287 = vrcp.pop %v3261
      %v3288 = vrcp.pop %v3263
      %v3289 = vrcp.pop %v3265
      %v3290 = vrcp.pop %v3267
      %v3291 = vrcp.pop %v3269
      %v3292 = vrcp.pop %v3271
      %v3293 = vrcp.pop %v3273
      %v3294 = vrcp.pop %v3275
      %v3295 = vrcp.pop %v3277
      %v3296 = vrcp.pop %v3279
      %v3297 = vrcp.pop %v3281
      %v3298 = vmul.f32 %v3219, %v3282
      %v3299 = vmul.f32 %v3221, %v3283
      %v3300 = vmul.f32 %v3223, %v3284
      %v3301 = vmul.f32 %v3225, %v3285
      %v3302 = vmul.f32 %v3227, %v3286
      %v3303 = vmul.f32 %v3229, %v3287
      %v3304 = vmul.f32 %v3231, %v3288
      %v3305 = vmul.f32 %v3233, %v3289
      %v3306 = vmul.f32 %v3235, %v3290
      %v3307 = vmul.f32 %v3237, %v3291
      %v3308 = vmul.f32 %v3239, %v3292
      %v3309 = vmul.f32 %v3241, %v3293
      %v3310 = vmul.f32 %v3243, %v3294
      %v3311 = vmul.f32 %v3245, %v3295
      %v3312 = vmul.f32 %v3247, %v3296
      %v3313 = vmul.f32 %v3249, %v3297
      %v3314 = vadd.f32 %v2700, %v3298
      %v3315 = vadd.f32 %v2701, %v3299
      %v3316 = vadd.f32 %v2702, %v3300
      %v3317 = vadd.f32 %v2703, %v3301
      %v3318 = vadd.f32 %v2704, %v3302
      %v3319 = vadd.f32 %v2705, %v3303
      %v3320 = vadd.f32 %v2706, %v3304
      %v3321 = vadd.f32 %v2707, %v3305
      %v3322 = vadd.f32 %v2708, %v3306
      %v3323 = vadd.f32 %v2709, %v3307
      %v3324 = vadd.f32 %v2710, %v3308
      %v3325 = vadd.f32 %v2711, %v3309
      %v3326 = vadd.f32 %v2712, %v3310
      %v3327 = vadd.f32 %v2713, %v3311
      %v3328 = vadd.f32 %v2714, %v3312
      %v3329 = vadd.f32 %v2715, %v3313
      %v3330 = vpack.c.bf16 %v3299, %v3298
      %v3331 = vpack.c.bf16 %v3301, %v3300
      %v3332 = vpack.c.bf16 %v3303, %v3302
      %v3333 = vpack.c.bf16 %v3305, %v3304
      %v3334 = vpack.c.bf16 %v3307, %v3306
      %v3335 = vpack.c.bf16 %v3309, %v3308
      %v3336 = vpack.c.bf16 %v3311, %v3310
      %v3337 = vpack.c.bf16 %v3313, %v3312
      %3338 = vrot.lane.b32.xlu0 %v1185, 40
      %v3339 = vpop.permute.xlu0 %3338
      %3340 = vrot.lane.b32.xlu0 %v1186, 40
      %v3341 = vpop.permute.xlu0 %3340
      %3342 = vrot.lane.b32.xlu0 %v1187, 40
      %v3343 = vpop.permute.xlu0 %3342
      %3344 = vrot.lane.b32.xlu0 %v1188, 40
      %v3345 = vpop.permute.xlu0 %3344
      %3346 = vrot.lane.b32.xlu0 %v1189, 40
      %v3347 = vpop.permute.xlu0 %3346
      %3348 = vrot.lane.b32.xlu0 %v1190, 40
      %v3349 = vpop.permute.xlu0 %3348
      %3350 = vrot.lane.b32.xlu0 %v1191, 40
      %v3351 = vpop.permute.xlu0 %3350
      %3352 = vrot.lane.b32.xlu0 %v1192, 40
      %v3353 = vpop.permute.xlu0 %3352
      %3362 = vmatprep.subr.bf16.mxu0 0
      %3363 = vmatpush1.bf16.msra.mxu0 %v3339
      %3364 = vmatprep.subr.bf16.mxu0 0
      %3365 = vmatpush1.bf16.msra.mxu0 %v3341
      %3366 = vmatprep.subr.bf16.mxu0 0
      %3367 = vmatpush1.bf16.msra.mxu0 %v3343
      %3368 = vmatprep.subr.bf16.mxu0 0
      %3369 = vmatpush1.bf16.msra.mxu0 %v3345
      %3370 = vmatprep.subr.bf16.mxu0 0
      %3371 = vmatpush1.bf16.msra.mxu0 %v3347
      %3372 = vmatprep.subr.bf16.mxu0 0
      %3373 = vmatpush1.bf16.msra.mxu0 %v3349
      %3374 = vmatprep.subr.bf16.mxu0 0
      %3375 = vmatpush1.bf16.msra.mxu0 %v3351
      %3376 = vmatprep.subr.bf16.mxu0 0
      %3377 = vmatpush1.bf16.msra.mxu0 %v3353
      %3378 = vmatprep.subr.bf16.mxu0 0
      %3379 = vmatpush1.bf16.msra.mxu0 0
      %3380 = vmatprep.subr.bf16.mxu0 0
      %3381 = vmatpush1.bf16.msra.mxu0 0
      %3382 = vmatprep.subr.bf16.mxu0 0
      %3383 = vmatpush1.bf16.msra.mxu0 0
      %3384 = vmatprep.subr.bf16.mxu0 0
      %3385 = vmatpush1.bf16.msra.mxu0 0
      %3386 = vmatprep.subr.bf16.mxu0 0
      %3387 = vmatpush1.bf16.msra.mxu0 0
      %3388 = vmatprep.subr.bf16.mxu0 0
      %3389 = vmatpush1.bf16.msra.mxu0 0
      %3390 = vmatprep.subr.bf16.mxu0 0
      %3391 = vmatpush1.bf16.msra.mxu0 0
      %3392 = vmatprep.subr.bf16.mxu0 0
      %3393 = vmatpush1.bf16.msra.mxu0 0
      %3394 = vmatprep.mubr.bf16.mxu0 0
      %3395 = vmatmul.mubr.bf16.gmra.mrb[0].mxu0 %v3330
      %v3396 = vpop.f32.mrb[0].mxu0
      %v3397 = vadd.f32 0.0, %v3396
      %v3398 = vpop.f32.mrb[0].mxu0
      %v3399 = vpop.f32.mrb[0].mxu0
      %v3400 = vadd.f32 0.0, %v3399
      %v3401 = vpop.f32.mrb[0].mxu0
      %3402 = vmatprep.mubr.bf16.mxu0 0
      %3403 = vmatmul.mubr.bf16.gmra.mrb[0].mxu0 %v3331
      %v3404 = vpop.f32.mrb[0].mxu0
      %v3405 = vadd.f32 0.0, %v3404
      %v3406 = vpop.f32.mrb[0].mxu0
      %v3407 = vpop.f32.mrb[0].mxu0
      %v3408 = vadd.f32 0.0, %v3407
      %v3409 = vpop.f32.mrb[0].mxu0
      %3410 = vmatprep.mubr.bf16.mxu0 0
      %3411 = vmatmul.mubr.bf16.gmra.mrb[0].mxu0 %v3332
      %v3412 = vpop.f32.mrb[0].mxu0
      %v3413 = vadd.f32 0.0, %v3412
      %v3414 = vpop.f32.mrb[0].mxu0
      %v3415 = vpop.f32.mrb[0].mxu0
      %v3416 = vadd.f32 0.0, %v3415
      %v3417 = vpop.f32.mrb[0].mxu0
      %3418 = vmatprep.mubr.bf16.mxu0 0
      %3419 = vmatmul.mubr.bf16.gmra.mrb[0].mxu0 %v3333
      %v3420 = vpop.f32.mrb[0].mxu0
      %v3421 = vadd.f32 0.0, %v3420
      %v3422 = vpop.f32.mrb[0].mxu0
      %v3423 = vpop.f32.mrb[0].mxu0
      %v3424 = vadd.f32 0.0, %v3423
      %v3425 = vpop.f32.mrb[0].mxu0
      %3426 = vmatprep.mubr.bf16.mxu0 0
      %3427 = vmatmul.mubr.bf16.gmra.mrb[0].mxu0 %v3334
      %v3428 = vpop.f32.mrb[0].mxu0
      %v3429 = vadd.f32 0.0, %v3428
      %v3430 = vpop.f32.mrb[0].mxu0
      %v3431 = vpop.f32.mrb[0].mxu0
      %v3432 = vadd.f32 0.0, %v3431
      %v3433 = vpop.f32.mrb[0].mxu0
      %3434 = vmatprep.mubr.bf16.mxu0 0
      %3435 = vmatmul.mubr.bf16.gmra.mrb[0].mxu0 %v3335
      %v3436 = vpop.f32.mrb[0].mxu0
      %v3437 = vadd.f32 0.0, %v3436
      %v3438 = vpop.f32.mrb[0].mxu0
      %v3439 = vpop.f32.mrb[0].mxu0
      %v3440 = vadd.f32 0.0, %v3439
      %v3441 = vpop.f32.mrb[0].mxu0
      %3442 = vmatprep.mubr.bf16.mxu0 0
      %3443 = vmatmul.mubr.bf16.gmra.mrb[0].mxu0 %v3336
      %v3444 = vpop.f32.mrb[0].mxu0
      %v3445 = vadd.f32 0.0, %v3444
      %v3446 = vpop.f32.mrb[0].mxu0
      %v3447 = vpop.f32.mrb[0].mxu0
      %v3448 = vadd.f32 0.0, %v3447
      %v3449 = vpop.f32.mrb[0].mxu0
      %3450 = vmatprep.mubr.bf16.mxu0 0
      %3451 = vmatmul.mubr.bf16.gmra.mrb[0].mxu0 %v3337
      %v3452 = vpop.f32.mrb[0].mxu0
      %v3453 = vadd.f32 0.0, %v3452
      %v3454 = vpop.f32.mrb[0].mxu0
      %v3455 = vpop.f32.mrb[0].mxu0
      %v3456 = vadd.f32 0.0, %v3455
      %v3457 = vpop.f32.mrb[0].mxu0
      %3458 = vdwg.mxu0
      %v3459 = vpack.c.bf16 %v3400, %v3397
      %v3460 = vpack.c.bf16 %v3408, %v3405
      %v3461 = vpack.c.bf16 %v3416, %v3413
      %v3462 = vpack.c.bf16 %v3424, %v3421
      %v3463 = vpack.c.bf16 %v3432, %v3429
      %v3464 = vpack.c.bf16 %v3440, %v3437
      %v3465 = vpack.c.bf16 %v3448, %v3445
      %v3466 = vpack.c.bf16 %v3456, %v3453
      %v3468 = vsel %vm1221, %v3459, 0
      %v3471 = vsel %vm1221, %v3460, 0
      %v3474 = vsel %vm1221, %v3461, 0
      %v3477 = vsel %vm1221, %v3462, 0
      %v3480 = vsel %vm1221, %v3463, 0
      %v3483 = vsel %vm1221, %v3464, 0
      %v3486 = vsel %vm1221, %v3465, 0
      %v3489 = vsel %vm1221, %v3466, 0
      %v3492 = vsel %vm2154, %v1196, 0
      %3494 = vmatprep.subr.bf16.mxu0 0
      %3495 = vmatpush1.bf16.msra.mxu0 %v3492
      %3496 = vmatprep.subr.bf16.mxu0 0
      %3497 = vmatpush1.bf16.msra.mxu0 0
      %3498 = vmatprep.subr.bf16.mxu0 0
      %3499 = vmatpush1.bf16.msra.mxu0 0
      %3500 = vmatprep.subr.bf16.mxu0 0
      %3501 = vmatpush1.bf16.msra.mxu0 0
      %3502 = vmatprep.subr.bf16.mxu0 0
      %3503 = vmatpush1.bf16.msra.mxu0 0
      %3504 = vmatprep.subr.bf16.mxu0 0
      %3505 = vmatpush1.bf16.msra.mxu0 0
      %3506 = vmatprep.subr.bf16.mxu0 0
      %3507 = vmatpush1.bf16.msra.mxu0 0
      %3508 = vmatprep.subr.bf16.mxu0 0
      %3509 = vmatpush1.bf16.msra.mxu0 0
      %3510 = vmatprep.subr.bf16.mxu0 0
      %3511 = vmatpush1.bf16.msra.mxu0 0
      %3512 = vmatprep.subr.bf16.mxu0 0
      %3513 = vmatpush1.bf16.msra.mxu0 0
      %3514 = vmatprep.subr.bf16.mxu0 0
      %3515 = vmatpush1.bf16.msra.mxu0 0
      %3516 = vmatprep.subr.bf16.mxu0 0
      %3517 = vmatpush1.bf16.msra.mxu0 0
      %3518 = vmatprep.subr.bf16.mxu0 0
      %3519 = vmatpush1.bf16.msra.mxu0 0
      %3520 = vmatprep.subr.bf16.mxu0 0
      %3521 = vmatpush1.bf16.msra.mxu0 0
      %3522 = vmatprep.subr.bf16.mxu0 0
      %3523 = vmatpush1.bf16.msra.mxu0 0
      %3524 = vmatprep.subr.bf16.mxu0 0
      %3525 = vmatpush1.bf16.msra.mxu0 0
      %3526 = vmatprep.mubr.bf16.mxu0 0
      %3527 = vmatmul.mubr.bf16.gmra.mrb[0].mxu0 %v3468
      %v3528 = vpop.f32.mrb[0].mxu0
      %v3529 = vadd.f32 0.0, %v3528
      %v3530 = vpop.f32.mrb[0].mxu0
      %v3531 = vpop.f32.mrb[0].mxu0
      %v3532 = vadd.f32 0.0, %v3531
      %v3533 = vpop.f32.mrb[0].mxu0
      %3534 = vmatprep.mubr.bf16.mxu0 0
      %3535 = vmatmul.mubr.bf16.gmra.mrb[0].mxu0 %v3471
      %v3536 = vpop.f32.mrb[0].mxu0
      %v3537 = vadd.f32 0.0, %v3536
      %v3538 = vpop.f32.mrb[0].mxu0
      %v3539 = vpop.f32.mrb[0].mxu0
      %v3540 = vadd.f32 0.0, %v3539
      %v3541 = vpop.f32.mrb[0].mxu0
      %3542 = vmatprep.mubr.bf16.mxu0 0
      %3543 = vmatmul.mubr.bf16.gmra.mrb[0].mxu0 %v3474
      %v3544 = vpop.f32.mrb[0].mxu0
      %v3545 = vadd.f32 0.0, %v3544
      %v3546 = vpop.f32.mrb[0].mxu0
      %v3547 = vpop.f32.mrb[0].mxu0
      %v3548 = vadd.f32 0.0, %v3547
      %v3549 = vpop.f32.mrb[0].mxu0
      %3550 = vmatprep.mubr.bf16.mxu0 0
      %3551 = vmatmul.mubr.bf16.gmra.mrb[0].mxu0 %v3477
      %v3552 = vpop.f32.mrb[0].mxu0
      %v3553 = vadd.f32 0.0, %v3552
      %v3554 = vpop.f32.mrb[0].mxu0
      %v3555 = vpop.f32.mrb[0].mxu0
      %v3556 = vadd.f32 0.0, %v3555
      %v3557 = vpop.f32.mrb[0].mxu0
      %3558 = vmatprep.mubr.bf16.mxu0 0
      %3559 = vmatmul.mubr.bf16.gmra.mrb[0].mxu0 %v3480
      %v3560 = vpop.f32.mrb[0].mxu0
      %v3561 = vadd.f32 0.0, %v3560
      %v3562 = vpop.f32.mrb[0].mxu0
      %v3563 = vpop.f32.mrb[0].mxu0
      %v3564 = vadd.f32 0.0, %v3563
      %v3565 = vpop.f32.mrb[0].mxu0
      %3566 = vmatprep.mubr.bf16.mxu0 0
      %3567 = vmatmul.mubr.bf16.gmra.mrb[0].mxu0 %v3483
      %v3568 = vpop.f32.mrb[0].mxu0
      %v3569 = vadd.f32 0.0, %v3568
      %v3570 = vpop.f32.mrb[0].mxu0
      %v3571 = vpop.f32.mrb[0].mxu0
      %v3572 = vadd.f32 0.0, %v3571
      %v3573 = vpop.f32.mrb[0].mxu0
      %3574 = vmatprep.mubr.bf16.mxu0 0
      %3575 = vmatmul.mubr.bf16.gmra.mrb[0].mxu0 %v3486
      %v3576 = vpop.f32.mrb[0].mxu0
      %v3577 = vadd.f32 0.0, %v3576
      %v3578 = vpop.f32.mrb[0].mxu0
      %v3579 = vpop.f32.mrb[0].mxu0
      %v3580 = vadd.f32 0.0, %v3579
      %v3581 = vpop.f32.mrb[0].mxu0
      %3582 = vmatprep.mubr.bf16.mxu0 0
      %3583 = vmatmul.mubr.bf16.gmra.mrb[0].mxu0 %v3489
      %v3584 = vpop.f32.mrb[0].mxu0
      %v3585 = vadd.f32 0.0, %v3584
      %v3586 = vpop.f32.mrb[0].mxu0
      %v3587 = vpop.f32.mrb[0].mxu0
      %v3588 = vadd.f32 0.0, %v3587
      %v3589 = vpop.f32.mrb[0].mxu0
      %3590 = vdwg.mxu0
      %v3591 = vadd.f32 %v2977, %v3529
      %v3592 = vadd.f32 %v2978, %v3532
      %v3593 = vadd.f32 %v2979, %v3537
      %v3594 = vadd.f32 %v2980, %v3540
      %v3595 = vadd.f32 %v2981, %v3545
      %v3596 = vadd.f32 %v2982, %v3548
      %v3597 = vadd.f32 %v2983, %v3553
      %v3598 = vadd.f32 %v2984, %v3556
      %v3599 = vadd.f32 %v2985, %v3561
      %v3600 = vadd.f32 %v2986, %v3564
      %v3601 = vadd.f32 %v2987, %v3569
      %v3602 = vadd.f32 %v2988, %v3572
      %v3603 = vadd.f32 %v2989, %v3577
      %v3604 = vadd.f32 %v2990, %v3580
      %v3605 = vadd.f32 %v2991, %v3585
      %v3606 = vadd.f32 %v2992, %v3588
      %v3607 = vmul.f32 %v3314, 0.25
      %v3608 = vmul.f32 %v3315, 0.25
      %v3609 = vmul.f32 %v3316, 0.25
      %v3610 = vmul.f32 %v3317, 0.25
      %v3611 = vmul.f32 %v3318, 0.25
      %v3612 = vmul.f32 %v3319, 0.25
      %v3613 = vmul.f32 %v3320, 0.25
      %v3614 = vmul.f32 %v3321, 0.25
      %v3615 = vmul.f32 %v3322, 0.25
      %v3616 = vmul.f32 %v3323, 0.25
      %v3617 = vmul.f32 %v3324, 0.25
      %v3618 = vmul.f32 %v3325, 0.25
      %v3619 = vmul.f32 %v3326, 0.25
      %v3620 = vmul.f32 %v3327, 0.25
      %v3621 = vmul.f32 %v3328, 0.25
      %v3622 = vmul.f32 %v3329, 0.25
      %v3623 = vpack.c.bf16 %v3608, %v3607
      %v3624 = vpack.c.bf16 %v3610, %v3609
      %v3625 = vpack.c.bf16 %v3612, %v3611
      %v3626 = vpack.c.bf16 %v3614, %v3613
      %v3627 = vpack.c.bf16 %v3616, %v3615
      %v3628 = vpack.c.bf16 %v3618, %v3617
      %v3629 = vpack.c.bf16 %v3620, %v3619
      %v3630 = vpack.c.bf16 %v3622, %v3621
      %v3639 = vunpack.c.l.b16 %v3623
      %v3640 = vunpack.c.h.b16 %v3623
      %v3641 = vunpack.c.l.b16 %v3624
      %v3642 = vunpack.c.h.b16 %v3624
      %v3643 = vunpack.c.l.b16 %v3625
      %v3644 = vunpack.c.h.b16 %v3625
      %v3645 = vunpack.c.l.b16 %v3626
      %v3646 = vunpack.c.h.b16 %v3626
      %v3647 = vunpack.c.l.b16 %v3627
      %v3648 = vunpack.c.h.b16 %v3627
      %v3649 = vunpack.c.l.b16 %v3628
      %v3650 = vunpack.c.h.b16 %v3628
      %v3651 = vunpack.c.l.b16 %v3629
      %v3652 = vunpack.c.h.b16 %v3629
      %v3653 = vunpack.c.l.b16 %v3630
      %v3654 = vunpack.c.h.b16 %v3630
      %v3655 = vpack.c.b16 %v3639, %v3639
      %v3656 = vpack.c.b16 %v3640, %v3640
      %v3657 = vpack.c.b16 %v3641, %v3641
      %v3658 = vpack.c.b16 %v3642, %v3642
      %v3659 = vpack.c.b16 %v3643, %v3643
      %v3660 = vpack.c.b16 %v3644, %v3644
      %v3661 = vpack.c.b16 %v3645, %v3645
      %v3662 = vpack.c.b16 %v3646, %v3646
      %v3663 = vpack.c.b16 %v3647, %v3647
      %v3664 = vpack.c.b16 %v3648, %v3648
      %v3665 = vpack.c.b16 %v3649, %v3649
      %v3666 = vpack.c.b16 %v3650, %v3650
      %v3667 = vpack.c.b16 %v3651, %v3651
      %v3668 = vpack.c.b16 %v3652, %v3652
      %v3669 = vpack.c.b16 %v3653, %v3653
      %v3670 = vpack.c.b16 %v3654, %v3654
      %3687 = vst [vmem:[%s694] sm:$0xf] %v3655
      %3688 = vst [vmem:[%s694 + $0x4] sm:$0xf] %v3656
      %3689 = vst [vmem:[%s694 + $0x8] sm:$0xf] %v3657
      %3690 = vst [vmem:[%s694 + $0xc] sm:$0xf] %v3658
      %3691 = vst [vmem:[%s694 + $0x10] sm:$0xf] %v3659
      %3692 = vst [vmem:[%s694 + $0x14] sm:$0xf] %v3660
      %3693 = vst [vmem:[%s694 + $0x18] sm:$0xf] %v3661
      %3694 = vst [vmem:[%s694 + $0x1c] sm:$0xf] %v3662
      %3695 = vst [vmem:[%s694 + $0x20] sm:$0xf] %v3663
      %3696 = vst [vmem:[%s694 + $0x24] sm:$0xf] %v3664
      %3697 = vst [vmem:[%s694 + $0x28] sm:$0xf] %v3665
      %3698 = vst [vmem:[%s694 + $0x2c] sm:$0xf] %v3666
      %3699 = vst [vmem:[%s694 + $0x30] sm:$0xf] %v3667
      %3700 = vst [vmem:[%s694 + $0x34] sm:$0xf] %v3668
      %3701 = vst [vmem:[%s694 + $0x38] sm:$0xf] %v3669
      %3702 = vst [vmem:[%s694 + $0x3c] sm:$0xf] %v3670
      %v3703 = vadd.f32 %v733, %v3591
      %v3704 = vadd.f32 %v734, %v3592
      %v3705 = vadd.f32 %v735, %v3593
      %v3706 = vadd.f32 %v736, %v3594
      %v3707 = vadd.f32 %v737, %v3595
      %v3708 = vadd.f32 %v738, %v3596
      %v3709 = vadd.f32 %v739, %v3597
      %v3710 = vadd.f32 %v740, %v3598
      %v3711 = vadd.f32 %v741, %v3599
      %v3712 = vadd.f32 %v742, %v3600
      %v3713 = vadd.f32 %v743, %v3601
      %v3714 = vadd.f32 %v744, %v3602
      %v3715 = vadd.f32 %v745, %v3603
      %v3716 = vadd.f32 %v746, %v3604
      %v3717 = vadd.f32 %v747, %v3605
      %v3718 = vadd.f32 %v748, %v3606
      %v3719 = vld [vmem:[%s658] sm:$0x1]
      %v3721 = vlaneseq
      %v3722 = vshrl.u32 %v3721, 7
      %v3723 = vsub.s32 0, %v3722
      %v3724 = vrot.slane %v3719, %v3723
      %v3726 = vadd.f32 %v3703, %v3724
      %v3727 = vadd.f32 %v3704, %v3724
      %v3728 = vadd.f32 %v3705, %v3724
      %v3729 = vadd.f32 %v3706, %v3724
      %v3730 = vadd.f32 %v3707, %v3724
      %v3731 = vadd.f32 %v3708, %v3724
      %v3732 = vadd.f32 %v3709, %v3724
      %v3733 = vadd.f32 %v3710, %v3724
      %v3734 = vadd.f32 %v3711, %v3724
      %v3735 = vadd.f32 %v3712, %v3724
      %v3736 = vadd.f32 %v3713, %v3724
      %v3737 = vadd.f32 %v3714, %v3724
      %v3738 = vadd.f32 %v3715, %v3724
      %v3739 = vadd.f32 %v3716, %v3724
      %v3740 = vadd.f32 %v3717, %v3724
      %v3741 = vadd.f32 %v3718, %v3724
      %v3742 = vld [vmem:[%s661] sm:$0x1]
      %v3743 = vld [vmem:[%s664] sm:$0x1]
      %v3744 = vsel %vm755, %v3726, 0.0
      %3745 = vadd.xlane.f32.xlu0 %v3744
      %v3746 = vpop.xlane.xlu0 %3745
      %v3747 = vsel %vm755, %v3727, 0.0
      %3748 = vadd.xlane.f32.xlu0 %v3747
      %v3749 = vpop.xlane.xlu0 %3748
      %v3750 = vsel %vm755, %v3728, 0.0
      %3751 = vadd.xlane.f32.xlu0 %v3750
      %v3752 = vpop.xlane.xlu0 %3751
      %v3753 = vsel %vm755, %v3729, 0.0
      %3754 = vadd.xlane.f32.xlu0 %v3753
      %v3755 = vpop.xlane.xlu0 %3754
      %v3756 = vsel %vm755, %v3730, 0.0
      %3757 = vadd.xlane.f32.xlu0 %v3756
      %v3758 = vpop.xlane.xlu0 %3757
      %v3759 = vsel %vm755, %v3731, 0.0
      %3760 = vadd.xlane.f32.xlu0 %v3759
      %v3761 = vpop.xlane.xlu0 %3760
      %v3762 = vsel %vm755, %v3732, 0.0
      %3763 = vadd.xlane.f32.xlu0 %v3762
      %v3764 = vpop.xlane.xlu0 %3763
      %v3765 = vsel %vm755, %v3733, 0.0
      %3766 = vadd.xlane.f32.xlu0 %v3765
      %v3767 = vpop.xlane.xlu0 %3766
      %v3768 = vsel %vm755, %v3734, 0.0
      %3769 = vadd.xlane.f32.xlu0 %v3768
      %v3770 = vpop.xlane.xlu0 %3769
      %v3771 = vsel %vm755, %v3735, 0.0
      %3772 = vadd.xlane.f32.xlu0 %v3771
      %v3773 = vpop.xlane.xlu0 %3772
      %v3774 = vsel %vm755, %v3736, 0.0
      %3775 = vadd.xlane.f32.xlu0 %v3774
      %v3776 = vpop.xlane.xlu0 %3775
      %v3777 = vsel %vm755, %v3737, 0.0
      %3778 = vadd.xlane.f32.xlu0 %v3777
      %v3779 = vpop.xlane.xlu0 %3778
      %v3780 = vsel %vm755, %v3738, 0.0
      %3781 = vadd.xlane.f32.xlu0 %v3780
      %v3782 = vpop.xlane.xlu0 %3781
      %v3783 = vsel %vm755, %v3739, 0.0
      %3784 = vadd.xlane.f32.xlu0 %v3783
      %v3785 = vpop.xlane.xlu0 %3784
      %v3786 = vsel %vm755, %v3740, 0.0
      %3787 = vadd.xlane.f32.xlu0 %v3786
      %v3788 = vpop.xlane.xlu0 %3787
      %v3789 = vsel %vm755, %v3741, 0.0
      %3790 = vadd.xlane.f32.xlu0 %v3789
      %v3791 = vpop.xlane.xlu0 %3790
      %v3792 = vmul.f32 %v3746, %v804
      %v3793 = vmul.f32 %v3749, %v804
      %v3794 = vmul.f32 %v3752, %v804
      %v3795 = vmul.f32 %v3755, %v804
      %v3796 = vmul.f32 %v3758, %v804
      %v3797 = vmul.f32 %v3761, %v804
      %v3798 = vmul.f32 %v3764, %v804
      %v3799 = vmul.f32 %v3767, %v804
      %v3800 = vmul.f32 %v3770, %v804
      %v3801 = vmul.f32 %v3773, %v804
      %v3802 = vmul.f32 %v3776, %v804
      %v3803 = vmul.f32 %v3779, %v804
      %v3804 = vmul.f32 %v3782, %v804
      %v3805 = vmul.f32 %v3785, %v804
      %v3806 = vmul.f32 %v3788, %v804
      %v3807 = vmul.f32 %v3791, %v804
      %v3808 = vsub.f32 %v3726, %v3792
      %v3809 = vsub.f32 %v3727, %v3793
      %v3810 = vsub.f32 %v3728, %v3794
      %v3811 = vsub.f32 %v3729, %v3795
      %v3812 = vsub.f32 %v3730, %v3796
      %v3813 = vsub.f32 %v3731, %v3797
      %v3814 = vsub.f32 %v3732, %v3798
      %v3815 = vsub.f32 %v3733, %v3799
      %v3816 = vsub.f32 %v3734, %v3800
      %v3817 = vsub.f32 %v3735, %v3801
      %v3818 = vsub.f32 %v3736, %v3802
      %v3819 = vsub.f32 %v3737, %v3803
      %v3820 = vsub.f32 %v3738, %v3804
      %v3821 = vsub.f32 %v3739, %v3805
      %v3822 = vsub.f32 %v3740, %v3806
      %v3823 = vsub.f32 %v3741, %v3807
      %v3824 = vmul.f32 %v3808, %v3808
      %v3825 = vmul.f32 %v3809, %v3809
      %v3826 = vmul.f32 %v3810, %v3810
      %v3827 = vmul.f32 %v3811, %v3811
      %v3828 = vmul.f32 %v3812, %v3812
      %v3829 = vmul.f32 %v3813, %v3813
      %v3830 = vmul.f32 %v3814, %v3814
      %v3831 = vmul.f32 %v3815, %v3815
      %v3832 = vmul.f32 %v3816, %v3816
      %v3833 = vmul.f32 %v3817, %v3817
      %v3834 = vmul.f32 %v3818, %v3818
      %v3835 = vmul.f32 %v3819, %v3819
      %v3836 = vmul.f32 %v3820, %v3820
      %v3837 = vmul.f32 %v3821, %v3821
      %v3838 = vmul.f32 %v3822, %v3822
      %v3839 = vmul.f32 %v3823, %v3823
      %v3840 = vsel %vm755, %v3824, 0.0
      %3841 = vadd.xlane.f32.xlu0 %v3840
      %v3842 = vpop.xlane.xlu0 %3841
      %v3843 = vsel %vm755, %v3825, 0.0
      %3844 = vadd.xlane.f32.xlu0 %v3843
      %v3845 = vpop.xlane.xlu0 %3844
      %v3846 = vsel %vm755, %v3826, 0.0
      %3847 = vadd.xlane.f32.xlu0 %v3846
      %v3848 = vpop.xlane.xlu0 %3847
      %v3849 = vsel %vm755, %v3827, 0.0
      %3850 = vadd.xlane.f32.xlu0 %v3849
      %v3851 = vpop.xlane.xlu0 %3850
      %v3852 = vsel %vm755, %v3828, 0.0
      %3853 = vadd.xlane.f32.xlu0 %v3852
      %v3854 = vpop.xlane.xlu0 %3853
      %v3855 = vsel %vm755, %v3829, 0.0
      %3856 = vadd.xlane.f32.xlu0 %v3855
      %v3857 = vpop.xlane.xlu0 %3856
      %v3858 = vsel %vm755, %v3830, 0.0
      %3859 = vadd.xlane.f32.xlu0 %v3858
      %v3860 = vpop.xlane.xlu0 %3859
      %v3861 = vsel %vm755, %v3831, 0.0
      %3862 = vadd.xlane.f32.xlu0 %v3861
      %v3863 = vpop.xlane.xlu0 %3862
      %v3864 = vsel %vm755, %v3832, 0.0
      %3865 = vadd.xlane.f32.xlu0 %v3864
      %v3866 = vpop.xlane.xlu0 %3865
      %v3867 = vsel %vm755, %v3833, 0.0
      %3868 = vadd.xlane.f32.xlu0 %v3867
      %v3869 = vpop.xlane.xlu0 %3868
      %v3870 = vsel %vm755, %v3834, 0.0
      %3871 = vadd.xlane.f32.xlu0 %v3870
      %v3872 = vpop.xlane.xlu0 %3871
      %v3873 = vsel %vm755, %v3835, 0.0
      %3874 = vadd.xlane.f32.xlu0 %v3873
      %v3875 = vpop.xlane.xlu0 %3874
      %v3876 = vsel %vm755, %v3836, 0.0
      %3877 = vadd.xlane.f32.xlu0 %v3876
      %v3878 = vpop.xlane.xlu0 %3877
      %v3879 = vsel %vm755, %v3837, 0.0
      %3880 = vadd.xlane.f32.xlu0 %v3879
      %v3881 = vpop.xlane.xlu0 %3880
      %v3882 = vsel %vm755, %v3838, 0.0
      %3883 = vadd.xlane.f32.xlu0 %v3882
      %v3884 = vpop.xlane.xlu0 %3883
      %v3885 = vsel %vm755, %v3839, 0.0
      %3886 = vadd.xlane.f32.xlu0 %v3885
      %v3887 = vpop.xlane.xlu0 %3886
      %v3888 = vmul.f32 %v3842, %v804
      %v3889 = vmul.f32 %v3845, %v804
      %v3890 = vmul.f32 %v3848, %v804
      %v3891 = vmul.f32 %v3851, %v804
      %v3892 = vmul.f32 %v3854, %v804
      %v3893 = vmul.f32 %v3857, %v804
      %v3894 = vmul.f32 %v3860, %v804
      %v3895 = vmul.f32 %v3863, %v804
      %v3896 = vmul.f32 %v3866, %v804
      %v3897 = vmul.f32 %v3869, %v804
      %v3898 = vmul.f32 %v3872, %v804
      %v3899 = vmul.f32 %v3875, %v804
      %v3900 = vmul.f32 %v3878, %v804
      %v3901 = vmul.f32 %v3881, %v804
      %v3902 = vmul.f32 %v3884, %v804
      %v3903 = vmul.f32 %v3887, %v804
      %v3904 = vadd.f32 %v3888, 1e-06
      %v3905 = vadd.f32 %v3889, 1e-06
      %v3906 = vadd.f32 %v3890, 1e-06
      %v3907 = vadd.f32 %v3891, 1e-06
      %v3908 = vadd.f32 %v3892, 1e-06
      %v3909 = vadd.f32 %v3893, 1e-06
      %v3910 = vadd.f32 %v3894, 1e-06
      %v3911 = vadd.f32 %v3895, 1e-06
      %v3912 = vadd.f32 %v3896, 1e-06
      %v3913 = vadd.f32 %v3897, 1e-06
      %v3914 = vadd.f32 %v3898, 1e-06
      %v3915 = vadd.f32 %v3899, 1e-06
      %v3916 = vadd.f32 %v3900, 1e-06
      %v3917 = vadd.f32 %v3901, 1e-06
      %v3918 = vadd.f32 %v3902, 1e-06
      %v3919 = vadd.f32 %v3903, 1e-06
      %v3920 = vrsqrt.pop %v3904
      %v3921 = vrsqrt.pop %v3905
      %v3922 = vrsqrt.pop %v3906
      %v3923 = vrsqrt.pop %v3907
      %v3924 = vrsqrt.pop %v3908
      %v3925 = vrsqrt.pop %v3909
      %v3926 = vrsqrt.pop %v3910
      %v3927 = vrsqrt.pop %v3911
      %v3928 = vrsqrt.pop %v3912
      %v3929 = vrsqrt.pop %v3913
      %v3930 = vrsqrt.pop %v3914
      %v3931 = vrsqrt.pop %v3915
      %v3932 = vrsqrt.pop %v3916
      %v3933 = vrsqrt.pop %v3917
      %v3934 = vrsqrt.pop %v3918
      %v3935 = vrsqrt.pop %v3919
      %v3936 = vmul.f32 %v3808, %v3920
      %v3937 = vmul.f32 %v3809, %v3921
      %v3938 = vmul.f32 %v3810, %v3922
      %v3939 = vmul.f32 %v3811, %v3923
      %v3940 = vmul.f32 %v3812, %v3924
      %v3941 = vmul.f32 %v3813, %v3925
      %v3942 = vmul.f32 %v3814, %v3926
      %v3943 = vmul.f32 %v3815, %v3927
      %v3944 = vmul.f32 %v3816, %v3928
      %v3945 = vmul.f32 %v3817, %v3929
      %v3946 = vmul.f32 %v3818, %v3930
      %v3947 = vmul.f32 %v3819, %v3931
      %v3948 = vmul.f32 %v3820, %v3932
      %v3949 = vmul.f32 %v3821, %v3933
      %v3950 = vmul.f32 %v3822, %v3934
      %v3951 = vmul.f32 %v3823, %v3935
      %v3953 = vlaneseq
      %v3954 = vshrl.u32 %v3953, 7
      %v3955 = vsub.s32 0, %v3954
      %v3956 = vrot.slane %v3742, %v3955
      %v3958 = vmul.f32 %v3936, %v3956
      %v3959 = vmul.f32 %v3937, %v3956
      %v3960 = vmul.f32 %v3938, %v3956
      %v3961 = vmul.f32 %v3939, %v3956
      %v3962 = vmul.f32 %v3940, %v3956
      %v3963 = vmul.f32 %v3941, %v3956
      %v3964 = vmul.f32 %v3942, %v3956
      %v3965 = vmul.f32 %v3943, %v3956
      %v3966 = vmul.f32 %v3944, %v3956
      %v3967 = vmul.f32 %v3945, %v3956
      %v3968 = vmul.f32 %v3946, %v3956
      %v3969 = vmul.f32 %v3947, %v3956
      %v3970 = vmul.f32 %v3948, %v3956
      %v3971 = vmul.f32 %v3949, %v3956
      %v3972 = vmul.f32 %v3950, %v3956
      %v3973 = vmul.f32 %v3951, %v3956
      %v3975 = vlaneseq
      %v3976 = vshrl.u32 %v3975, 7
      %v3977 = vsub.s32 0, %v3976
      %v3978 = vrot.slane %v3743, %v3977
      %v3980 = vadd.f32 %v3958, %v3978
      %v3981 = vadd.f32 %v3959, %v3978
      %v3982 = vadd.f32 %v3960, %v3978
      %v3983 = vadd.f32 %v3961, %v3978
      %v3984 = vadd.f32 %v3962, %v3978
      %v3985 = vadd.f32 %v3963, %v3978
      %v3986 = vadd.f32 %v3964, %v3978
      %v3987 = vadd.f32 %v3965, %v3978
      %v3988 = vadd.f32 %v3966, %v3978
      %v3989 = vadd.f32 %v3967, %v3978
      %v3990 = vadd.f32 %v3968, %v3978
      %v3991 = vadd.f32 %v3969, %v3978
      %v3992 = vadd.f32 %v3970, %v3978
      %v3993 = vadd.f32 %v3971, %v3978
      %v3994 = vadd.f32 %v3972, %v3978
      %v3995 = vadd.f32 %v3973, %v3978
      %v3996 = vpack.c.bf16 %v3981, %v3980
      %v3997 = vpack.c.bf16 %v3983, %v3982
      %v3998 = vpack.c.bf16 %v3985, %v3984
      %v3999 = vpack.c.bf16 %v3987, %v3986
      %v4000 = vpack.c.bf16 %v3989, %v3988
      %v4001 = vpack.c.bf16 %v3991, %v3990
      %v4002 = vpack.c.bf16 %v3993, %v3992
      %v4003 = vpack.c.bf16 %v3995, %v3994
      %v4004 = vld [vmem:[%s669] sm:$0xf]
      %v4005 = vld [vmem:[%s669 + $0x4] sm:$0xf]
      %v4006 = vld [vmem:[%s669 + $0x8] sm:$0xf]
      %v4007 = vld [vmem:[%s669 + $0xc] sm:$0xf]
      %v4008 = vld [vmem:[%s672] sm:$0x1]
      %v4010 = vlaneseq
      %v4011 = vshrl.u32 %v4010, 7
      %v4012 = vsub.s32 0, %v4011
      %v4013 = vrot.slane %v4008, %v4012
      %v4019 = vunpack.c.l.b16 %v4004
      %v4020 = vunpack.c.l.b16 %v4005
      %v4021 = vunpack.c.l.b16 %v4006
      %v4022 = vunpack.c.l.b16 %v4007
      %v4023 = vpack.c.b16 %v4020, %v4019
      %v4024 = vpack.c.b16 %v4022, %v4021
      %v4028 = vsel %vm755, %v3996, 0
      %v4031 = vsel %vm755, %v3997, 0
      %v4034 = vsel %vm755, %v3998, 0
      %v4037 = vsel %vm755, %v3999, 0
      %v4040 = vsel %vm755, %v4000, 0
      %v4043 = vsel %vm755, %v4001, 0
      %v4046 = vsel %vm755, %v4002, 0
      %v4049 = vsel %vm755, %v4003, 0
      %4051 = vmatprep.subr.bf16.mxu0 0
      %4052 = vmatpush1.bf16.msra.mxu0 %v4023
      %4053 = vmatprep.subr.bf16.mxu0 0
      %4054 = vmatpush1.bf16.msra.mxu0 %v4024
      %4055 = vmatprep.subr.bf16.mxu0 0
      %4056 = vmatpush1.bf16.msra.mxu0 0
      %4057 = vmatprep.subr.bf16.mxu0 0
      %4058 = vmatpush1.bf16.msra.mxu0 0
      %4059 = vmatprep.subr.bf16.mxu0 0
      %4060 = vmatpush1.bf16.msra.mxu0 0
      %4061 = vmatprep.subr.bf16.mxu0 0
      %4062 = vmatpush1.bf16.msra.mxu0 0
      %4063 = vmatprep.subr.bf16.mxu0 0
      %4064 = vmatpush1.bf16.msra.mxu0 0
      %4065 = vmatprep.subr.bf16.mxu0 0
      %4066 = vmatpush1.bf16.msra.mxu0 0
      %4067 = vmatprep.subr.bf16.mxu0 0
      %4068 = vmatpush1.bf16.msra.mxu0 0
      %4069 = vmatprep.subr.bf16.mxu0 0
      %4070 = vmatpush1.bf16.msra.mxu0 0
      %4071 = vmatprep.subr.bf16.mxu0 0
      %4072 = vmatpush1.bf16.msra.mxu0 0
      %4073 = vmatprep.subr.bf16.mxu0 0
      %4074 = vmatpush1.bf16.msra.mxu0 0
      %4075 = vmatprep.subr.bf16.mxu0 0
      %4076 = vmatpush1.bf16.msra.mxu0 0
      %4077 = vmatprep.subr.bf16.mxu0 0
      %4078 = vmatpush1.bf16.msra.mxu0 0
      %4079 = vmatprep.subr.bf16.mxu0 0
      %4080 = vmatpush1.bf16.msra.mxu0 0
      %4081 = vmatprep.subr.bf16.mxu0 0
      %4082 = vmatpush1.bf16.msra.mxu0 0
      %4083 = vmatprep.mubr.bf16.mxu0 0
      %4084 = vmatmul.mubr.bf16.gmra.mrb[0].mxu0 %v4028
      %v4085 = vpop.f32.mrb[0].mxu0
      %v4086 = vadd.f32 %v4013, %v4085
      %v4087 = vpop.f32.mrb[0].mxu0
      %v4088 = vpop.f32.mrb[0].mxu0
      %v4089 = vadd.f32 %v4013, %v4088
      %v4090 = vpop.f32.mrb[0].mxu0
      %4091 = vmatprep.mubr.bf16.mxu0 0
      %4092 = vmatmul.mubr.bf16.gmra.mrb[0].mxu0 %v4031
      %v4093 = vpop.f32.mrb[0].mxu0
      %v4094 = vadd.f32 %v4013, %v4093
      %v4095 = vpop.f32.mrb[0].mxu0
      %v4096 = vpop.f32.mrb[0].mxu0
      %v4097 = vadd.f32 %v4013, %v4096
      %v4098 = vpop.f32.mrb[0].mxu0
      %4099 = vmatprep.mubr.bf16.mxu0 0
      %4100 = vmatmul.mubr.bf16.gmra.mrb[0].mxu0 %v4034
      %v4101 = vpop.f32.mrb[0].mxu0
      %v4102 = vadd.f32 %v4013, %v4101
      %v4103 = vpop.f32.mrb[0].mxu0
      %v4104 = vpop.f32.mrb[0].mxu0
      %v4105 = vadd.f32 %v4013, %v4104
      %v4106 = vpop.f32.mrb[0].mxu0
      %4107 = vmatprep.mubr.bf16.mxu0 0
      %4108 = vmatmul.mubr.bf16.gmra.mrb[0].mxu0 %v4037
      %v4109 = vpop.f32.mrb[0].mxu0
      %v4110 = vadd.f32 %v4013, %v4109
      %v4111 = vpop.f32.mrb[0].mxu0
      %v4112 = vpop.f32.mrb[0].mxu0
      %v4113 = vadd.f32 %v4013, %v4112
      %v4114 = vpop.f32.mrb[0].mxu0
      %4115 = vmatprep.mubr.bf16.mxu0 0
      %4116 = vmatmul.mubr.bf16.gmra.mrb[0].mxu0 %v4040
      %v4117 = vpop.f32.mrb[0].mxu0
      %v4118 = vadd.f32 %v4013, %v4117
      %v4119 = vpop.f32.mrb[0].mxu0
      %v4120 = vpop.f32.mrb[0].mxu0
      %v4121 = vadd.f32 %v4013, %v4120
      %v4122 = vpop.f32.mrb[0].mxu0
      %4123 = vmatprep.mubr.bf16.mxu0 0
      %4124 = vmatmul.mubr.bf16.gmra.mrb[0].mxu0 %v4043
      %v4125 = vpop.f32.mrb[0].mxu0
      %v4126 = vadd.f32 %v4013, %v4125
      %v4127 = vpop.f32.mrb[0].mxu0
      %v4128 = vpop.f32.mrb[0].mxu0
      %v4129 = vadd.f32 %v4013, %v4128
      %v4130 = vpop.f32.mrb[0].mxu0
      %4131 = vmatprep.mubr.bf16.mxu0 0
      %4132 = vmatmul.mubr.bf16.gmra.mrb[0].mxu0 %v4046
      %v4133 = vpop.f32.mrb[0].mxu0
      %v4134 = vadd.f32 %v4013, %v4133
      %v4135 = vpop.f32.mrb[0].mxu0
      %v4136 = vpop.f32.mrb[0].mxu0
      %v4137 = vadd.f32 %v4013, %v4136
      %v4138 = vpop.f32.mrb[0].mxu0
      %4139 = vmatprep.mubr.bf16.mxu0 0
      %4140 = vmatmul.mubr.bf16.gmra.mrb[0].mxu0 %v4049
      %v4141 = vpop.f32.mrb[0].mxu0
      %v4142 = vadd.f32 %v4013, %v4141
      %v4143 = vpop.f32.mrb[0].mxu0
      %v4144 = vpop.f32.mrb[0].mxu0
      %v4145 = vadd.f32 %v4013, %v4144
      %v4146 = vpop.f32.mrb[0].mxu0
      %4147 = vdwg.mxu0
      %v4148 = vmul.f32 %v4086, %v4086
      %v4149 = vmul.f32 %v4089, %v4089
      %v4150 = vmul.f32 %v4094, %v4094
      %v4151 = vmul.f32 %v4097, %v4097
      %v4152 = vmul.f32 %v4102, %v4102
      %v4153 = vmul.f32 %v4105, %v4105
      %v4154 = vmul.f32 %v4110, %v4110
      %v4155 = vmul.f32 %v4113, %v4113
      %v4156 = vmul.f32 %v4118, %v4118
      %v4157 = vmul.f32 %v4121, %v4121
      %v4158 = vmul.f32 %v4126, %v4126
      %v4159 = vmul.f32 %v4129, %v4129
      %v4160 = vmul.f32 %v4134, %v4134
      %v4161 = vmul.f32 %v4137, %v4137
      %v4162 = vmul.f32 %v4142, %v4142
      %v4163 = vmul.f32 %v4145, %v4145
      %v4164 = vmul.f32 %v4086, %v4148
      %v4165 = vmul.f32 %v4089, %v4149
      %v4166 = vmul.f32 %v4094, %v4150
      %v4167 = vmul.f32 %v4097, %v4151
      %v4168 = vmul.f32 %v4102, %v4152
      %v4169 = vmul.f32 %v4105, %v4153
      %v4170 = vmul.f32 %v4110, %v4154
      %v4171 = vmul.f32 %v4113, %v4155
      %v4172 = vmul.f32 %v4118, %v4156
      %v4173 = vmul.f32 %v4121, %v4157
      %v4174 = vmul.f32 %v4126, %v4158
      %v4175 = vmul.f32 %v4129, %v4159
      %v4176 = vmul.f32 %v4134, %v4160
      %v4177 = vmul.f32 %v4137, %v4161
      %v4178 = vmul.f32 %v4142, %v4162
      %v4179 = vmul.f32 %v4145, %v4163
      %v4180 = vmul.f32 %v4164, 0.044715
      %v4181 = vmul.f32 %v4165, 0.044715
      %v4182 = vmul.f32 %v4166, 0.044715
      %v4183 = vmul.f32 %v4167, 0.044715
      %v4184 = vmul.f32 %v4168, 0.044715
      %v4185 = vmul.f32 %v4169, 0.044715
      %v4186 = vmul.f32 %v4170, 0.044715
      %v4187 = vmul.f32 %v4171, 0.044715
      %v4188 = vmul.f32 %v4172, 0.044715
      %v4189 = vmul.f32 %v4173, 0.044715
      %v4190 = vmul.f32 %v4174, 0.044715
      %v4191 = vmul.f32 %v4175, 0.044715
      %v4192 = vmul.f32 %v4176, 0.044715
      %v4193 = vmul.f32 %v4177, 0.044715
      %v4194 = vmul.f32 %v4178, 0.044715
      %v4195 = vmul.f32 %v4179, 0.044715
      %v4196 = vadd.f32 %v4086, %v4180
      %v4197 = vadd.f32 %v4089, %v4181
      %v4198 = vadd.f32 %v4094, %v4182
      %v4199 = vadd.f32 %v4097, %v4183
      %v4200 = vadd.f32 %v4102, %v4184
      %v4201 = vadd.f32 %v4105, %v4185
      %v4202 = vadd.f32 %v4110, %v4186
      %v4203 = vadd.f32 %v4113, %v4187
      %v4204 = vadd.f32 %v4118, %v4188
      %v4205 = vadd.f32 %v4121, %v4189
      %v4206 = vadd.f32 %v4126, %v4190
      %v4207 = vadd.f32 %v4129, %v4191
      %v4208 = vadd.f32 %v4134, %v4192
      %v4209 = vadd.f32 %v4137, %v4193
      %v4210 = vadd.f32 %v4142, %v4194
      %v4211 = vadd.f32 %v4145, %v4195
      %v4212 = vmul.f32 %v4196, 0.7978846
      %v4213 = vmul.f32 %v4197, 0.7978846
      %v4214 = vmul.f32 %v4198, 0.7978846
      %v4215 = vmul.f32 %v4199, 0.7978846
      %v4216 = vmul.f32 %v4200, 0.7978846
      %v4217 = vmul.f32 %v4201, 0.7978846
      %v4218 = vmul.f32 %v4202, 0.7978846
      %v4219 = vmul.f32 %v4203, 0.7978846
      %v4220 = vmul.f32 %v4204, 0.7978846
      %v4221 = vmul.f32 %v4205, 0.7978846
      %v4222 = vmul.f32 %v4206, 0.7978846
      %v4223 = vmul.f32 %v4207, 0.7978846
      %v4224 = vmul.f32 %v4208, 0.7978846
      %v4225 = vmul.f32 %v4209, 0.7978846
      %v4226 = vmul.f32 %v4210, 0.7978846
      %v4227 = vmul.f32 %v4211, 0.7978846
      %v4228 = vtanh.pop %v4212
      %v4229 = vtanh.pop %v4213
      %v4230 = vtanh.pop %v4214
      %v4231 = vtanh.pop %v4215
      %v4232 = vtanh.pop %v4216
      %v4233 = vtanh.pop %v4217
      %v4234 = vtanh.pop %v4218
      %v4235 = vtanh.pop %v4219
      %v4236 = vtanh.pop %v4220
      %v4237 = vtanh.pop %v4221
      %v4238 = vtanh.pop %v4222
      %v4239 = vtanh.pop %v4223
      %v4240 = vtanh.pop %v4224
      %v4241 = vtanh.pop %v4225
      %v4242 = vtanh.pop %v4226
      %v4243 = vtanh.pop %v4227
      %v4244 = vadd.f32 %v4228, 1.0
      %v4245 = vadd.f32 %v4229, 1.0
      %v4246 = vadd.f32 %v4230, 1.0
      %v4247 = vadd.f32 %v4231, 1.0
      %v4248 = vadd.f32 %v4232, 1.0
      %v4249 = vadd.f32 %v4233, 1.0
      %v4250 = vadd.f32 %v4234, 1.0
      %v4251 = vadd.f32 %v4235, 1.0
      %v4252 = vadd.f32 %v4236, 1.0
      %v4253 = vadd.f32 %v4237, 1.0
      %v4254 = vadd.f32 %v4238, 1.0
      %v4255 = vadd.f32 %v4239, 1.0
      %v4256 = vadd.f32 %v4240, 1.0
      %v4257 = vadd.f32 %v4241, 1.0
      %v4258 = vadd.f32 %v4242, 1.0
      %v4259 = vadd.f32 %v4243, 1.0
      %v4260 = vmul.f32 %v4244, 0.5
      %v4261 = vmul.f32 %v4245, 0.5
      %v4262 = vmul.f32 %v4246, 0.5
      %v4263 = vmul.f32 %v4247, 0.5
      %v4264 = vmul.f32 %v4248, 0.5
      %v4265 = vmul.f32 %v4249, 0.5
      %v4266 = vmul.f32 %v4250, 0.5
      %v4267 = vmul.f32 %v4251, 0.5
      %v4268 = vmul.f32 %v4252, 0.5
      %v4269 = vmul.f32 %v4253, 0.5
      %v4270 = vmul.f32 %v4254, 0.5
      %v4271 = vmul.f32 %v4255, 0.5
      %v4272 = vmul.f32 %v4256, 0.5
      %v4273 = vmul.f32 %v4257, 0.5
      %v4274 = vmul.f32 %v4258, 0.5
      %v4275 = vmul.f32 %v4259, 0.5
      %v4276 = vmul.f32 %v4086, %v4260
      %v4277 = vmul.f32 %v4089, %v4261
      %v4278 = vmul.f32 %v4094, %v4262
      %v4279 = vmul.f32 %v4097, %v4263
      %v4280 = vmul.f32 %v4102, %v4264
      %v4281 = vmul.f32 %v4105, %v4265
      %v4282 = vmul.f32 %v4110, %v4266
      %v4283 = vmul.f32 %v4113, %v4267
      %v4284 = vmul.f32 %v4118, %v4268
      %v4285 = vmul.f32 %v4121, %v4269
      %v4286 = vmul.f32 %v4126, %v4270
      %v4287 = vmul.f32 %v4129, %v4271
      %v4288 = vmul.f32 %v4134, %v4272
      %v4289 = vmul.f32 %v4137, %v4273
      %v4290 = vmul.f32 %v4142, %v4274
      %v4291 = vmul.f32 %v4145, %v4275
      %v4292 = vpack.c.bf16 %v4277, %v4276
      %v4293 = vpack.c.bf16 %v4279, %v4278
      %v4294 = vpack.c.bf16 %v4281, %v4280
      %v4295 = vpack.c.bf16 %v4283, %v4282
      %v4296 = vpack.c.bf16 %v4285, %v4284
      %v4297 = vpack.c.bf16 %v4287, %v4286
      %v4298 = vpack.c.bf16 %v4289, %v4288
      %v4299 = vpack.c.bf16 %v4291, %v4290
      %v4300 = vld [vmem:[%s677] sm:$0xf]
      %v4301 = vld [vmem:[%s677 + $0x4] sm:$0xf]
      %v4302 = vld [vmem:[%s677 + $0x8] sm:$0xf]
      %v4303 = vld [vmem:[%s677 + $0xc] sm:$0xf]
      %v4304 = vld [vmem:[%s677 + $0x10] sm:$0xf]
      %v4305 = vld [vmem:[%s677 + $0x14] sm:$0xf]
      %v4306 = vld [vmem:[%s677 + $0x18] sm:$0xf]
      %v4307 = vld [vmem:[%s677 + $0x1c] sm:$0xf]
      %v4308 = vld [vmem:[%s680] sm:$0x1]
      %v4310 = vlaneseq
      %v4311 = vshrl.u32 %v4310, 7
      %v4312 = vsub.s32 0, %v4311
      %v4313 = vrot.slane %v4308, %v4312
      %v4323 = vunpack.c.l.b16 %v4300
      %v4324 = vunpack.c.l.b16 %v4301
      %v4325 = vunpack.c.l.b16 %v4302
      %v4326 = vunpack.c.l.b16 %v4303
      %v4327 = vunpack.c.l.b16 %v4304
      %v4328 = vunpack.c.l.b16 %v4305
      %v4329 = vunpack.c.l.b16 %v4306
      %v4330 = vunpack.c.l.b16 %v4307
      %v4331 = vpack.c.b16 %v4324, %v4323
      %v4332 = vpack.c.b16 %v4326, %v4325
      %v4333 = vpack.c.b16 %v4328, %v4327
      %v4334 = vpack.c.b16 %v4330, %v4329
      %vm4339 = vcmask 523264
      %v4341 = vsel %vm4339, %v4292, 0
      %v4344 = vsel %vm4339, %v4293, 0
      %v4347 = vsel %vm4339, %v4294, 0
      %v4350 = vsel %vm4339, %v4295, 0
      %v4353 = vsel %vm4339, %v4296, 0
      %v4356 = vsel %vm4339, %v4297, 0
      %v4359 = vsel %vm4339, %v4298, 0
      %v4362 = vsel %vm4339, %v4299, 0
      %4364 = vmatprep.subr.bf16.mxu0 0
      %4365 = vmatpush1.bf16.msra.mxu0 %v4331
      %4366 = vmatprep.subr.bf16.mxu0 0
      %4367 = vmatpush1.bf16.msra.mxu0 %v4332
      %4368 = vmatprep.subr.bf16.mxu0 0
      %4369 = vmatpush1.bf16.msra.mxu0 %v4333
      %4370 = vmatprep.subr.bf16.mxu0 0
      %4371 = vmatpush1.bf16.msra.mxu0 %v4334
      %4372 = vmatprep.subr.bf16.mxu0 0
      %4373 = vmatpush1.bf16.msra.mxu0 0
      %4374 = vmatprep.subr.bf16.mxu0 0
      %4375 = vmatpush1.bf16.msra.mxu0 0
      %4376 = vmatprep.subr.bf16.mxu0 0
      %4377 = vmatpush1.bf16.msra.mxu0 0
      %4378 = vmatprep.subr.bf16.mxu0 0
      %4379 = vmatpush1.bf16.msra.mxu0 0
      %4380 = vmatprep.subr.bf16.mxu0 0
      %4381 = vmatpush1.bf16.msra.mxu0 0
      %4382 = vmatprep.subr.bf16.mxu0 0
      %4383 = vmatpush1.bf16.msra.mxu0 0
      %4384 = vmatprep.subr.bf16.mxu0 0
      %4385 = vmatpush1.bf16.msra.mxu0 0
      %4386 = vmatprep.subr.bf16.mxu0 0
      %4387 = vmatpush1.bf16.msra.mxu0 0
      %4388 = vmatprep.subr.bf16.mxu0 0
      %4389 = vmatpush1.bf16.msra.mxu0 0
      %4390 = vmatprep.subr.bf16.mxu0 0
      %4391 = vmatpush1.bf16.msra.mxu0 0
      %4392 = vmatprep.subr.bf16.mxu0 0
      %4393 = vmatpush1.bf16.msra.mxu0 0
      %4394 = vmatprep.subr.bf16.mxu0 0
      %4395 = vmatpush1.bf16.msra.mxu0 0
      %4396 = vmatprep.mubr.bf16.mxu0 0
      %4397 = vmatmul.mubr.bf16.gmra.mrb[0].mxu0 %v4341
      %v4398 = vpop.f32.mrb[0].mxu0
      %v4399 = vadd.f32 %v4313, %v4398
      %v4400 = vpop.f32.mrb[0].mxu0
      %v4401 = vpop.f32.mrb[0].mxu0
      %v4402 = vadd.f32 %v4313, %v4401
      %v4403 = vpop.f32.mrb[0].mxu0
      %4404 = vmatprep.mubr.bf16.mxu0 0
      %4405 = vmatmul.mubr.bf16.gmra.mrb[0].mxu0 %v4344
      %v4406 = vpop.f32.mrb[0].mxu0
      %v4407 = vadd.f32 %v4313, %v4406
      %v4408 = vpop.f32.mrb[0].mxu0
      %v4409 = vpop.f32.mrb[0].mxu0
      %v4410 = vadd.f32 %v4313, %v4409
      %v4411 = vpop.f32.mrb[0].mxu0
      %4412 = vmatprep.mubr.bf16.mxu0 0
      %4413 = vmatmul.mubr.bf16.gmra.mrb[0].mxu0 %v4347
      %v4414 = vpop.f32.mrb[0].mxu0
      %v4415 = vadd.f32 %v4313, %v4414
      %v4416 = vpop.f32.mrb[0].mxu0
      %v4417 = vpop.f32.mrb[0].mxu0
      %v4418 = vadd.f32 %v4313, %v4417
      %v4419 = vpop.f32.mrb[0].mxu0
      %4420 = vmatprep.mubr.bf16.mxu0 0
      %4421 = vmatmul.mubr.bf16.gmra.mrb[0].mxu0 %v4350
      %v4422 = vpop.f32.mrb[0].mxu0
      %v4423 = vadd.f32 %v4313, %v4422
      %v4424 = vpop.f32.mrb[0].mxu0
      %v4425 = vpop.f32.mrb[0].mxu0
      %v4426 = vadd.f32 %v4313, %v4425
      %v4427 = vpop.f32.mrb[0].mxu0
      %4428 = vmatprep.mubr.bf16.mxu0 0
      %4429 = vmatmul.mubr.bf16.gmra.mrb[0].mxu0 %v4353
      %v4430 = vpop.f32.mrb[0].mxu0
      %v4431 = vadd.f32 %v4313, %v4430
      %v4432 = vpop.f32.mrb[0].mxu0
      %v4433 = vpop.f32.mrb[0].mxu0
      %v4434 = vadd.f32 %v4313, %v4433
      %v4435 = vpop.f32.mrb[0].mxu0
      %4436 = vmatprep.mubr.bf16.mxu0 0
      %4437 = vmatmul.mubr.bf16.gmra.mrb[0].mxu0 %v4356
      %v4438 = vpop.f32.mrb[0].mxu0
      %v4439 = vadd.f32 %v4313, %v4438
      %v4440 = vpop.f32.mrb[0].mxu0
      %v4441 = vpop.f32.mrb[0].mxu0
      %v4442 = vadd.f32 %v4313, %v4441
      %v4443 = vpop.f32.mrb[0].mxu0
      %4444 = vmatprep.mubr.bf16.mxu0 0
      %4445 = vmatmul.mubr.bf16.gmra.mrb[0].mxu0 %v4359
      %v4446 = vpop.f32.mrb[0].mxu0
      %v4447 = vadd.f32 %v4313, %v4446
      %v4448 = vpop.f32.mrb[0].mxu0
      %v4449 = vpop.f32.mrb[0].mxu0
      %v4450 = vadd.f32 %v4313, %v4449
      %v4451 = vpop.f32.mrb[0].mxu0
      %4452 = vmatprep.mubr.bf16.mxu0 0
      %4453 = vmatmul.mubr.bf16.gmra.mrb[0].mxu0 %v4362
      %v4454 = vpop.f32.mrb[0].mxu0
      %v4455 = vadd.f32 %v4313, %v4454
      %v4456 = vpop.f32.mrb[0].mxu0
      %v4457 = vpop.f32.mrb[0].mxu0
      %v4458 = vadd.f32 %v4313, %v4457
      %v4459 = vpop.f32.mrb[0].mxu0
      %4460 = vdwg.mxu0
      %v4461 = vadd.f32 %v3726, %v4399
      %v4462 = vadd.f32 %v3727, %v4402
      %v4463 = vadd.f32 %v3728, %v4407
      %v4464 = vadd.f32 %v3729, %v4410
      %v4465 = vadd.f32 %v3730, %v4415
      %v4466 = vadd.f32 %v3731, %v4418
      %v4467 = vadd.f32 %v3732, %v4423
      %v4468 = vadd.f32 %v3733, %v4426
      %v4469 = vadd.f32 %v3734, %v4431
      %v4470 = vadd.f32 %v3735, %v4434
      %v4471 = vadd.f32 %v3736, %v4439
      %v4472 = vadd.f32 %v3737, %v4442
      %v4473 = vadd.f32 %v3738, %v4447
      %v4474 = vadd.f32 %v3739, %v4450
      %v4475 = vadd.f32 %v3740, %v4455
      %v4476 = vadd.f32 %v3741, %v4458
      %4477 = vst.msk [vmem:[%s685] sm:$0xff] %vm755, %v4461
      %4478 = vst.msk [vmem:[%s685 + $0x8] sm:$0xff] %vm755, %v4462
      %4479 = vst.msk [vmem:[%s685 + $0x10] sm:$0xff] %vm755, %v4463
      %4480 = vst.msk [vmem:[%s685 + $0x18] sm:$0xff] %vm755, %v4464
      %4481 = vst.msk [vmem:[%s685 + $0x20] sm:$0xff] %vm755, %v4465
      %4482 = vst.msk [vmem:[%s685 + $0x28] sm:$0xff] %vm755, %v4466
      %4483 = vst.msk [vmem:[%s685 + $0x30] sm:$0xff] %vm755, %v4467
      %4484 = vst.msk [vmem:[%s685 + $0x38] sm:$0xff] %vm755, %v4468
      %4485 = vst.msk [vmem:[%s685 + $0x40] sm:$0xff] %vm755, %v4469
      %4486 = vst.msk [vmem:[%s685 + $0x48] sm:$0xff] %vm755, %v4470
      %4487 = vst.msk [vmem:[%s685 + $0x50] sm:$0xff] %vm755, %v4471
      %4488 = vst.msk [vmem:[%s685 + $0x58] sm:$0xff] %vm755, %v4472
      %4489 = vst.msk [vmem:[%s685 + $0x60] sm:$0xff] %vm755, %v4473
      %4490 = vst.msk [vmem:[%s685 + $0x68] sm:$0xff] %vm755, %v4474
      %4491 = vst.msk [vmem:[%s685 + $0x70] sm:$0xff] %vm755, %v4475
      %4492 = vst.msk [vmem:[%s685 + $0x78] sm:$0xff] %vm755, %v4476
      %p4493 = scmp.lt.s32.totalorder %s30, 1
      %s4494 = scalar_select %p4493, %s30, 1
      %s4495 = smul.addr %s4494, 16
      %s4496 = smul.addr %s4495, 8
      %s4497 = scalar_lea.vmem %s13, %s4496
      %p4498 = scmp.lt.s32.totalorder %s31, 1
      %s4499 = scalar_select %p4498, %s31, 1
      %p4500 = scmp.lt.s32.totalorder %s30, 1
      %s4501 = scalar_select %p4500, %s30, 1
      %s4502 = smul.addr %s4501, 16
      %s4503 = smul.addr %s4499, 32
      %s4504 = sadd.s32 %s4502, %s4503
      %s4505 = smul.addr %s4504, 4
      %s4506 = scalar_lea.vmem %s14, %s4505
      // Predicated region
      $region77: #{vit_rollout_forward.4} parent=71 // pred_check
        %p4507 = pneg %p394
      $region78: #{vit_rollout_forward.4} parent=71 // pred_check_branch
        %4509 = sbr.rel (%p4507) target = $region80
      $region79: #{vit_rollout_forward.4} parent=71 // pred_region
        _
      $region80: #{vit_rollout_forward.4} parent=71 // pred_fallthru
        _
      // Predicated region
      $region81: #{vit_rollout_forward.4} parent=71 // pred_check
        %p4510 = pneg %p422
      $region82: #{vit_rollout_forward.4} parent=71 // pred_check_branch
        %4512 = sbr.rel (%p4510) target = $region84
      $region83: #{vit_rollout_forward.4} parent=71 // pred_region
        _
      $region84: #{vit_rollout_forward.4} parent=71 // pred_fallthru
        _
    $region72: #{vit_rollout_forward.4} parent=5 // pred_fallthru
      _
    %p4513 = scmp.le.s32.totalorder 2, %s21
    // Predicated region
    $region85: #{vit_rollout_forward.4} parent=5 // pred_check
      %p4514 = pneg %p4513
    $region86: #{vit_rollout_forward.4} parent=5 // pred_check_branch
      %4516 = sbr.rel (%p4514) target = $region88
    $region87: #{vit_rollout_forward.4} parent=5 // pred_region
      %s4517 = ssub.s32 %s21, 2
      // Predicated region
      $region89: #{vit_rollout_forward.4} parent=87 // pred_check
        %p4518 = pneg %p400
      $region90: #{vit_rollout_forward.4} parent=87 // pred_check_branch
        %4520 = sbr.rel (%p4518) target = $region92
      $region91: #{vit_rollout_forward.4} parent=87 // pred_region
        %p4521 = scmp.lt.s32.totalorder %s32, 1
        %s4522 = scalar_select %p4521, %s32, 1
        %s4523 = smul.addr %s4522, 16
        %s4524 = smul.addr %s4523, 8
        %s4525 = scalar_lea.vmem %s13, %s4524
      $region92: #{vit_rollout_forward.4} parent=87 // pred_fallthru
        _
      // Predicated region
      $region93: #{vit_rollout_forward.4} parent=87 // pred_check
        %p4526 = pneg %p428
      $region94: #{vit_rollout_forward.4} parent=87 // pred_check_branch
        %4528 = sbr.rel (%p4526) target = $region96
      $region95: #{vit_rollout_forward.4} parent=87 // pred_region
        %p4529 = scmp.lt.s32.totalorder %s33, 1
        %s4530 = scalar_select %p4529, %s33, 1
        %p4531 = scmp.lt.s32.totalorder %s32, 1
        %s4532 = scalar_select %p4531, %s32, 1
        %s4533 = smul.addr %s4532, 16
        %s4534 = smul.addr %s4530, 32
        %s4535 = sadd.s32 %s4533, %s4534
        %s4536 = smul.addr %s4535, 4
        %s4537 = scalar_lea.vmem %s14, %s4536
      $region96: #{vit_rollout_forward.4} parent=87 // pred_fallthru
        _
    $region88: #{vit_rollout_forward.4} parent=5 // pred_fallthru
      _
  $region6: #{vit_rollout_forward.4} parent=0 // loop_footer
    %s25 = sadd.s32 1, %s21
  $region7: #{vit_rollout_forward.4} parent=0 // loop_footer_branch
    %20 = sbr.rel target = $region3
  $region8: #{vit_rollout_forward.4} parent=0 // loop_exit
    _

</llo_original>
